<compile_context>
chip_gen: v6e
topology: v6e:2x2x1
jax: 0.10.0
libtpu: 0.0.40
codegen_flags: <defaults>
</compile_context>

<pallas_src>
import jax
import jax.numpy as jnp
from jax.experimental import pallas as pl
from jax.experimental.pallas import tpu as pltpu

EPS = 1e-5


# ---------------------------------------------------------------------------
# Small static helpers (tile-size selection, compiler params, BN folding)
# ---------------------------------------------------------------------------
def _cparams(n_grid_dims):
    return pltpu.CompilerParams(
        dimension_semantics=("parallel",) * n_grid_dims,
        vmem_limit_bytes=48 * 1024 * 1024,   # v7x-safe (64 MiB physical per TC)
    )


def _block_rows(n, target=1024):
    """Largest row-block <= target that divides n (multiple of 8 when < n)."""
    if n <= target:
        return n
    br = (target // 8) * 8
    while br >= 8:
        if n % br == 0:
            return br
        br -= 8
    return n


def _pick_h_tile(hs, target=32):
    """Row-tile height for the 3x3 conv (divisor of hs)."""
    if hs <= target:
        return hs
    for t in range(target, 0, -1):
        if hs % t == 0:
            return t
    return hs


def _fold_bn(bn):
    scale = bn["gamma"] / jnp.sqrt(bn["var"] + EPS)
    shift = bn["beta"] - bn["mean"] * scale
    return scale, shift


# ---------------------------------------------------------------------------
# Kernel 1: BN -> ReLU -> Conv1x1 (used for the skip path, 232->256 padded ->128)
# ---------------------------------------------------------------------------
def _bn_relu_conv1x1_kernel(x_ref, scale_ref, shift_ref, w_ref, o_ref):
    a = jnp.maximum(x_ref[...] * scale_ref[...] + shift_ref[...], 0.0)
    o_ref[...] = jnp.dot(a.astype(jnp.bfloat16), w_ref[...],
                         preferred_element_type=jnp.float32)


def bn_relu_conv1x1(x2d, scale, shift, w_bf16):
    n, cin = x2d.shape
    cout = w_bf16.shape[1]
    br = _block_rows(n)
    row = lambda i: (i, 0)
    full = lambda i: (0, 0)
    return pl.pallas_call(
        _bn_relu_conv1x1_kernel,
        out_shape=jax.ShapeDtypeStruct((n, cout), jnp.float32),
        grid=(n // br,),
        in_specs=[pl.BlockSpec((br, cin), row),
                  pl.BlockSpec((1, cin), full),
                  pl.BlockSpec((1, cin), full),
                  pl.BlockSpec((cin, cout), full)],
        out_specs=pl.BlockSpec((br, cout), row),
        compiler_params=_cparams(1),
    )(x2d, scale.reshape(1, cin), shift.reshape(1, cin), w_bf16)


# ---------------------------------------------------------------------------
# Kernel 2: separable bilinear upsample (align_corners=False)
# ---------------------------------------------------------------------------
def _bilinear_matrix(in_size, out_size):
    # PyTorch F.interpolate(mode='bilinear', align_corners=False) source coords.
    scale = in_size / out_size
    i = jnp.arange(out_size, dtype=jnp.float32)
    src = jnp.maximum((i + 0.5) * scale - 0.5, 0.0)
    i0 = jnp.minimum(jnp.floor(src).astype(jnp.int32), in_size - 1)
    i1 = jnp.minimum(i0 + 1, in_size - 1)
    w1 = src - i0.astype(jnp.float32)
    w0 = 1.0 - w1
    rows = jnp.arange(out_size)
    m = jnp.zeros((out_size, in_size), jnp.float32)
    m = m.at[rows, i0].add(w0)
    m = m.at[rows, i1].add(w1)
    return m


def bilinear_upsample_nhwc(x, out_hw):
    b, h, w, c = x.shape
    h2, w2 = out_hw
    mh = _bilinear_matrix(h, h2)   # (h2, h)
    mw = _bilinear_matrix(w, w2)   # (w2, w)

    def kernel(mh_ref, mw_ref, x_ref, o_ref):
        xi = x_ref[0]                                              # (h, w, c)
        # H stage: (h2, h) @ (h, w*c) -> (h2, w, c)
        xh = jnp.dot(mh_ref[...], xi.reshape(h, w * c),
                     preferred_element_type=jnp.float32).reshape(h2, w, c)
        # W stage: batched over h2, (w2, w) @ (w, c) -> (h2, w2, c)
        mwb = jnp.broadcast_to(mw_ref[...][None], (h2, w2, w))
        o_ref[0] = jax.lax.dot_general(
            mwb, xh, dimension_numbers=(((2,), (1,)), ((0,), (0,))),
            preferred_element_type=jnp.float32)

    return pl.pallas_call(
        kernel,
        out_shape=jax.ShapeDtypeStruct((b, h2, w2, c), jnp.float32),
        grid=(b,),
        in_specs=[pl.BlockSpec((h2, h), lambda i: (0, 0)),
                  pl.BlockSpec((w2, w), lambda i: (0, 0)),
                  pl.BlockSpec((1, h, w, c), lambda i: (i, 0, 0, 0))],
        out_specs=pl.BlockSpec((1, h2, w2, c), lambda i: (i, 0, 0, 0)),
        compiler_params=_cparams(1),
    )(mh, mw, x)


# ---------------------------------------------------------------------------
# Kernel 3: fused SAM conv1x1+BN+ReLU+ChannelPool  AND  bottleneck BN+ReLU+conv1x1.
# Consumes xcat = [x_up, skip128] WITHOUT materializing the concat (split weights).
# ---------------------------------------------------------------------------
def _fused_sam_bottleneck_kernel(u_ref, v_ref, wst_ref, wsb_ref, s1_ref, b1_ref,
                                 sbt_ref, bbt_ref, sbb_ref, bbb_ref,
                                 wbt_ref, wbb_ref, x0_ref, pool_ref):
    u = u_ref[...]
    v = v_ref[...]
    ub = u.astype(jnp.bfloat16)
    vb = v.astype(jnp.bfloat16)
    # SpatialGate.conv1x1: Conv1x1(xcat) -> BN -> ReLU, xcat = [u, v]
    z = (jnp.dot(ub, wst_ref[...], preferred_element_type=jnp.float32)
         + jnp.dot(vb, wsb_ref[...], preferred_element_type=jnp.float32))
    y = jnp.maximum(z * s1_ref[...] + b1_ref[...], 0.0)
    # ChannelPool: [max, mean] along channels (XLU reduce, hidden under the MXU)
    pool_ref[:, 0:1] = jnp.max(y, axis=-1, keepdims=True)
    pool_ref[:, 1:2] = jnp.mean(y, axis=-1, keepdims=True)
    # bottleneck: BN(xcat) -> ReLU -> Conv1x1 (256 -> 128), split over halves
    au = jnp.maximum(u * sbt_ref[...] + bbt_ref[...], 0.0).astype(jnp.bfloat16)
    av = jnp.maximum(v * sbb_ref[...] + bbb_ref[...], 0.0).astype(jnp.bfloat16)
    x0_ref[...] = (jnp.dot(au, wbt_ref[...], preferred_element_type=jnp.float32)
                   + jnp.dot(av, wbb_ref[...], preferred_element_type=jnp.float32))


def fused_sam_bottleneck(u, v, w_sam_bf16, s1, b1, sb, bb, w_bneck_bf16):
    n, c = u.shape                        # c = 128 (each concat half)
    br = _block_rows(n)
    row = lambda i: (i, 0)
    full = lambda i: (0, 0)
    return pl.pallas_call(
        _fused_sam_bottleneck_kernel,
        out_shape=(jax.ShapeDtypeStruct((n, c), jnp.float32),
                   jax.ShapeDtypeStruct((n, 2), jnp.float32)),
        grid=(n // br,),
        in_specs=[pl.BlockSpec((br, c), row),            # u = x_up
                  pl.BlockSpec((br, c), row),            # v = skip128
                  pl.BlockSpec((c, 2 * c), full),        # SAM W (top half)
                  pl.BlockSpec((c, 2 * c), full),        # SAM W (bottom half)
                  pl.BlockSpec((1, 2 * c), full),        # SAM post-conv BN scale
                  pl.BlockSpec((1, 2 * c), full),        # SAM post-conv BN shift
                  pl.BlockSpec((1, c), full),            # bneck BN scale (top)
                  pl.BlockSpec((1, c), full),            # bneck BN shift (top)
                  pl.BlockSpec((1, c), full),            # bneck BN scale (bottom)
                  pl.BlockSpec((1, c), full),            # bneck BN shift (bottom)
                  pl.BlockSpec((c, c), full),            # bneck W (top)
                  pl.BlockSpec((c, c), full)],           # bneck W (bottom)
        out_specs=(pl.BlockSpec((br, c), row),
                   pl.BlockSpec((br, 2), row)),
        compiler_params=_cparams(1),
    )(u, v,
      w_sam_bf16[:c], w_sam_bf16[c:],
      s1.reshape(1, 2 * c), b1.reshape(1, 2 * c),
      sb[:c].reshape(1, c), bb[:c].reshape(1, c),
      sb[c:].reshape(1, c), bb[c:].reshape(1, c),
      w_bneck_bf16[:c], w_bneck_bf16[c:])


# ---------------------------------------------------------------------------
# Kernel 4: SpatialGate 5x5 conv (2->1) + sigmoid, lane-dense (B*H, W) output.
# ---------------------------------------------------------------------------
def _gate5x5_kernel(p_ref, w_ref, o_ref):
    o_ref[...] = jax.nn.sigmoid(
        jnp.sum(p_ref[...] * w_ref[...], axis=-1))


def conv5x5_sigmoid(p5, w_row):
    r, ws, k = p5.shape                   # (B*H, W, 50)
    br = _block_rows(r, target=64)
    return pl.pallas_call(
        _gate5x5_kernel,
        out_shape=jax.ShapeDtypeStruct((r, ws), jnp.float32),
        grid=(r // br,),
        in_specs=[pl.BlockSpec((br, ws, k), lambda i: (i, 0, 0)),
                  pl.BlockSpec((1, 1, k), lambda i: (0, 0, 0))],
        out_specs=pl.BlockSpec((br, ws), lambda i: (i, 0)),
        compiler_params=_cparams(1),
    )(p5, w_row)


# ---------------------------------------------------------------------------
# Kernel 5: fused residual gate x0*(1+scal) + blend BN + ReLU + 3x3 conv (pad=1)
# on 1-row-halo H tiles (no 9x im2col expansion in HBM).
# ---------------------------------------------------------------------------
def blend_conv3x3(x0_img, scal_img, bn_scale, bn_shift, w9_bf16):
    b, hs, ws, c = x0_img.shape
    th = _pick_h_tile(hs)
    nt = hs // th
    x0p = jnp.pad(x0_img, ((0, 0), (1, 1), (1, 1), (0, 0)))
    sp = jnp.pad(scal_img, ((0, 0), (1, 1), (1, 1), (0, 0)))
    # Overlapping H tiles with a 1-row halo: ~(th+2)/th duplication only.
    x0t = jnp.stack([x0p[:, i * th:i * th + th + 2] for i in range(nt)], axis=1)
    st = jnp.stack([sp[:, i * th:i * th + th + 2] for i in range(nt)], axis=1)
    x0t = x0t.reshape(b * nt, th + 2, ws + 2, c)
    st = st.reshape(b * nt, th + 2, ws + 2, 1)

    def kernel(xt_ref, sg_ref, sc_ref, sh_ref, w_ref, o_ref):
        ti = pl.program_id(0) % nt
        xt = xt_ref[0]                                        # (th+2, ws+2, c)
        sg = sg_ref[0]                                        # (th+2, ws+2, 1)
        # Zero-pad positions of the conv input must stay exactly 0 after BN/ReLU.
        pr = ti * th + jax.lax.broadcasted_iota(jnp.int32, (th + 2, ws + 2), 0)
        pc = jax.lax.broadcasted_iota(jnp.int32, (th + 2, ws + 2), 1)
        valid = ((pr >= 1) & (pr <= hs) & (pc >= 1) & (pc <= ws)).astype(jnp.float32)
        a = xt * (1.0 + sg)                                   # x0 + scal*x0
        a = jnp.maximum(a * sc_ref[...] + sh_ref[...], 0.0) * valid[..., None]
        a = a.astype(jnp.bfloat16)
        acc = jnp.zeros((th * ws, c), jnp.float32)
        for dh in range(3):
            for dw in range(3):
                patch = a[dh:dh + th, dw:dw + ws, :].reshape(th * ws, c)
                acc = acc + jnp.dot(patch, w_ref[dh * 3 + dw],
                                    preferred_element_type=jnp.float32)
        o_ref[0] = acc.reshape(th, ws, c)

    out = pl.pallas_call(
        kernel,
        out_shape=jax.ShapeDtypeStruct((b * nt, th, ws, c), jnp.float32),
        grid=(b * nt,),
        in_specs=[pl.BlockSpec((1, th + 2, ws + 2, c), lambda i: (i, 0, 0, 0)),
                  pl.BlockSpec((1, th + 2, ws + 2, 1), lambda i: (i, 0, 0, 0)),
                  pl.BlockSpec((1, c), lambda i: (0, 0)),
                  pl.BlockSpec((1, c), lambda i: (0, 0)),
                  pl.BlockSpec((9, c, c), lambda i: (0, 0, 0))],
        out_specs=pl.BlockSpec((1, th, ws, c), lambda i: (i, 0, 0, 0)),
        compiler_params=_cparams(1),
    )(x0t, st, bn_scale.reshape(1, c), bn_shift.reshape(1, c), w9_bf16)
    return out.reshape(b, hs, ws, c)


# ---------------------------------------------------------------------------
# Parameters (deterministic synthetic init) and forward glue
# ---------------------------------------------------------------------------
def init_params(key):
    ks = jax.random.split(key, 9)

    def bn(k, c):
        k1, k2, k3, k4 = jax.random.split(k, 4)
        return dict(
            gamma=1.0 + 0.1 * jax.random.normal(k1, (c,), jnp.float32),
            beta=0.1 * jax.random.normal(k2, (c,), jnp.float32),
            mean=0.1 * jax.random.normal(k3, (c,), jnp.float32),
            var=1.0 + 0.1 * jnp.abs(jax.random.normal(k4, (c,), jnp.float32)),
        )

    def conv(k, shape, fan_in):
        return jax.random.normal(k, shape, jnp.float32) / jnp.sqrt(fan_in)

    return dict(
        conv_bn=bn(ks[0], 232),                              # self.conv BN(232)
        conv_w=conv(ks[1], (232, 128), 232.0),               # 1x1 conv, (Cin,Cout)
        bneck_bn=bn(ks[2], 256),                             # bottleneck BN(256)
        bneck_w=conv(ks[3], (256, 128), 256.0),
        blend_bn=bn(ks[4], 128),                             # blend_conv BN(128)
        blend_w=conv(ks[5], (3, 3, 128, 128), 9 * 128.0),    # 3x3 conv, HWIO
        sam_bn=bn(ks[6], 256),                               # sam.conv1x1 BN(256)
        sam_w1=conv(ks[7], (256, 256), 256.0),
        sam_w2=conv(ks[8], (5, 5, 2), 50.0),                 # sam.spatial 5x5, 2->1
    )


def upsample16_forward(params, x_nchw, skip_nchw):
    # NCHW -> NHWC (glue)
    x = jnp.transpose(x_nchw, (0, 2, 3, 1)).astype(jnp.float32)
    skip = jnp.transpose(skip_nchw, (0, 2, 3, 1)).astype(jnp.float32)
    b, hs, ws, cs = skip.shape
    n = b * hs * ws

    # skip = self.conv(skip): BN(232) -> ReLU -> Conv1x1 -> 128 (channels padded to 256)
    sc, sh = _fold_bn(params["conv_bn"])
    cpad = 256 - cs
    skip_p = jnp.pad(skip.reshape(n, cs), ((0, 0), (0, cpad)))
    sc_p = jnp.pad(sc, (0, cpad), constant_values=1.0)
    sh_p = jnp.pad(sh, (0, cpad))
    wc_p = jnp.pad(params["conv_w"], ((0, cpad), (0, 0))).astype(jnp.bfloat16)
    skip128 = bn_relu_conv1x1(skip_p, sc_p, sh_p, wc_p)              # (n, 128)

    # x = upsample(x, skip_size): separable bilinear, align_corners=False
    x_up = bilinear_upsample_nhwc(x, (hs, ws)).reshape(n, 128)

    # scal-precursor (SAM conv1x1 + pool) and bottleneck, fused over [x_up, skip128]
    s1, b1 = _fold_bn(params["sam_bn"])
    sb, bb = _fold_bn(params["bneck_bn"])
    x0, pool = fused_sam_bottleneck(
        x_up, skip128,
        params["sam_w1"].astype(jnp.bfloat16), s1, b1,
        sb, bb, params["bneck_w"].astype(jnp.bfloat16))

    # scal = sigmoid(conv5x5([max, mean])) — tiny im2col built with XLA glue
    xc = pool.reshape(b, hs, ws, 2)
    xp = jnp.pad(xc, ((0, 0), (2, 2), (2, 2), (0, 0)))
    p5 = jnp.stack([xp[:, kh:kh + hs, kw:kw + ws, :]
                    for kh in range(5) for kw in range(5)], axis=3)  # (b,hs,ws,25,2)
    p5 = p5.reshape(b * hs, ws, 50)
    scal = conv5x5_sigmoid(p5, params["sam_w2"].reshape(1, 1, 50))   # (b*hs, ws)

    # x = x0 + scal*x0, blend_conv: BN(128) -> ReLU -> Conv3x3(pad=1), fused
    sbl, bbl = _fold_bn(params["blend_bn"])
    out = blend_conv3x3(
        x0.reshape(b, hs, ws, 128),
        scal.reshape(b, hs, ws, 1),
        sbl, bbl,
        params["blend_w"].reshape(9, 128, 128).astype(jnp.bfloat16))
    return jnp.transpose(out, (0, 3, 1, 2))                          # back to NCHW


if __name__ == "__main__":
    key = jax.random.PRNGKey(0)
    kp, kx, ks = jax.random.split(key, 3)
    params = init_params(kp)
    # x: decoder feature (128 ch, low res); skip: encoder skip (232 ch, 2x res)
    x = jax.random.normal(kx, (2, 128, 4, 4), jnp.float32)
    skip = jax.random.normal(ks, (2, 232, 8, 8), jnp.float32)
    out = jax.jit(upsample16_forward)(params, x, skip)
    jax.block_until_ready(out)
    assert out.shape == (2, 128, 8, 8), out.shape
    assert bool(jnp.all(jnp.isfinite(out)))
    print("KERNEL_OK")
</pallas_src>

<mosaic_0001>
module attributes {stable_mosaic.version = 11 : i64} {
  func.func private @main(%arg0: i32) attributes {dimension_semantics = [#tpu.dimension_semantics<core_parallel>], iteration_bounds = array<i64: 2>, tpu.core_type = #tpu.core_type<sc_scalar_subcore>, window_params = []} {
    return
  }
}

module attributes {stable_mosaic.version = 11 : i64} {
  func.func private @main(%arg0: i32) attributes {dimension_semantics = [#tpu.dimension_semantics<core_parallel>], iteration_bounds = array<i64: 2>, tpu.core_type = #tpu.core_type<sc_scalar_subcore>, window_params = []} {
    return
  }
}

module attributes {stable_mosaic.version = 11 : i64} {
  func.func @_bn_relu_conv1x1_kernel(%arg0: i32, %arg1: memref<128x256xf32, #tpu.memory_space<vmem>>, %arg2: memref<1x256xf32, #tpu.memory_space<vmem>>, %arg3: memref<1x256xf32, #tpu.memory_space<vmem>>, %arg4: memref<256x128xbf16, #tpu.memory_space<vmem>>, %arg5: memref<128x128xf32, #tpu.memory_space<vmem>>) attributes {dimension_semantics = [#tpu.dimension_semantics<parallel>], iteration_bounds = array<i64: 1>, scalar_prefetch = 0 : i64, scratch_operands = 0 : i64, tpu.core_type = #tpu.core_type<tc>, window_params = [{transform_indices = @transform_0, window_bounds = array<i64: 128, 256>}, {pipeline_mode = #tpu.pipeline_mode<synchronous>, transform_indices = @transform_1, window_bounds = array<i64: 1, 256>}, {pipeline_mode = #tpu.pipeline_mode<synchronous>, transform_indices = @transform_2, window_bounds = array<i64: 1, 256>}, {pipeline_mode = #tpu.pipeline_mode<synchronous>, transform_indices = @transform_3, window_bounds = array<i64: 256, 128>}, {transform_indices = @transform_4, window_bounds = array<i64: 128, 128>}]} {
    %c0 = arith.constant 0 : index
    %c0_0 = arith.constant 0 : index
    %0 = vector.load %arg1[%c0, %c0_0] : memref<128x256xf32, #tpu.memory_space<vmem>>, vector<128x256xf32>
    %c0_1 = arith.constant 0 : index
    %c0_2 = arith.constant 0 : index
    %1 = vector.load %arg2[%c0_1, %c0_2] : memref<1x256xf32, #tpu.memory_space<vmem>>, vector<1x256xf32>
    %2 = vector.broadcast %1 : vector<1x256xf32> to vector<128x256xf32>
    %3 = arith.mulf %0, %2 : vector<128x256xf32>
    %c0_3 = arith.constant 0 : index
    %c0_4 = arith.constant 0 : index
    %4 = vector.load %arg3[%c0_3, %c0_4] : memref<1x256xf32, #tpu.memory_space<vmem>>, vector<1x256xf32>
    %5 = vector.broadcast %4 : vector<1x256xf32> to vector<128x256xf32>
    %6 = arith.addf %3, %5 : vector<128x256xf32>
    %cst = arith.constant 0.000000e+00 : f32
    %7 = vector.broadcast %cst : f32 to vector<128x256xf32>
    %8 = arith.maximumf %6, %7 : vector<128x256xf32>
    %9 = arith.truncf %8 : vector<128x256xf32> to vector<128x256xbf16>
    %c0_5 = arith.constant 0 : index
    %c0_6 = arith.constant 0 : index
    %10 = vector.load %arg4[%c0_5, %c0_6] : memref<256x128xbf16, #tpu.memory_space<vmem>>, vector<256x128xbf16>
    %cst_7 = arith.constant dense<0.000000e+00> : vector<128x128xf32>
    %11 = tpu.matmul %9, %10, %cst_7 {dimension_numbers = #tpu.dot_dimension_numbers<[1], [0], [0], [1], [0, 0, 1, 1], [], []>} : vector<128x256xbf16>, vector<256x128xbf16>, vector<128x128xf32> -> vector<128x128xf32>
    %c0_8 = arith.constant 0 : index
    %c0_9 = arith.constant 0 : index
    %12 = vector.load %arg5[%c0_8, %c0_9] : memref<128x128xf32, #tpu.memory_space<vmem>>, vector<128x128xf32>
    tpu.vector_store %arg5[%c0_8, %c0_9], %11 {strides = array<i32>} : memref<128x128xf32, #tpu.memory_space<vmem>>, vector<128x128xf32>,
    return
  }
  func.func @transform_0(%arg0: i32) -> (i32, i32) {
    %c0_i32 = arith.constant 0 : i32
    %c0_i32_0 = arith.constant 0 : i32
    return %arg0, %c0_i32 : i32, i32
  }
  func.func @transform_1(%arg0: i32) -> (i32, i32) {
    %c0_i32 = arith.constant 0 : i32
    %c0_i32_0 = arith.constant 0 : i32
    %c0_i32_1 = arith.constant 0 : i32
    return %c0_i32, %c0_i32_0 : i32, i32
  }
  func.func @transform_2(%arg0: i32) -> (i32, i32) {
    %c0_i32 = arith.constant 0 : i32
    %c0_i32_0 = arith.constant 0 : i32
    %c0_i32_1 = arith.constant 0 : i32
    return %c0_i32, %c0_i32_0 : i32, i32
  }
  func.func @transform_3(%arg0: i32) -> (i32, i32) {
    %c0_i32 = arith.constant 0 : i32
    %c0_i32_0 = arith.constant 0 : i32
    %c0_i32_1 = arith.constant 0 : i32
    return %c0_i32, %c0_i32_0 : i32, i32
  }
  func.func @transform_4(%arg0: i32) -> (i32, i32) {
    %c0_i32 = arith.constant 0 : i32
    %c0_i32_0 = arith.constant 0 : i32
    return %arg0, %c0_i32 : i32, i32
  }
}

module attributes {stable_mosaic.version = 11 : i64} {
  func.func @kernel(%arg0: i32, %arg1: memref<8x4xf32, #tpu.memory_space<vmem>>, %arg2: memref<8x4xf32, #tpu.memory_space<vmem>>, %arg3: memref<1x4x4x128xf32, #tpu.memory_space<vmem>>, %arg4: memref<1x8x8x128xf32, #tpu.memory_space<vmem>>) attributes {dimension_semantics = [#tpu.dimension_semantics<parallel>], iteration_bounds = array<i64: 2>, scalar_prefetch = 0 : i64, scratch_operands = 0 : i64, tpu.core_type = #tpu.core_type<tc>, window_params = [{pipeline_mode = #tpu.pipeline_mode<synchronous>, transform_indices = @transform_0, window_bounds = array<i64: 8, 4>}, {pipeline_mode = #tpu.pipeline_mode<synchronous>, transform_indices = @transform_1, window_bounds = array<i64: 8, 4>}, {transform_indices = @transform_2, window_bounds = array<i64: 1, 4, 4, 128>}, {transform_indices = @transform_3, window_bounds = array<i64: 1, 8, 8, 128>}]} {
    %c0 = arith.constant 0 : index
    %c0_0 = arith.constant 0 : index
    %c0_1 = arith.constant 0 : index
    %c0_2 = arith.constant 0 : index
    %0 = vector.load %arg3[%c0, %c0_0, %c0_1, %c0_2] : memref<1x4x4x128xf32, #tpu.memory_space<vmem>>, vector<1x4x4x128xf32>
    %1 = vector.shape_cast %0 : vector<1x4x4x128xf32> to vector<4x4x128xf32>
    %c0_3 = arith.constant 0 : index
    %c0_4 = arith.constant 0 : index
    %2 = vector.load %arg1[%c0_3, %c0_4] : memref<8x4xf32, #tpu.memory_space<vmem>>, vector<8x4xf32>
    %3 = vector.shape_cast %1 : vector<4x4x128xf32> to vector<4x512xf32>
    %cst = arith.constant dense<0.000000e+00> : vector<8x512xf32>
    %4 = tpu.matmul %2, %3, %cst {dimension_numbers = #tpu.dot_dimension_numbers<[1], [0], [0], [1], [0, 0, 1, 1], [], []>} : vector<8x4xf32>, vector<4x512xf32>, vector<8x512xf32> -> vector<8x512xf32>
    %5 = vector.shape_cast %4 : vector<8x512xf32> to vector<8x4x128xf32>
    %c0_5 = arith.constant 0 : index
    %c0_6 = arith.constant 0 : index
    %6 = vector.load %arg2[%c0_5, %c0_6] : memref<8x4xf32, #tpu.memory_space<vmem>>, vector<8x4xf32>
    %7 = vector.shape_cast %6 : vector<8x4xf32> to vector<1x8x4xf32>
    %8 = vector.shape_cast %7 : vector<1x8x4xf32> to vector<1x8x4xf32>
    %9 = vector.broadcast %8 : vector<1x8x4xf32> to vector<8x8x4xf32>
    %cst_7 = arith.constant dense<0.000000e+00> : vector<8x8x128xf32>
    %10 = tpu.matmul %9, %5, %cst_7 {dimension_numbers = #tpu.dot_dimension_numbers<[2], [1], [1], [2], [0, 0, 0, 1, 1, 2], [0], [0]>} : vector<8x8x4xf32>, vector<8x4x128xf32>, vector<8x8x128xf32> -> vector<8x8x128xf32>
    %c0_8 = arith.constant 0 : index
    %c0_9 = arith.constant 0 : index
    %c0_10 = arith.constant 0 : index
    %c0_11 = arith.constant 0 : index
    %11 = vector.load %arg4[%c0_8, %c0_9, %c0_10, %c0_11] : memref<1x8x8x128xf32, #tpu.memory_space<vmem>>, vector<1x8x8x128xf32>
    %12 = vector.shape_cast %11 : vector<1x8x8x128xf32> to vector<8x8x128xf32>
    %13 = vector.shape_cast %10 : vector<8x8x128xf32> to vector<1x8x8x128xf32>
    tpu.vector_store %arg4[%c0_8, %c0_9, %c0_10, %c0_11], %13 {strides = array<i32>} : memref<1x8x8x128xf32, #tpu.memory_space<vmem>>, vector<1x8x8x128xf32>,
    return
  }
  func.func @transform_0(%arg0: i32) -> (i32, i32) {
    %c0_i32 = arith.constant 0 : i32
    %c0_i32_0 = arith.constant 0 : i32
    %c0_i32_1 = arith.constant 0 : i32
    return %c0_i32, %c0_i32_0 : i32, i32
  }
  func.func @transform_1(%arg0: i32) -> (i32, i32) {
    %c0_i32 = arith.constant 0 : i32
    %c0_i32_0 = arith.constant 0 : i32
    %c0_i32_1 = arith.constant 0 : i32
    return %c0_i32, %c0_i32_0 : i32, i32
  }
  func.func @transform_2(%arg0: i32) -> (i32, i32, i32, i32) {
    %c0_i32 = arith.constant 0 : i32
    %c0_i32_0 = arith.constant 0 : i32
    %c0_i32_1 = arith.constant 0 : i32
    %c0_i32_2 = arith.constant 0 : i32
    return %arg0, %c0_i32, %c0_i32_0, %c0_i32_1 : i32, i32, i32, i32
  }
  func.func @transform_3(%arg0: i32) -> (i32, i32, i32, i32) {
    %c0_i32 = arith.constant 0 : i32
    %c0_i32_0 = arith.constant 0 : i32
    %c0_i32_1 = arith.constant 0 : i32
    %c0_i32_2 = arith.constant 0 : i32
    return %arg0, %c0_i32, %c0_i32_0, %c0_i32_1 : i32, i32, i32, i32
  }
}

module attributes {stable_mosaic.version = 11 : i64} {
  func.func @_fused_sam_bottleneck_kernel(%arg0: i32, %arg1: memref<128x128xf32, #tpu.memory_space<vmem>>, %arg2: memref<128x128xf32, #tpu.memory_space<vmem>>, %arg3: memref<128x256xbf16, #tpu.memory_space<vmem>>, %arg4: memref<128x256xbf16, #tpu.memory_space<vmem>>, %arg5: memref<1x256xf32, #tpu.memory_space<vmem>>, %arg6: memref<1x256xf32, #tpu.memory_space<vmem>>, %arg7: memref<1x128xf32, #tpu.memory_space<vmem>>, %arg8: memref<1x128xf32, #tpu.memory_space<vmem>>, %arg9: memref<1x128xf32, #tpu.memory_space<vmem>>, %arg10: memref<1x128xf32, #tpu.memory_space<vmem>>, %arg11: memref<128x128xbf16, #tpu.memory_space<vmem>>, %arg12: memref<128x128xbf16, #tpu.memory_space<vmem>>, %arg13: memref<128x128xf32, #tpu.memory_space<vmem>>, %arg14: memref<128x2xf32, #tpu.memory_space<vmem>>) attributes {dimension_semantics = [#tpu.dimension_semantics<parallel>], iteration_bounds = array<i64: 1>, scalar_prefetch = 0 : i64, scratch_operands = 0 : i64, tpu.core_type = #tpu.core_type<tc>, window_params = [{transform_indices = @transform_0, window_bounds = array<i64: 128, 128>}, {transform_indices = @transform_1, window_bounds = array<i64: 128, 128>}, {pipeline_mode = #tpu.pipeline_mode<synchronous>, transform_indices = @transform_2, window_bounds = array<i64: 128, 256>}, {pipeline_mode = #tpu.pipeline_mode<synchronous>, transform_indices = @transform_3, window_bounds = array<i64: 128, 256>}, {pipeline_mode = #tpu.pipeline_mode<synchronous>, transform_indices = @transform_4, window_bounds = array<i64: 1, 256>}, {pipeline_mode = #tpu.pipeline_mode<synchronous>, transform_indices = @transform_5, window_bounds = array<i64: 1, 256>}, {pipeline_mode = #tpu.pipeline_mode<synchronous>, transform_indices = @transform_6, window_bounds = array<i64: 1, 128>}, {pipeline_mode = #tpu.pipeline_mode<synchronous>, transform_indices = @transform_7, window_bounds = array<i64: 1, 128>}, {pipeline_mode = #tpu.pipeline_mode<synchronous>, transform_indices = @transform_8, window_bounds = array<i64: 1, 128>}, {pipeline_mode = #tpu.pipeline_mode<synchronous>, transform_indices = @transform_9, window_bounds = array<i64: 1, 128>}, {pipeline_mode = #tpu.pipeline_mode<synchronous>, transform_indices = @transform_10, window_bounds = array<i64: 128, 128>}, {pipeline_mode = #tpu.pipeline_mode<synchronous>, transform_indices = @transform_11, window_bounds = array<i64: 128, 128>}, {transform_indices = @transform_12, window_bounds = array<i64: 128, 128>}, {transform_indices = @transform_13, window_bounds = array<i64: 128, 2>}]} {
    %c0 = arith.constant 0 : index
    %c0_0 = arith.constant 0 : index
    %0 = vector.load %arg1[%c0, %c0_0] : memref<128x128xf32, #tpu.memory_space<vmem>>, vector<128x128xf32>
    %c0_1 = arith.constant 0 : index
    %c0_2 = arith.constant 0 : index
    %1 = vector.load %arg2[%c0_1, %c0_2] : memref<128x128xf32, #tpu.memory_space<vmem>>, vector<128x128xf32>
    %2 = arith.truncf %0 : vector<128x128xf32> to vector<128x128xbf16>
    %3 = arith.truncf %1 : vector<128x128xf32> to vector<128x128xbf16>
    %c0_3 = arith.constant 0 : index
    %c0_4 = arith.constant 0 : index
    %4 = vector.load %arg3[%c0_3, %c0_4] : memref<128x256xbf16, #tpu.memory_space<vmem>>, vector<128x256xbf16>
    %cst = arith.constant dense<0.000000e+00> : vector<128x256xf32>
    %5 = tpu.matmul %2, %4, %cst {dimension_numbers = #tpu.dot_dimension_numbers<[1], [0], [0], [1], [0, 0, 1, 1], [], []>} : vector<128x128xbf16>, vector<128x256xbf16>, vector<128x256xf32> -> vector<128x256xf32>
    %c0_5 = arith.constant 0 : index
    %c0_6 = arith.constant 0 : index
    %6 = vector.load %arg4[%c0_5, %c0_6] : memref<128x256xbf16, #tpu.memory_space<vmem>>, vector<128x256xbf16>
    %cst_7 = arith.constant dense<0.000000e+00> : vector<128x256xf32>
    %7 = tpu.matmul %3, %6, %cst_7 {dimension_numbers = #tpu.dot_dimension_numbers<[1], [0], [0], [1], [0, 0, 1, 1], [], []>} : vector<128x128xbf16>, vector<128x256xbf16>, vector<128x256xf32> -> vector<128x256xf32>
    %8 = arith.addf %5, %7 : vector<128x256xf32>
    %c0_8 = arith.constant 0 : index
    %c0_9 = arith.constant 0 : index
    %9 = vector.load %arg5[%c0_8, %c0_9] : memref<1x256xf32, #tpu.memory_space<vmem>>, vector<1x256xf32>
    %10 = vector.broadcast %9 : vector<1x256xf32> to vector<128x256xf32>
    %11 = arith.mulf %8, %10 : vector<128x256xf32>
    %c0_10 = arith.constant 0 : index
    %c0_11 = arith.constant 0 : index
    %12 = vector.load %arg6[%c0_10, %c0_11] : memref<1x256xf32, #tpu.memory_space<vmem>>, vector<1x256xf32>
    %13 = vector.broadcast %12 : vector<1x256xf32> to vector<128x256xf32>
    %14 = arith.addf %11, %13 : vector<128x256xf32>
    %cst_12 = arith.constant 0.000000e+00 : f32
    %15 = vector.broadcast %cst_12 : f32 to vector<128x256xf32>
    %16 = arith.maximumf %14, %15 : vector<128x256xf32>
    %cst_13 = arith.constant dense<0xFF800000> : vector<128xf32>
    %17 = vector.multi_reduction <maximumf>, %16, %cst_13 [1] : vector<128x256xf32> to vector<128xf32>
    %18 = vector.shape_cast %17 : vector<128xf32> to vector<128x1xf32>
    %c0_14 = arith.constant 0 : index
    %c0_15 = arith.constant 0 : index
    %19 = vector.load %arg14[%c0_14, %c0_15] : memref<128x2xf32, #tpu.memory_space<vmem>>, vector<128x1xf32>
    tpu.vector_store %arg14[%c0_14, %c0_15], %18 {strides = array<i32>} : memref<128x2xf32, #tpu.memory_space<vmem>>, vector<128x1xf32>,
    %cst_16 = arith.constant dense<0.000000e+00> : vector<128xf32>
    %20 = vector.multi_reduction <add>, %16, %cst_16 [1] : vector<128x256xf32> to vector<128xf32>
    %21 = vector.shape_cast %20 : vector<128xf32> to vector<128x1xf32>
    %cst_17 = arith.constant 2.560000e+02 : f32
    %22 = vector.broadcast %cst_17 : f32 to vector<128x1xf32>
    %23 = arith.divf %21, %22 : vector<128x1xf32>
    %c0_18 = arith.constant 0 : index
    %c1 = arith.constant 1 : index
    %24 = vector.load %arg14[%c0_18, %c1] : memref<128x2xf32, #tpu.memory_space<vmem>>, vector<128x1xf32>
    tpu.vector_store %arg14[%c0_18, %c1], %23 {strides = array<i32>} : memref<128x2xf32, #tpu.memory_space<vmem>>, vector<128x1xf32>,
    %c0_19 = arith.constant 0 : index
    %c0_20 = arith.constant 0 : index
    %25 = vector.load %arg7[%c0_19, %c0_20] : memref<1x128xf32, #tpu.memory_space<vmem>>, vector<1x128xf32>
    %26 = vector.broadcast %25 : vector<1x128xf32> to vector<128x128xf32>
    %27 = arith.mulf %0, %26 : vector<128x128xf32>
    %c0_21 = arith.constant 0 : index
    %c0_22 = arith.constant 0 : index
    %28 = vector.load %arg8[%c0_21, %c0_22] : memref<1x128xf32, #tpu.memory_space<vmem>>, vector<1x128xf32>
    %29 = vector.broadcast %28 : vector<1x128xf32> to vector<128x128xf32>
    %30 = arith.addf %27, %29 : vector<128x128xf32>
    %cst_23 = arith.constant 0.000000e+00 : f32
    %31 = vector.broadcast %cst_23 : f32 to vector<128x128xf32>
    %32 = arith.maximumf %30, %31 : vector<128x128xf32>
    %33 = arith.truncf %32 : vector<128x128xf32> to vector<128x128xbf16>
    %c0_24 = arith.constant 0 : index
    %c0_25 = arith.constant 0 : index
    %34 = vector.load %arg9[%c0_24, %c0_25] : memref<1x128xf32, #tpu.memory_space<vmem>>, vector<1x128xf32>
    %35 = vector.broadcast %34 : vector<1x128xf32> to vector<128x128xf32>
    %36 = arith.mulf %1, %35 : vector<128x128xf32>
    %c0_26 = arith.constant 0 : index
    %c0_27 = arith.constant 0 : index
    %37 = vector.load %arg10[%c0_26, %c0_27] : memref<1x128xf32, #tpu.memory_space<vmem>>, vector<1x128xf32>
    %38 = vector.broadcast %37 : vector<1x128xf32> to vector<128x128xf32>
    %39 = arith.addf %36, %38 : vector<128x128xf32>
    %cst_28 = arith.constant 0.000000e+00 : f32
    %40 = vector.broadcast %cst_28 : f32 to vector<128x128xf32>
    %41 = arith.maximumf %39, %40 : vector<128x128xf32>
    %42 = arith.truncf %41 : vector<128x128xf32> to vector<128x128xbf16>
    %c0_29 = arith.constant 0 : index
    %c0_30 = arith.constant 0 : index
    %43 = vector.load %arg11[%c0_29, %c0_30] : memref<128x128xbf16, #tpu.memory_space<vmem>>, vector<128x128xbf16>
    %cst_31 = arith.constant dense<0.000000e+00> : vector<128x128xf32>
    %44 = tpu.matmul %33, %43, %cst_31 {dimension_numbers = #tpu.dot_dimension_numbers<[1], [0], [0], [1], [0, 0, 1, 1], [], []>} : vector<128x128xbf16>, vector<128x128xbf16>, vector<128x128xf32> -> vector<128x128xf32>
    %c0_32 = arith.constant 0 : index
    %c0_33 = arith.constant 0 : index
    %45 = vector.load %arg12[%c0_32, %c0_33] : memref<128x128xbf16, #tpu.memory_space<vmem>>, vector<128x128xbf16>
    %cst_34 = arith.constant dense<0.000000e+00> : vector<128x128xf32>
    %46 = tpu.matmul %42, %45, %cst_34 {dimension_numbers = #tpu.dot_dimension_numbers<[1], [0], [0], [1], [0, 0, 1, 1], [], []>} : vector<128x128xbf16>, vector<128x128xbf16>, vector<128x128xf32> -> vector<128x128xf32>
    %47 = arith.addf %44, %46 : vector<128x128xf32>
    %c0_35 = arith.constant 0 : index
    %c0_36 = arith.constant 0 : index
    %48 = vector.load %arg13[%c0_35, %c0_36] : memref<128x128xf32, #tpu.memory_space<vmem>>, vector<128x128xf32>
    tpu.vector_store %arg13[%c0_35, %c0_36], %47 {strides = array<i32>} : memref<128x128xf32, #tpu.memory_space<vmem>>, vector<128x128xf32>,
    return
  }
  func.func @transform_0(%arg0: i32) -> (i32, i32) {
    %c0_i32 = arith.constant 0 : i32
    %c0_i32_0 = arith.constant 0 : i32
    return %arg0, %c0_i32 : i32, i32
  }
  func.func @transform_1(%arg0: i32) -> (i32, i32) {
    %c0_i32 = arith.constant 0 : i32
    %c0_i32_0 = arith.constant 0 : i32
    return %arg0, %c0_i32 : i32, i32
  }
  func.func @transform_2(%arg0: i32) -> (i32, i32) {
    %c0_i32 = arith.constant 0 : i32
    %c0_i32_0 = arith.constant 0 : i32
    %c0_i32_1 = arith.constant 0 : i32
    return %c0_i32, %c0_i32_0 : i32, i32
  }
  func.func @transform_3(%arg0: i32) -> (i32, i32) {
    %c0_i32 = arith.constant 0 : i32
    %c0_i32_0 = arith.constant 0 : i32
    %c0_i32_1 = arith.constant 0 : i32
    return %c0_i32, %c0_i32_0 : i32, i32
  }
  func.func @transform_4(%arg0: i32) -> (i32, i32) {
    %c0_i32 = arith.constant 0 : i32
    %c0_i32_0 = arith.constant 0 : i32
    %c0_i32_1 = arith.constant 0 : i32
    return %c0_i32, %c0_i32_0 : i32, i32
  }
  func.func @transform_5(%arg0: i32) -> (i32, i32) {
    %c0_i32 = arith.constant 0 : i32
    %c0_i32_0 = arith.constant 0 : i32
    %c0_i32_1 = arith.constant 0 : i32
    return %c0_i32, %c0_i32_0 : i32, i32
  }
  func.func @transform_6(%arg0: i32) -> (i32, i32) {
    %c0_i32 = arith.constant 0 : i32
    %c0_i32_0 = arith.constant 0 : i32
    %c0_i32_1 = arith.constant 0 : i32
    return %c0_i32, %c0_i32_0 : i32, i32
  }
  func.func @transform_7(%arg0: i32) -> (i32, i32) {
    %c0_i32 = arith.constant 0 : i32
    %c0_i32_0 = arith.constant 0 : i32
    %c0_i32_1 = arith.constant 0 : i32
    return %c0_i32, %c0_i32_0 : i32, i32
  }
  func.func @transform_8(%arg0: i32) -> (i32, i32) {
    %c0_i32 = arith.constant 0 : i32
    %c0_i32_0 = arith.constant 0 : i32
    %c0_i32_1 = arith.constant 0 : i32
    return %c0_i32, %c0_i32_0 : i32, i32
  }
  func.func @transform_9(%arg0: i32) -> (i32, i32) {
    %c0_i32 = arith.constant 0 : i32
    %c0_i32_0 = arith.constant 0 : i32
    %c0_i32_1 = arith.constant 0 : i32
    return %c0_i32, %c0_i32_0 : i32, i32
  }
  func.func @transform_10(%arg0: i32) -> (i32, i32) {
    %c0_i32 = arith.constant 0 : i32
    %c0_i32_0 = arith.constant 0 : i32
    %c0_i32_1 = arith.constant 0 : i32
    return %c0_i32, %c0_i32_0 : i32, i32
  }
  func.func @transform_11(%arg0: i32) -> (i32, i32) {
    %c0_i32 = arith.constant 0 : i32
    %c0_i32_0 = arith.constant 0 : i32
    %c0_i32_1 = arith.constant 0 : i32
    return %c0_i32, %c0_i32_0 : i32, i32
  }
  func.func @transform_12(%arg0: i32) -> (i32, i32) {
    %c0_i32 = arith.constant 0 : i32
    %c0_i32_0 = arith.constant 0 : i32
    return %arg0, %c0_i32 : i32, i32
  }
  func.func @transform_13(%arg0: i32) -> (i32, i32) {
    %c0_i32 = arith.constant 0 : i32
    %c0_i32_0 = arith.constant 0 : i32
    return %arg0, %c0_i32 : i32, i32
  }
}

module attributes {stable_mosaic.version = 11 : i64} {
  func.func @_gate5x5_kernel(%arg0: i32, %arg1: memref<16x8x50xf32, #tpu.memory_space<vmem>>, %arg2: memref<1x1x50xf32, #tpu.memory_space<vmem>>, %arg3: memref<16x8xf32, #tpu.memory_space<vmem>>) attributes {dimension_semantics = [#tpu.dimension_semantics<parallel>], iteration_bounds = array<i64: 1>, scalar_prefetch = 0 : i64, scratch_operands = 0 : i64, tpu.core_type = #tpu.core_type<tc>, window_params = [{transform_indices = @transform_0, window_bounds = array<i64: 16, 8, 50>}, {pipeline_mode = #tpu.pipeline_mode<synchronous>, transform_indices = @transform_1, window_bounds = array<i64: 1, 1, 50>}, {transform_indices = @transform_2, window_bounds = array<i64: 16, 8>}]} {
    %c0 = arith.constant 0 : index
    %c0_0 = arith.constant 0 : index
    %c0_1 = arith.constant 0 : index
    %0 = vector.load %arg1[%c0, %c0_0, %c0_1] : memref<16x8x50xf32, #tpu.memory_space<vmem>>, vector<16x8x50xf32>
    %c0_2 = arith.constant 0 : index
    %c0_3 = arith.constant 0 : index
    %c0_4 = arith.constant 0 : index
    %1 = vector.load %arg2[%c0_2, %c0_3, %c0_4] : memref<1x1x50xf32, #tpu.memory_space<vmem>>, vector<1x1x50xf32>
    %2 = vector.broadcast %1 : vector<1x1x50xf32> to vector<16x8x50xf32>
    %3 = arith.mulf %0, %2 : vector<16x8x50xf32>
    %cst = arith.constant dense<0.000000e+00> : vector<16x8xf32>
    %4 = vector.multi_reduction <add>, %3, %cst [2] : vector<16x8x50xf32> to vector<16x8xf32>
    %5 = arith.negf %4 : vector<16x8xf32>
    %6 = math.exp %5 : vector<16x8xf32>
    %cst_5 = arith.constant 1.000000e+00 : f32
    %7 = vector.broadcast %cst_5 : f32 to vector<16x8xf32>
    %8 = arith.addf %7, %6 : vector<16x8xf32>
    %9 = arith.divf %7, %8 : vector<16x8xf32>
    %c0_6 = arith.constant 0 : index
    %c0_7 = arith.constant 0 : index
    %10 = vector.load %arg3[%c0_6, %c0_7] : memref<16x8xf32, #tpu.memory_space<vmem>>, vector<16x8xf32>
    tpu.vector_store %arg3[%c0_6, %c0_7], %9 {strides = array<i32>} : memref<16x8xf32, #tpu.memory_space<vmem>>, vector<16x8xf32>,
    return
  }
  func.func @transform_0(%arg0: i32) -> (i32, i32, i32) {
    %c0_i32 = arith.constant 0 : i32
    %c0_i32_0 = arith.constant 0 : i32
    %c0_i32_1 = arith.constant 0 : i32
    return %arg0, %c0_i32, %c0_i32_0 : i32, i32, i32
  }
  func.func @transform_1(%arg0: i32) -> (i32, i32, i32) {
    %c0_i32 = arith.constant 0 : i32
    %c0_i32_0 = arith.constant 0 : i32
    %c0_i32_1 = arith.constant 0 : i32
    %c0_i32_2 = arith.constant 0 : i32
    return %c0_i32, %c0_i32_0, %c0_i32_1 : i32, i32, i32
  }
  func.func @transform_2(%arg0: i32) -> (i32, i32) {
    %c0_i32 = arith.constant 0 : i32
    %c0_i32_0 = arith.constant 0 : i32
    return %arg0, %c0_i32 : i32, i32
  }
}

module attributes {stable_mosaic.version = 11 : i64} {
  func.func @kernel(%arg0: i32, %arg1: memref<1x10x10x128xf32, #tpu.memory_space<vmem>>, %arg2: memref<1x10x10x1xf32, #tpu.memory_space<vmem>>, %arg3: memref<1x128xf32, #tpu.memory_space<vmem>>, %arg4: memref<1x128xf32, #tpu.memory_space<vmem>>, %arg5: memref<9x128x128xbf16, #tpu.memory_space<vmem>>, %arg6: memref<1x8x8x128xf32, #tpu.memory_space<vmem>>) attributes {dimension_semantics = [#tpu.dimension_semantics<parallel>], iteration_bounds = array<i64: 2>, scalar_prefetch = 0 : i64, scratch_operands = 0 : i64, tpu.core_type = #tpu.core_type<tc>, window_params = [{transform_indices = @transform_0, window_bounds = array<i64: 1, 10, 10, 128>}, {transform_indices = @transform_1, window_bounds = array<i64: 1, 10, 10, 1>}, {pipeline_mode = #tpu.pipeline_mode<synchronous>, transform_indices = @transform_2, window_bounds = array<i64: 1, 128>}, {pipeline_mode = #tpu.pipeline_mode<synchronous>, transform_indices = @transform_3, window_bounds = array<i64: 1, 128>}, {pipeline_mode = #tpu.pipeline_mode<synchronous>, transform_indices = @transform_4, window_bounds = array<i64: 9, 128, 128>}, {transform_indices = @transform_5, window_bounds = array<i64: 1, 8, 8, 128>}]} {
    %c1_i32 = arith.constant 1 : i32
    %c0_i32 = arith.constant 0 : i32
    %0 = arith.cmpi eq, %c1_i32, %c0_i32 : i32
    %c1_i32_0 = arith.constant 1 : i32
    %1 = arith.select %0, %c1_i32_0, %c1_i32 : i32
    %2 = arith.remsi %arg0, %1 : i32
    %c0_i32_1 = arith.constant 0 : i32
    %3 = arith.cmpi ne, %2, %c0_i32_1 : i32
    %c0_i32_2 = arith.constant 0 : i32
    %4 = arith.cmpi slt, %2, %c0_i32_2 : i32
    %c0_i32_3 = arith.constant 0 : i32
    %5 = arith.cmpi slt, %1, %c0_i32_3 : i32
    %6 = arith.xori %4, %5 : i1
    %7 = arith.andi %6, %3 : i1
    %8 = arith.addi %2, %1 : i32
    %9 = arith.select %7, %8, %2 : i32
    %c0 = arith.constant 0 : index
    %c0_4 = arith.constant 0 : index
    %c0_5 = arith.constant 0 : index
    %c0_6 = arith.constant 0 : index
    %10 = vector.load %arg1[%c0, %c0_4, %c0_5, %c0_6] : memref<1x10x10x128xf32, #tpu.memory_space<vmem>>, vector<1x10x10x128xf32>
    %11 = vector.shape_cast %10 : vector<1x10x10x128xf32> to vector<10x10x128xf32>
    %c0_7 = arith.constant 0 : index
    %c0_8 = arith.constant 0 : index
    %c0_9 = arith.constant 0 : index
    %c0_10 = arith.constant 0 : index
    %12 = vector.load %arg2[%c0_7, %c0_8, %c0_9, %c0_10] : memref<1x10x10x1xf32, #tpu.memory_space<vmem>>, vector<1x10x10x1xf32>
    %13 = vector.shape_cast %12 : vector<1x10x10x1xf32> to vector<10x10x1xf32>
    %c8_i32 = arith.constant 8 : i32
    %14 = arith.muli %9, %c8_i32 : i32
    %15 = tpu.iota {dimensions = array<i32: 0>} : vector<10x10xi32>
    %16 = vector.broadcast %14 : i32 to vector<10x10xi32>
    %17 = arith.addi %16, %15 : vector<10x10xi32>
    %18 = tpu.iota {dimensions = array<i32: 1>} : vector<10x10xi32>
    %c1_i32_11 = arith.constant 1 : i32
    %19 = vector.broadcast %c1_i32_11 : i32 to vector<10x10xi32>
    %20 = arith.cmpi sge, %17, %19 : vector<10x10xi32>
    %c8_i32_12 = arith.constant 8 : i32
    %21 = vector.broadcast %c8_i32_12 : i32 to vector<10x10xi32>
    %22 = arith.cmpi sle, %17, %21 : vector<10x10xi32>
    %23 = arith.andi %20, %22 : vector<10x10xi1>
    %c1_i32_13 = arith.constant 1 : i32
    %24 = vector.broadcast %c1_i32_13 : i32 to vector<10x10xi32>
    %25 = arith.cmpi sge, %18, %24 : vector<10x10xi32>
    %26 = arith.andi %23, %25 : vector<10x10xi1>
    %c8_i32_14 = arith.constant 8 : i32
    %27 = vector.broadcast %c8_i32_14 : i32 to vector<10x10xi32>
    %28 = arith.cmpi sle, %18, %27 : vector<10x10xi32>
    %29 = arith.andi %26, %28 : vector<10x10xi1>
    %30 = arith.extui %29 : vector<10x10xi1> to vector<10x10xi32>
    %31 = arith.sitofp %30 : vector<10x10xi32> to vector<10x10xf32>
    %cst = arith.constant 1.000000e+00 : f32
    %32 = vector.broadcast %cst : f32 to vector<10x10x1xf32>
    %33 = arith.addf %32, %13 : vector<10x10x1xf32>
    %34 = vector.broadcast %33 : vector<10x10x1xf32> to vector<10x10x128xf32>
    %35 = arith.mulf %11, %34 : vector<10x10x128xf32>
    %c0_15 = arith.constant 0 : index
    %c0_16 = arith.constant 0 : index
    %36 = vector.load %arg3[%c0_15, %c0_16] : memref<1x128xf32, #tpu.memory_space<vmem>>, vector<1x128xf32>
    %37 = vector.shape_cast %36 : vector<1x128xf32> to vector<1x1x128xf32>
    %38 = vector.broadcast %37 : vector<1x1x128xf32> to vector<10x10x128xf32>
    %39 = arith.mulf %35, %38 : vector<10x10x128xf32>
    %c0_17 = arith.constant 0 : index
    %c0_18 = arith.constant 0 : index
    %40 = vector.load %arg4[%c0_17, %c0_18] : memref<1x128xf32, #tpu.memory_space<vmem>>, vector<1x128xf32>
    %41 = vector.shape_cast %40 : vector<1x128xf32> to vector<1x1x128xf32>
    %42 = vector.broadcast %41 : vector<1x1x128xf32> to vector<10x10x128xf32>
    %43 = arith.addf %39, %42 : vector<10x10x128xf32>
    %cst_19 = arith.constant 0.000000e+00 : f32
    %44 = vector.broadcast %cst_19 : f32 to vector<10x10x128xf32>
    %45 = arith.maximumf %43, %44 : vector<10x10x128xf32>
    %46 = vector.shape_cast %31 : vector<10x10xf32> to vector<10x10x1xf32>
    %47 = vector.broadcast %46 : vector<10x10x1xf32> to vector<10x10x128xf32>
    %48 = arith.mulf %45, %47 : vector<10x10x128xf32>
    %49 = arith.truncf %48 : vector<10x10x128xf32> to vector<10x10x128xbf16>
    %cst_20 = arith.constant 0.000000e+00 : f32
    %50 = vector.broadcast %cst_20 : f32 to vector<64x128xf32>
    %51 = vector.extract_strided_slice %49 {offsets = [0, 0, 0], sizes = [8, 8, 128], strides = [1, 1, 1]} : vector<10x10x128xbf16> to vector<8x8x128xbf16>
    %52 = vector.shape_cast %51 : vector<8x8x128xbf16> to vector<64x128xbf16>
    %c0_21 = arith.constant 0 : index
    %c0_22 = arith.constant 0 : index
    %c0_23 = arith.constant 0 : index
    %53 = vector.load %arg5[%c0_21, %c0_22, %c0_23] : memref<9x128x128xbf16, #tpu.memory_space<vmem>>, vector<1x128x128xbf16>
    %54 = vector.shape_cast %53 : vector<1x128x128xbf16> to vector<128x128xbf16>
    %cst_24 = arith.constant dense<0.000000e+00> : vector<64x128xf32>
    %55 = tpu.matmul %52, %54, %cst_24 {dimension_numbers = #tpu.dot_dimension_numbers<[1], [0], [0], [1], [0, 0, 1, 1], [], []>} : vector<64x128xbf16>, vector<128x128xbf16>, vector<64x128xf32> -> vector<64x128xf32>
    %56 = arith.addf %50, %55 : vector<64x128xf32>
    %57 = vector.extract_strided_slice %49 {offsets = [0, 1, 0], sizes = [8, 8, 128], strides = [1, 1, 1]} : vector<10x10x128xbf16> to vector<8x8x128xbf16>
    %58 = vector.shape_cast %57 : vector<8x8x128xbf16> to vector<64x128xbf16>
    %c1 = arith.constant 1 : index
    %c0_25 = arith.constant 0 : index
    %c0_26 = arith.constant 0 : index
    %59 = vector.load %arg5[%c1, %c0_25, %c0_26] : memref<9x128x128xbf16, #tpu.memory_space<vmem>>, vector<1x128x128xbf16>
    %60 = vector.shape_cast %59 : vector<1x128x128xbf16> to vector<128x128xbf16>
    %cst_27 = arith.constant dense<0.000000e+00> : vector<64x128xf32>
    %61 = tpu.matmul %58, %60, %cst_27 {dimension_numbers = #tpu.dot_dimension_numbers<[1], [0], [0], [1], [0, 0, 1, 1], [], []>} : vector<64x128xbf16>, vector<128x128xbf16>, vector<64x128xf32> -> vector<64x128xf32>
    %62 = arith.addf %56, %61 : vector<64x128xf32>
    %63 = vector.extract_strided_slice %49 {offsets = [0, 2, 0], sizes = [8, 8, 128], strides = [1, 1, 1]} : vector<10x10x128xbf16> to vector<8x8x128xbf16>
    %64 = vector.shape_cast %63 : vector<8x8x128xbf16> to vector<64x128xbf16>
    %c2 = arith.constant 2 : index
    %c0_28 = arith.constant 0 : index
    %c0_29 = arith.constant 0 : index
    %65 = vector.load %arg5[%c2, %c0_28, %c0_29] : memref<9x128x128xbf16, #tpu.memory_space<vmem>>, vector<1x128x128xbf16>
    %66 = vector.shape_cast %65 : vector<1x128x128xbf16> to vector<128x128xbf16>
    %cst_30 = arith.constant dense<0.000000e+00> : vector<64x128xf32>
    %67 = tpu.matmul %64, %66, %cst_30 {dimension_numbers = #tpu.dot_dimension_numbers<[1], [0], [0], [1], [0, 0, 1, 1], [], []>} : vector<64x128xbf16>, vector<128x128xbf16>, vector<64x128xf32> -> vector<64x128xf32>
    %68 = arith.addf %62, %67 : vector<64x128xf32>
    %69 = vector.extract_strided_slice %49 {offsets = [1, 0, 0], sizes = [8, 8, 128], strides = [1, 1, 1]} : vector<10x10x128xbf16> to vector<8x8x128xbf16>
    %70 = vector.shape_cast %69 : vector<8x8x128xbf16> to vector<64x128xbf16>
    %c3 = arith.constant 3 : index
    %c0_31 = arith.constant 0 : index
    %c0_32 = arith.constant 0 : index
    %71 = vector.load %arg5[%c3, %c0_31, %c0_32] : memref<9x128x128xbf16, #tpu.memory_space<vmem>>, vector<1x128x128xbf16>
    %72 = vector.shape_cast %71 : vector<1x128x128xbf16> to vector<128x128xbf16>
    %cst_33 = arith.constant dense<0.000000e+00> : vector<64x128xf32>
    %73 = tpu.matmul %70, %72, %cst_33 {dimension_numbers = #tpu.dot_dimension_numbers<[1], [0], [0], [1], [0, 0, 1, 1], [], []>} : vector<64x128xbf16>, vector<128x128xbf16>, vector<64x128xf32> -> vector<64x128xf32>
    %74 = arith.addf %68, %73 : vector<64x128xf32>
    %75 = vector.extract_strided_slice %49 {offsets = [1, 1, 0], sizes = [8, 8, 128], strides = [1, 1, 1]} : vector<10x10x128xbf16> to vector<8x8x128xbf16>
    %76 = vector.shape_cast %75 : vector<8x8x128xbf16> to vector<64x128xbf16>
    %c4 = arith.constant 4 : index
    %c0_34 = arith.constant 0 : index
    %c0_35 = arith.constant 0 : index
    %77 = vector.load %arg5[%c4, %c0_34, %c0_35] : memref<9x128x128xbf16, #tpu.memory_space<vmem>>, vector<1x128x128xbf16>
    %78 = vector.shape_cast %77 : vector<1x128x128xbf16> to vector<128x128xbf16>
    %cst_36 = arith.constant dense<0.000000e+00> : vector<64x128xf32>
    %79 = tpu.matmul %76, %78, %cst_36 {dimension_numbers = #tpu.dot_dimension_numbers<[1], [0], [0], [1], [0, 0, 1, 1], [], []>} : vector<64x128xbf16>, vector<128x128xbf16>, vector<64x128xf32> -> vector<64x128xf32>
    %80 = arith.addf %74, %79 : vector<64x128xf32>
    %81 = vector.extract_strided_slice %49 {offsets = [1, 2, 0], sizes = [8, 8, 128], strides = [1, 1, 1]} : vector<10x10x128xbf16> to vector<8x8x128xbf16>
    %82 = vector.shape_cast %81 : vector<8x8x128xbf16> to vector<64x128xbf16>
    %c5 = arith.constant 5 : index
    %c0_37 = arith.constant 0 : index
    %c0_38 = arith.constant 0 : index
    %83 = vector.load %arg5[%c5, %c0_37, %c0_38] : memref<9x128x128xbf16, #tpu.memory_space<vmem>>, vector<1x128x128xbf16>
    %84 = vector.shape_cast %83 : vector<1x128x128xbf16> to vector<128x128xbf16>
    %cst_39 = arith.constant dense<0.000000e+00> : vector<64x128xf32>
    %85 = tpu.matmul %82, %84, %cst_39 {dimension_numbers = #tpu.dot_dimension_numbers<[1], [0], [0], [1], [0, 0, 1, 1], [], []>} : vector<64x128xbf16>, vector<128x128xbf16>, vector<64x128xf32> -> vector<64x128xf32>
    %86 = arith.addf %80, %85 : vector<64x128xf32>
    %87 = vector.extract_strided_slice %49 {offsets = [2, 0, 0], sizes = [8, 8, 128], strides = [1, 1, 1]} : vector<10x10x128xbf16> to vector<8x8x128xbf16>
    %88 = vector.shape_cast %87 : vector<8x8x128xbf16> to vector<64x128xbf16>
    %c6 = arith.constant 6 : index
    %c0_40 = arith.constant 0 : index
    %c0_41 = arith.constant 0 : index
    %89 = vector.load %arg5[%c6, %c0_40, %c0_41] : memref<9x128x128xbf16, #tpu.memory_space<vmem>>, vector<1x128x128xbf16>
    %90 = vector.shape_cast %89 : vector<1x128x128xbf16> to vector<128x128xbf16>
    %cst_42 = arith.constant dense<0.000000e+00> : vector<64x128xf32>
    %91 = tpu.matmul %88, %90, %cst_42 {dimension_numbers = #tpu.dot_dimension_numbers<[1], [0], [0], [1], [0, 0, 1, 1], [], []>} : vector<64x128xbf16>, vector<128x128xbf16>, vector<64x128xf32> -> vector<64x128xf32>
    %92 = arith.addf %86, %91 : vector<64x128xf32>
    %93 = vector.extract_strided_slice %49 {offsets = [2, 1, 0], sizes = [8, 8, 128], strides = [1, 1, 1]} : vector<10x10x128xbf16> to vector<8x8x128xbf16>
    %94 = vector.shape_cast %93 : vector<8x8x128xbf16> to vector<64x128xbf16>
    %c7 = arith.constant 7 : index
    %c0_43 = arith.constant 0 : index
    %c0_44 = arith.constant 0 : index
    %95 = vector.load %arg5[%c7, %c0_43, %c0_44] : memref<9x128x128xbf16, #tpu.memory_space<vmem>>, vector<1x128x128xbf16>
    %96 = vector.shape_cast %95 : vector<1x128x128xbf16> to vector<128x128xbf16>
    %cst_45 = arith.constant dense<0.000000e+00> : vector<64x128xf32>
    %97 = tpu.matmul %94, %96, %cst_45 {dimension_numbers = #tpu.dot_dimension_numbers<[1], [0], [0], [1], [0, 0, 1, 1], [], []>} : vector<64x128xbf16>, vector<128x128xbf16>, vector<64x128xf32> -> vector<64x128xf32>
    %98 = arith.addf %92, %97 : vector<64x128xf32>
    %99 = vector.extract_strided_slice %49 {offsets = [2, 2, 0], sizes = [8, 8, 128], strides = [1, 1, 1]} : vector<10x10x128xbf16> to vector<8x8x128xbf16>
    %100 = vector.shape_cast %99 : vector<8x8x128xbf16> to vector<64x128xbf16>
    %c8 = arith.constant 8 : index
    %c0_46 = arith.constant 0 : index
    %c0_47 = arith.constant 0 : index
    %101 = vector.load %arg5[%c8, %c0_46, %c0_47] : memref<9x128x128xbf16, #tpu.memory_space<vmem>>, vector<1x128x128xbf16>
    %102 = vector.shape_cast %101 : vector<1x128x128xbf16> to vector<128x128xbf16>
    %cst_48 = arith.constant dense<0.000000e+00> : vector<64x128xf32>
    %103 = tpu.matmul %100, %102, %cst_48 {dimension_numbers = #tpu.dot_dimension_numbers<[1], [0], [0], [1], [0, 0, 1, 1], [], []>} : vector<64x128xbf16>, vector<128x128xbf16>, vector<64x128xf32> -> vector<64x128xf32>
    %104 = arith.addf %98, %103 : vector<64x128xf32>
    %105 = vector.shape_cast %104 : vector<64x128xf32> to vector<8x8x128xf32>
    %c0_49 = arith.constant 0 : index
    %c0_50 = arith.constant 0 : index
    %c0_51 = arith.constant 0 : index
    %c0_52 = arith.constant 0 : index
    %106 = vector.load %arg6[%c0_49, %c0_50, %c0_51, %c0_52] : memref<1x8x8x128xf32, #tpu.memory_space<vmem>>, vector<1x8x8x128xf32>
    %107 = vector.shape_cast %106 : vector<1x8x8x128xf32> to vector<8x8x128xf32>
    %108 = vector.shape_cast %105 : vector<8x8x128xf32> to vector<1x8x8x128xf32>
    tpu.vector_store %arg6[%c0_49, %c0_50, %c0_51, %c0_52], %108 {strides = array<i32>} : memref<1x8x8x128xf32, #tpu.memory_space<vmem>>, vector<1x8x8x128xf32>,
    return
  }
  func.func @transform_0(%arg0: i32) -> (i32, i32, i32, i32) {
    %c0_i32 = arith.constant 0 : i32
    %c0_i32_0 = arith.constant 0 : i32
    %c0_i32_1 = arith.constant 0 : i32
    %c0_i32_2 = arith.constant 0 : i32
    return %arg0, %c0_i32, %c0_i32_0, %c0_i32_1 : i32, i32, i32, i32
  }
  func.func @transform_1(%arg0: i32) -> (i32, i32, i32, i32) {
    %c0_i32 = arith.constant 0 : i32
    %c0_i32_0 = arith.constant 0 : i32
    %c0_i32_1 = arith.constant 0 : i32
    %c0_i32_2 = arith.constant 0 : i32
    return %arg0, %c0_i32, %c0_i32_0, %c0_i32_1 : i32, i32, i32, i32
  }
  func.func @transform_2(%arg0: i32) -> (i32, i32) {
    %c0_i32 = arith.constant 0 : i32
    %c0_i32_0 = arith.constant 0 : i32
    %c0_i32_1 = arith.constant 0 : i32
    return %c0_i32, %c0_i32_0 : i32, i32
  }
  func.func @transform_3(%arg0: i32) -> (i32, i32) {
    %c0_i32 = arith.constant 0 : i32
    %c0_i32_0 = arith.constant 0 : i32
    %c0_i32_1 = arith.constant 0 : i32
    return %c0_i32, %c0_i32_0 : i32, i32
  }
  func.func @transform_4(%arg0: i32) -> (i32, i32, i32) {
    %c0_i32 = arith.constant 0 : i32
    %c0_i32_0 = arith.constant 0 : i32
    %c0_i32_1 = arith.constant 0 : i32
    %c0_i32_2 = arith.constant 0 : i32
    return %c0_i32, %c0_i32_0, %c0_i32_1 : i32, i32, i32
  }
  func.func @transform_5(%arg0: i32) -> (i32, i32, i32, i32) {
    %c0_i32 = arith.constant 0 : i32
    %c0_i32_0 = arith.constant 0 : i32
    %c0_i32_1 = arith.constant 0 : i32
    %c0_i32_2 = arith.constant 0 : i32
    return %arg0, %c0_i32, %c0_i32_0, %c0_i32_1 : i32, i32, i32, i32
  }
}

</mosaic_0001>

<llo_original>
// kernel: upsample16_forward.5
$region0: #{upsample16_forward.5}
  #allocation0 [shape = 'u32[]', space=smem, size = 0x4, offset = 0x4, fixed_abs, tag = 'smem constant byte address 0x4 - core index']
  #allocation1 [shape = 'u32[144,128]{1,0:T(1,128)}', space=vmem, size = 0x12000, scoped, tag = 'internal scratch']
  %s0 = inlined_call_operand.vmem [shape: f32[128,256], index: 0, kind: input, shape index: {}]
  %s1 = inlined_call_operand.vmem [shape: f32[1,256], index: 1, kind: input, shape index: {}]
  %s2 = inlined_call_operand.vmem [shape: f32[1,256], index: 2, kind: input, shape index: {}]
  %s3 = inlined_call_operand.vmem [shape: bf16[256,128], index: 3, kind: input, shape index: {}]
  %s4 = inlined_call_operand.vmem [shape: f32[128,128], index: 4, kind: output, shape index: {}]
  %s5 = sld [smem:[#allocation0]]
  $region26: #{upsample16_forward.5} parent=0
    _
  %s7 = ssub.s32 1, %s5
  %s8 = scalar_select 0, %s7, %s5
  // Predicated region
  $region2: #{upsample16_forward.5} parent=0 // pred_check
    _
  $region3: #{upsample16_forward.5} parent=0 // pred_check_branch
    %10 = sbr.rel (0) target = $region5
  $region4: #{upsample16_forward.5} parent=0 // pred_region
    _
  $region5: #{upsample16_forward.5} parent=0 // pred_fallthru
    _
  // Predicated region
  $region6: #{upsample16_forward.5} parent=0 // pred_check
    _
  $region7: #{upsample16_forward.5} parent=0 // pred_check_branch
    %12 = sbr.rel (0) target = $region9
  $region8: #{upsample16_forward.5} parent=0 // pred_region
    _
  $region9: #{upsample16_forward.5} parent=0 // pred_fallthru
    _
  // Predicated region
  $region10: #{upsample16_forward.5} parent=0 // pred_check
    _
  $region11: #{upsample16_forward.5} parent=0 // pred_check_branch
    %14 = sbr.rel (0) target = $region13
  $region12: #{upsample16_forward.5} parent=0 // pred_region
    _
  $region13: #{upsample16_forward.5} parent=0 // pred_fallthru
    _
  // Predicated region
  $region14: #{upsample16_forward.5} parent=0 // pred_check
    _
  $region15: #{upsample16_forward.5} parent=0 // pred_check_branch
    %16 = sbr.rel (0) target = $region17
  $region16: #{upsample16_forward.5} parent=0 // pred_region
    _
  $region17: #{upsample16_forward.5} parent=0 // pred_fallthru
    _
  %v18 = vld [vmem:[%s0] sm:$0xff]
  %v19 = vld [vmem:[%s0 + $0x8] sm:$0xff]
  %v20 = vld [vmem:[%s0 + $0x10] sm:$0xff]
  %v21 = vld [vmem:[%s0 + $0x18] sm:$0xff]
  %v22 = vld [vmem:[%s0 + $0x20] sm:$0xff]
  %v23 = vld [vmem:[%s0 + $0x28] sm:$0xff]
  %v24 = vld [vmem:[%s0 + $0x30] sm:$0xff]
  %v25 = vld [vmem:[%s0 + $0x38] sm:$0xff]
  %v26 = vld [vmem:[%s0 + $0x40] sm:$0xff]
  %v27 = vld [vmem:[%s0 + $0x48] sm:$0xff]
  %v28 = vld [vmem:[%s0 + $0x50] sm:$0xff]
  %v29 = vld [vmem:[%s0 + $0x58] sm:$0xff]
  %v30 = vld [vmem:[%s0 + $0x60] sm:$0xff]
  %v31 = vld [vmem:[%s0 + $0x68] sm:$0xff]
  %v32 = vld [vmem:[%s0 + $0x70] sm:$0xff]
  %v33 = vld [vmem:[%s0 + $0x78] sm:$0xff]
  %v34 = vld [vmem:[%s0 + $0x80] sm:$0xff]
  %v35 = vld [vmem:[%s0 + $0x88] sm:$0xff]
  %v36 = vld [vmem:[%s0 + $0x90] sm:$0xff]
  %v37 = vld [vmem:[%s0 + $0x98] sm:$0xff]
  %v38 = vld [vmem:[%s0 + $0xa0] sm:$0xff]
  %v39 = vld [vmem:[%s0 + $0xa8] sm:$0xff]
  %v40 = vld [vmem:[%s0 + $0xb0] sm:$0xff]
  %v41 = vld [vmem:[%s0 + $0xb8] sm:$0xff]
  %v42 = vld [vmem:[%s0 + $0xc0] sm:$0xff]
  %v43 = vld [vmem:[%s0 + $0xc8] sm:$0xff]
  %v44 = vld [vmem:[%s0 + $0xd0] sm:$0xff]
  %v45 = vld [vmem:[%s0 + $0xd8] sm:$0xff]
  %v46 = vld [vmem:[%s0 + $0xe0] sm:$0xff]
  %v47 = vld [vmem:[%s0 + $0xe8] sm:$0xff]
  %v48 = vld [vmem:[%s0 + $0xf0] sm:$0xff]
  %v49 = vld [vmem:[%s0 + $0xf8] sm:$0xff]
  %v50 = vld [vmem:[%s1] sm:$0x3]
  %v52 = vlaneseq
  %v53 = vshrl.u32 %v52, 7
  %v54 = vsub.s32 0, %v53
  %v55 = vrot.slane %v50, %v54
  %v56 = vlaneseq
  %v57 = vshrl.u32 %v56, 7
  %v58 = vsub.s32 1, %v57
  %v59 = vrot.slane %v50, %v58
  %v62 = vmul.f32 %v18, %v55
  %v63 = vmul.f32 %v19, %v59
  %v64 = vmul.f32 %v20, %v55
  %v65 = vmul.f32 %v21, %v59
  %v66 = vmul.f32 %v22, %v55
  %v67 = vmul.f32 %v23, %v59
  %v68 = vmul.f32 %v24, %v55
  %v69 = vmul.f32 %v25, %v59
  %v70 = vmul.f32 %v26, %v55
  %v71 = vmul.f32 %v27, %v59
  %v72 = vmul.f32 %v28, %v55
  %v73 = vmul.f32 %v29, %v59
  %v74 = vmul.f32 %v30, %v55
  %v75 = vmul.f32 %v31, %v59
  %v76 = vmul.f32 %v32, %v55
  %v77 = vmul.f32 %v33, %v59
  %v78 = vmul.f32 %v34, %v55
  %v79 = vmul.f32 %v35, %v59
  %v80 = vmul.f32 %v36, %v55
  %v81 = vmul.f32 %v37, %v59
  %v82 = vmul.f32 %v38, %v55
  %v83 = vmul.f32 %v39, %v59
  %v84 = vmul.f32 %v40, %v55
  %v85 = vmul.f32 %v41, %v59
  %v86 = vmul.f32 %v42, %v55
  %v87 = vmul.f32 %v43, %v59
  %v88 = vmul.f32 %v44, %v55
  %v89 = vmul.f32 %v45, %v59
  %v90 = vmul.f32 %v46, %v55
  %v91 = vmul.f32 %v47, %v59
  %v92 = vmul.f32 %v48, %v55
  %v93 = vmul.f32 %v49, %v59
  %v94 = vld [vmem:[%s2] sm:$0x3]
  %v96 = vlaneseq
  %v97 = vshrl.u32 %v96, 7
  %v98 = vsub.s32 0, %v97
  %v99 = vrot.slane %v94, %v98
  %v100 = vlaneseq
  %v101 = vshrl.u32 %v100, 7
  %v102 = vsub.s32 1, %v101
  %v103 = vrot.slane %v94, %v102
  %v106 = vadd.f32 %v62, %v99
  %v107 = vadd.f32 %v63, %v103
  %v108 = vadd.f32 %v64, %v99
  %v109 = vadd.f32 %v65, %v103
  %v110 = vadd.f32 %v66, %v99
  %v111 = vadd.f32 %v67, %v103
  %v112 = vadd.f32 %v68, %v99
  %v113 = vadd.f32 %v69, %v103
  %v114 = vadd.f32 %v70, %v99
  %v115 = vadd.f32 %v71, %v103
  %v116 = vadd.f32 %v72, %v99
  %v117 = vadd.f32 %v73, %v103
  %v118 = vadd.f32 %v74, %v99
  %v119 = vadd.f32 %v75, %v103
  %v120 = vadd.f32 %v76, %v99
  %v121 = vadd.f32 %v77, %v103
  %v122 = vadd.f32 %v78, %v99
  %v123 = vadd.f32 %v79, %v103
  %v124 = vadd.f32 %v80, %v99
  %v125 = vadd.f32 %v81, %v103
  %v126 = vadd.f32 %v82, %v99
  %v127 = vadd.f32 %v83, %v103
  %v128 = vadd.f32 %v84, %v99
  %v129 = vadd.f32 %v85, %v103
  %v130 = vadd.f32 %v86, %v99
  %v131 = vadd.f32 %v87, %v103
  %v132 = vadd.f32 %v88, %v99
  %v133 = vadd.f32 %v89, %v103
  %v134 = vadd.f32 %v90, %v99
  %v135 = vadd.f32 %v91, %v103
  %v136 = vadd.f32 %v92, %v99
  %v137 = vadd.f32 %v93, %v103
  %v138 = vmax.f32 %v106, 0.0
  %v139 = vmax.f32 %v107, 0.0
  %v140 = vmax.f32 %v108, 0.0
  %v141 = vmax.f32 %v109, 0.0
  %v142 = vmax.f32 %v110, 0.0
  %v143 = vmax.f32 %v111, 0.0
  %v144 = vmax.f32 %v112, 0.0
  %v145 = vmax.f32 %v113, 0.0
  %v146 = vmax.f32 %v114, 0.0
  %v147 = vmax.f32 %v115, 0.0
  %v148 = vmax.f32 %v116, 0.0
  %v149 = vmax.f32 %v117, 0.0
  %v150 = vmax.f32 %v118, 0.0
  %v151 = vmax.f32 %v119, 0.0
  %v152 = vmax.f32 %v120, 0.0
  %v153 = vmax.f32 %v121, 0.0
  %v154 = vmax.f32 %v122, 0.0
  %v155 = vmax.f32 %v123, 0.0
  %v156 = vmax.f32 %v124, 0.0
  %v157 = vmax.f32 %v125, 0.0
  %v158 = vmax.f32 %v126, 0.0
  %v159 = vmax.f32 %v127, 0.0
  %v160 = vmax.f32 %v128, 0.0
  %v161 = vmax.f32 %v129, 0.0
  %v162 = vmax.f32 %v130, 0.0
  %v163 = vmax.f32 %v131, 0.0
  %v164 = vmax.f32 %v132, 0.0
  %v165 = vmax.f32 %v133, 0.0
  %v166 = vmax.f32 %v134, 0.0
  %v167 = vmax.f32 %v135, 0.0
  %v168 = vmax.f32 %v136, 0.0
  %v169 = vmax.f32 %v137, 0.0
  %v170 = vpack.c.bf16 %v140, %v138
  %v171 = vpack.c.bf16 %v141, %v139
  %v172 = vpack.c.bf16 %v144, %v142
  %v173 = vpack.c.bf16 %v145, %v143
  %v174 = vpack.c.bf16 %v148, %v146
  %v175 = vpack.c.bf16 %v149, %v147
  %v176 = vpack.c.bf16 %v152, %v150
  %v177 = vpack.c.bf16 %v153, %v151
  %v178 = vpack.c.bf16 %v156, %v154
  %v179 = vpack.c.bf16 %v157, %v155
  %v180 = vpack.c.bf16 %v160, %v158
  %v181 = vpack.c.bf16 %v161, %v159
  %v182 = vpack.c.bf16 %v164, %v162
  %v183 = vpack.c.bf16 %v165, %v163
  %v184 = vpack.c.bf16 %v168, %v166
  %v185 = vpack.c.bf16 %v169, %v167
  %v186 = vld [vmem:[%s3] sm:$0xf]
  %v187 = vld [vmem:[%s3 + $0x4] sm:$0xf]
  %v188 = vld [vmem:[%s3 + $0x8] sm:$0xf]
  %v189 = vld [vmem:[%s3 + $0xc] sm:$0xf]
  %v190 = vld [vmem:[%s3 + $0x10] sm:$0xf]
  %v191 = vld [vmem:[%s3 + $0x14] sm:$0xf]
  %v192 = vld [vmem:[%s3 + $0x18] sm:$0xf]
  %v193 = vld [vmem:[%s3 + $0x1c] sm:$0xf]
  %v194 = vld [vmem:[%s3 + $0x20] sm:$0xf]
  %v195 = vld [vmem:[%s3 + $0x24] sm:$0xf]
  %v196 = vld [vmem:[%s3 + $0x28] sm:$0xf]
  %v197 = vld [vmem:[%s3 + $0x2c] sm:$0xf]
  %v198 = vld [vmem:[%s3 + $0x30] sm:$0xf]
  %v199 = vld [vmem:[%s3 + $0x34] sm:$0xf]
  %v200 = vld [vmem:[%s3 + $0x38] sm:$0xf]
  %v201 = vld [vmem:[%s3 + $0x3c] sm:$0xf]
  %v202 = vld [vmem:[%s3 + $0x40] sm:$0xf]
  %v203 = vld [vmem:[%s3 + $0x44] sm:$0xf]
  %v204 = vld [vmem:[%s3 + $0x48] sm:$0xf]
  %v205 = vld [vmem:[%s3 + $0x4c] sm:$0xf]
  %v206 = vld [vmem:[%s3 + $0x50] sm:$0xf]
  %v207 = vld [vmem:[%s3 + $0x54] sm:$0xf]
  %v208 = vld [vmem:[%s3 + $0x58] sm:$0xf]
  %v209 = vld [vmem:[%s3 + $0x5c] sm:$0xf]
  %v210 = vld [vmem:[%s3 + $0x60] sm:$0xf]
  %v211 = vld [vmem:[%s3 + $0x64] sm:$0xf]
  %v212 = vld [vmem:[%s3 + $0x68] sm:$0xf]
  %v213 = vld [vmem:[%s3 + $0x6c] sm:$0xf]
  %v214 = vld [vmem:[%s3 + $0x70] sm:$0xf]
  %v215 = vld [vmem:[%s3 + $0x74] sm:$0xf]
  %v216 = vld [vmem:[%s3 + $0x78] sm:$0xf]
  %v217 = vld [vmem:[%s3 + $0x7c] sm:$0xf]
  %v250 = vunpack.c.l.b16 %v186
  %v251 = vunpack.c.l.b16 %v187
  %v252 = vunpack.c.l.b16 %v188
  %v253 = vunpack.c.l.b16 %v189
  %v254 = vunpack.c.l.b16 %v190
  %v255 = vunpack.c.l.b16 %v191
  %v256 = vunpack.c.l.b16 %v192
  %v257 = vunpack.c.l.b16 %v193
  %v258 = vunpack.c.l.b16 %v194
  %v259 = vunpack.c.l.b16 %v195
  %v260 = vunpack.c.l.b16 %v196
  %v261 = vunpack.c.l.b16 %v197
  %v262 = vunpack.c.l.b16 %v198
  %v263 = vunpack.c.l.b16 %v199
  %v264 = vunpack.c.l.b16 %v200
  %v265 = vunpack.c.l.b16 %v201
  %v266 = vunpack.c.l.b16 %v202
  %v267 = vunpack.c.l.b16 %v203
  %v268 = vunpack.c.l.b16 %v204
  %v269 = vunpack.c.l.b16 %v205
  %v270 = vunpack.c.l.b16 %v206
  %v271 = vunpack.c.l.b16 %v207
  %v272 = vunpack.c.l.b16 %v208
  %v273 = vunpack.c.l.b16 %v209
  %v274 = vunpack.c.l.b16 %v210
  %v275 = vunpack.c.l.b16 %v211
  %v276 = vunpack.c.l.b16 %v212
  %v277 = vunpack.c.l.b16 %v213
  %v278 = vunpack.c.l.b16 %v214
  %v279 = vunpack.c.l.b16 %v215
  %v280 = vunpack.c.l.b16 %v216
  %v281 = vunpack.c.l.b16 %v217
  %v282 = vpack.c.b16 %v251, %v250
  %v283 = vpack.c.b16 %v253, %v252
  %v284 = vpack.c.b16 %v255, %v254
  %v285 = vpack.c.b16 %v257, %v256
  %v286 = vpack.c.b16 %v259, %v258
  %v287 = vpack.c.b16 %v261, %v260
  %v288 = vpack.c.b16 %v263, %v262
  %v289 = vpack.c.b16 %v265, %v264
  %v290 = vpack.c.b16 %v267, %v266
  %v291 = vpack.c.b16 %v269, %v268
  %v292 = vpack.c.b16 %v271, %v270
  %v293 = vpack.c.b16 %v273, %v272
  %v294 = vpack.c.b16 %v275, %v274
  %v295 = vpack.c.b16 %v277, %v276
  %v296 = vpack.c.b16 %v279, %v278
  %v297 = vpack.c.b16 %v281, %v280
  %314 = vmatprep.subr.bf16.mxu0 0
  %315 = vmatpush1.bf16.msra.mxu0 %v289
  %316 = vmatprep.subr.bf16.mxu0 0
  %317 = vmatpush1.bf16.msra.mxu0 %v288
  %318 = vmatprep.subr.bf16.mxu0 0
  %319 = vmatpush1.bf16.msra.mxu0 %v287
  %320 = vmatprep.subr.bf16.mxu0 0
  %321 = vmatpush1.bf16.msra.mxu0 %v286
  %322 = vmatprep.subr.bf16.mxu0 0
  %323 = vmatpush1.bf16.msra.mxu0 %v285
  %324 = vmatprep.subr.bf16.mxu0 0
  %325 = vmatpush1.bf16.msra.mxu0 %v284
  %326 = vmatprep.subr.bf16.mxu0 0
  %327 = vmatpush1.bf16.msra.mxu0 %v283
  %328 = vmatprep.subr.bf16.mxu0 0
  %329 = vmatpush1.bf16.msra.mxu0 %v282
  %330 = vmatprep.subr.bf16.mxu0 0
  %331 = vmatpush2.bf16.msra.mxu0 %v297
  %332 = vmatprep.subr.bf16.mxu0 0
  %333 = vmatpush2.bf16.msra.mxu0 %v296
  %334 = vmatprep.subr.bf16.mxu0 0
  %335 = vmatpush2.bf16.msra.mxu0 %v295
  %336 = vmatprep.subr.bf16.mxu0 0
  %337 = vmatpush2.bf16.msra.mxu0 %v294
  %338 = vmatprep.subr.bf16.mxu0 0
  %339 = vmatpush2.bf16.msra.mxu0 %v293
  %340 = vmatprep.subr.bf16.mxu0 0
  %341 = vmatpush2.bf16.msra.mxu0 %v292
  %342 = vmatprep.subr.bf16.mxu0 0
  %343 = vmatpush2.bf16.msra.mxu0 %v291
  %344 = vmatprep.subr.bf16.mxu0 0
  %345 = vmatpush2.bf16.msra.mxu0 %v290
  %346 = vmatprep.mubr.bf16.mxu0 %v171
  %347 = vmatmul.mubr.bf16.gmra.mxu0 %v170
  %v348 = vpop.f32.mrf.mxu0
  %v349 = vadd.f32 0.0, %v348
  %v350 = vpop.f32.mrf.mxu0
  %v351 = vpop.f32.mrf.mxu0
  %v352 = vadd.f32 0.0, %v351
  %v353 = vpop.f32.mrf.mxu0
  %354 = vmatprep.mubr.bf16.mxu0 %v173
  %355 = vmatmul.mubr.bf16.gmra.mxu0 %v172
  %v356 = vpop.f32.mrf.mxu0
  %v357 = vadd.f32 0.0, %v356
  %v358 = vpop.f32.mrf.mxu0
  %v359 = vpop.f32.mrf.mxu0
  %v360 = vadd.f32 0.0, %v359
  %v361 = vpop.f32.mrf.mxu0
  %362 = vmatprep.mubr.bf16.mxu0 %v175
  %363 = vmatmul.mubr.bf16.gmra.mxu0 %v174
  %v364 = vpop.f32.mrf.mxu0
  %v365 = vadd.f32 0.0, %v364
  %v366 = vpop.f32.mrf.mxu0
  %v367 = vpop.f32.mrf.mxu0
  %v368 = vadd.f32 0.0, %v367
  %v369 = vpop.f32.mrf.mxu0
  %370 = vmatprep.mubr.bf16.mxu0 %v177
  %371 = vmatmul.mubr.bf16.gmra.mxu0 %v176
  %v372 = vpop.f32.mrf.mxu0
  %v373 = vadd.f32 0.0, %v372
  %v374 = vpop.f32.mrf.mxu0
  %v375 = vpop.f32.mrf.mxu0
  %v376 = vadd.f32 0.0, %v375
  %v377 = vpop.f32.mrf.mxu0
  %378 = vmatprep.mubr.bf16.mxu0 %v179
  %379 = vmatmul.mubr.bf16.gmra.mxu0 %v178
  %v380 = vpop.f32.mrf.mxu0
  %v381 = vadd.f32 0.0, %v380
  %v382 = vpop.f32.mrf.mxu0
  %v383 = vpop.f32.mrf.mxu0
  %v384 = vadd.f32 0.0, %v383
  %v385 = vpop.f32.mrf.mxu0
  %386 = vmatprep.mubr.bf16.mxu0 %v181
  %387 = vmatmul.mubr.bf16.gmra.mxu0 %v180
  %v388 = vpop.f32.mrf.mxu0
  %v389 = vadd.f32 0.0, %v388
  %v390 = vpop.f32.mrf.mxu0
  %v391 = vpop.f32.mrf.mxu0
  %v392 = vadd.f32 0.0, %v391
  %v393 = vpop.f32.mrf.mxu0
  %394 = vmatprep.mubr.bf16.mxu0 %v183
  %395 = vmatmul.mubr.bf16.gmra.mxu0 %v182
  %v396 = vpop.f32.mrf.mxu0
  %v397 = vadd.f32 0.0, %v396
  %v398 = vpop.f32.mrf.mxu0
  %v399 = vpop.f32.mrf.mxu0
  %v400 = vadd.f32 0.0, %v399
  %v401 = vpop.f32.mrf.mxu0
  %402 = vmatprep.mubr.bf16.mxu0 %v185
  %403 = vmatmul.mubr.bf16.gmra.mxu0 %v184
  %v404 = vpop.f32.mrf.mxu0
  %v405 = vadd.f32 0.0, %v404
  %v406 = vpop.f32.mrf.mxu0
  %v407 = vpop.f32.mrf.mxu0
  %v408 = vadd.f32 0.0, %v407
  %v409 = vpop.f32.mrf.mxu0
  %410 = vdwg.mxu0
  %411 = vst [vmem:[%s4] sm:$0xff] %v349
  %412 = vst [vmem:[%s4 + $0x8] sm:$0xff] %v352
  %413 = vst [vmem:[%s4 + $0x10] sm:$0xff] %v357
  %414 = vst [vmem:[%s4 + $0x18] sm:$0xff] %v360
  %415 = vst [vmem:[%s4 + $0x20] sm:$0xff] %v365
  %416 = vst [vmem:[%s4 + $0x28] sm:$0xff] %v368
  %417 = vst [vmem:[%s4 + $0x30] sm:$0xff] %v373
  %418 = vst [vmem:[%s4 + $0x38] sm:$0xff] %v376
  %419 = vst [vmem:[%s4 + $0x40] sm:$0xff] %v381
  %420 = vst [vmem:[%s4 + $0x48] sm:$0xff] %v384
  %421 = vst [vmem:[%s4 + $0x50] sm:$0xff] %v389
  %422 = vst [vmem:[%s4 + $0x58] sm:$0xff] %v392
  %423 = vst [vmem:[%s4 + $0x60] sm:$0xff] %v397
  %424 = vst [vmem:[%s4 + $0x68] sm:$0xff] %v400
  %425 = vst [vmem:[%s4 + $0x70] sm:$0xff] %v405
  %426 = vst [vmem:[%s4 + $0x78] sm:$0xff] %v408
  // Predicated region
  $region18: #{upsample16_forward.5} parent=0 // pred_check
    _
  $region19: #{upsample16_forward.5} parent=0 // pred_check_branch
    %428 = sbr.rel (0) target = $region21
  $region20: #{upsample16_forward.5} parent=0 // pred_region
    _
  $region21: #{upsample16_forward.5} parent=0 // pred_fallthru
    _
  // Predicated region
  $region22: #{upsample16_forward.5} parent=0 // pred_check
    _
  $region23: #{upsample16_forward.5} parent=0 // pred_check_branch
    %430 = sbr.rel (0) target = $region25
  $region24: #{upsample16_forward.5} parent=0 // pred_region
    _
  $region25: #{upsample16_forward.5} parent=0 // pred_fallthru
    _

// kernel: upsample16_forward.6
$region0: #{upsample16_forward.6}
  #allocation0 [shape = 'u32[]', space=smem, size = 0x4, offset = 0x4, fixed_abs, tag = 'smem constant byte address 0x4 - core index']
  #allocation1 [shape = 'u32[144,128]{1,0:T(1,128)}', space=vmem, size = 0x12000, scoped, tag = 'internal scratch']
  %s0 = inlined_call_operand.vmem [shape: f32[8,4], index: 0, kind: input, shape index: {}, may-alias: {0,1}]
  %s1 = inlined_call_operand.vmem [shape: f32[8,4], index: 1, kind: input, shape index: {}, may-alias: {0,1}]
  %s2 = inlined_call_operand.vmem [shape: f32[2,4,4,128], index: 2, kind: input, shape index: {}]
  %s3 = inlined_call_operand.vmem [shape: f32[2,8,8,128], index: 3, kind: output, shape index: {}]
  %s4 = sld [smem:[#allocation0]]
  $region45: #{upsample16_forward.6} parent=0
    _
  %s6 = ssub.s32 1, %s4
  %s7 = scalar_select 0, %s6, %s4
  loop: start=0, step=1, limit=4
  $region2: #{upsample16_forward.6} parent=0 // loop_pre_header
    _
  $region3: #{upsample16_forward.6} parent=0 // loop_header
    %s9 = sphi 0, %s13
    %p10 = scmp.ge.s32.totalorder %s9, 4
    %s17 = sphi 0, %s17
    %s19 = sphi 0, %s17
    %s20 = sphi 0, %s19
    %s34 = sphi 0, %s20
    %s38 = sphi 0, %s38
    %s40 = sphi 0, %s38
    %s41 = sphi 0, %s40
    %s55 = sphi 0, %s41
    %s61 = sphi 0, %s63
    %s64 = sphi 0, %s61
    %s65 = sphi 0, %s64
    %s81 = sphi 0, %s65
    %s87 = sphi 0, %s89
    %s90 = sphi 0, %s87
    %s91 = sphi 0, %s90
    %s107 = sphi 0, %s91
  $region4: #{upsample16_forward.6} parent=0 // loop_header_branch
    %12 = sbr.rel (%p10) target = $region8
  $region5: #{upsample16_forward.6} parent=0 // loop_body
    %s14 = ssub.s32 %s9, 1
    %s15 = ssub.s32 %s9, 2
    %s16 = sadd.s32 %s9, 1
    %s18 = sadd.s32 %s17, 1
    %p21 = scmp.eq.s32.totalorder %s9, 1
    %p22 = scmp.ne.s32.totalorder %s17, %s19
    %p23 = scmp.eq.s32.totalorder %s9, 0
    %p24 = por %p22, %p23
    %p25 = scmp.ne.s32.totalorder %s17, %s19
    %p26 = scmp.eq.s32.totalorder %s14, 1
    %p27 = por %p25, %p26
    %p28 = scmp.ne.s32.totalorder %s19, %s20
    %p29 = scmp.eq.s32.totalorder %s14, 0
    %p30 = por %p28, %p29
    %p31 = scmp.ne.s32.totalorder %s19, %s20
    %p32 = scmp.eq.s32.totalorder %s15, 1
    %p33 = por %p31, %p32
    %p35 = scmp.ne.s32.totalorder %s20, %s34
    %p36 = scmp.eq.s32.totalorder %s15, 0
    %p37 = por %p35, %p36
    %s39 = sadd.s32 %s38, 1
    %p42 = scmp.eq.s32.totalorder %s9, 1
    %p43 = scmp.ne.s32.totalorder %s38, %s40
    %p44 = scmp.eq.s32.totalorder %s9, 0
    %p45 = por %p43, %p44
    %p46 = scmp.ne.s32.totalorder %s38, %s40
    %p47 = scmp.eq.s32.totalorder %s14, 1
    %p48 = por %p46, %p47
    %p49 = scmp.ne.s32.totalorder %s40, %s41
    %p50 = scmp.eq.s32.totalorder %s14, 0
    %p51 = por %p49, %p50
    %p52 = scmp.ne.s32.totalorder %s40, %s41
    %p53 = scmp.eq.s32.totalorder %s15, 1
    %p54 = por %p52, %p53
    %p56 = scmp.ne.s32.totalorder %s41, %s55
    %p57 = scmp.eq.s32.totalorder %s15, 0
    %p58 = por %p56, %p57
    %s59 = ssub.s32 %s9, %s16
    %p60 = scmp.eq.s32.totalorder %s59, 0
    %s62 = sadd.s32 %s61, 1
    %s63 = scalar_select %p60, %s61, %s62
    %p66 = pneg %p60
    %p67 = scmp.eq.s32.totalorder %s9, 1
    %p68 = por %p66, %p67
    %p69 = scmp.ne.s32.totalorder %s61, %s64
    %p70 = scmp.eq.s32.totalorder %s9, 0
    %p71 = por %p69, %p70
    %p72 = scmp.ne.s32.totalorder %s61, %s64
    %p73 = scmp.eq.s32.totalorder %s14, 1
    %p74 = por %p72, %p73
    %p75 = scmp.ne.s32.totalorder %s64, %s65
    %p76 = scmp.eq.s32.totalorder %s14, 0
    %p77 = por %p75, %p76
    %p78 = scmp.ne.s32.totalorder %s64, %s65
    %p79 = scmp.eq.s32.totalorder %s15, 1
    %p80 = por %p78, %p79
    %p82 = scmp.ne.s32.totalorder %s65, %s81
    %p83 = scmp.eq.s32.totalorder %s15, 0
    %p84 = por %p82, %p83
    %s85 = ssub.s32 %s9, %s16
    %p86 = scmp.eq.s32.totalorder %s85, 0
    %s88 = sadd.s32 %s87, 1
    %s89 = scalar_select %p86, %s87, %s88
    %p92 = pneg %p86
    %p93 = scmp.eq.s32.totalorder %s9, 1
    %p94 = por %p92, %p93
    %p95 = scmp.ne.s32.totalorder %s87, %s90
    %p96 = scmp.eq.s32.totalorder %s9, 0
    %p97 = por %p95, %p96
    %p98 = scmp.ne.s32.totalorder %s87, %s90
    %p99 = scmp.eq.s32.totalorder %s14, 1
    %p100 = por %p98, %p99
    %p101 = scmp.ne.s32.totalorder %s90, %s91
    %p102 = scmp.eq.s32.totalorder %s14, 0
    %p103 = por %p101, %p102
    %p104 = scmp.ne.s32.totalorder %s90, %s91
    %p105 = scmp.eq.s32.totalorder %s15, 1
    %p106 = por %p104, %p105
    %p108 = scmp.ne.s32.totalorder %s91, %s107
    %p109 = scmp.eq.s32.totalorder %s15, 0
    %p110 = por %p108, %p109
    %p111 = scmp.le.s32.totalorder 1, %s9
    %p112 = scmp.lt.s32.totalorder %s9, 3
    %p113 = pnand %p111, %p112
    %p114 = pneg %p113
    // Predicated region
    $region9: #{upsample16_forward.6} parent=5 // pred_check
      _
    $region10: #{upsample16_forward.6} parent=5 // pred_check_branch
      %116 = sbr.rel (%p113) target = $region12
    $region11: #{upsample16_forward.6} parent=5 // pred_region
      %s117 = ssub.s32 %s9, 1
      // Predicated region
      $region13: #{upsample16_forward.6} parent=11 // pred_check
        %p118 = pneg %p30
      $region14: #{upsample16_forward.6} parent=11 // pred_check_branch
        %120 = sbr.rel (%p118) target = $region16
      $region15: #{upsample16_forward.6} parent=11 // pred_region
        _
      $region16: #{upsample16_forward.6} parent=11 // pred_fallthru
        _
      // Predicated region
      $region17: #{upsample16_forward.6} parent=11 // pred_check
        %p121 = pneg %p51
      $region18: #{upsample16_forward.6} parent=11 // pred_check_branch
        %123 = sbr.rel (%p121) target = $region20
      $region19: #{upsample16_forward.6} parent=11 // pred_region
        _
      $region20: #{upsample16_forward.6} parent=11 // pred_fallthru
        _
    $region12: #{upsample16_forward.6} parent=5 // pred_fallthru
      _
    %p124 = scmp.lt.s32.totalorder %s9, 2
    // Predicated region
    $region21: #{upsample16_forward.6} parent=5 // pred_check
      %p125 = pneg %p124
    $region22: #{upsample16_forward.6} parent=5 // pred_check_branch
      %127 = sbr.rel (%p125) target = $region24
    $region23: #{upsample16_forward.6} parent=5 // pred_region
      // Predicated region
      $region25: #{upsample16_forward.6} parent=23 // pred_check
        %p128 = pneg %p71
      $region26: #{upsample16_forward.6} parent=23 // pred_check_branch
        %130 = sbr.rel (%p128) target = $region28
      $region27: #{upsample16_forward.6} parent=23 // pred_region
        %p131 = scmp.lt.s32.totalorder %s9, 1
        %s132 = scalar_select %p131, %s9, 1
        %s133 = smul.addr %s132, 4
        %s134 = smul.addr %s133, 4
        %s135 = scalar_lea.vmem %s2, %s134
      $region28: #{upsample16_forward.6} parent=23 // pred_fallthru
        _
    $region24: #{upsample16_forward.6} parent=5 // pred_fallthru
      _
    %p136 = scmp.le.s32.totalorder 1, %s9
    %p137 = scmp.lt.s32.totalorder %s9, 3
    %p138 = pnand %p136, %p137
    %p139 = pneg %p138
    // Predicated region
    $region29: #{upsample16_forward.6} parent=5 // pred_check
      _
    $region30: #{upsample16_forward.6} parent=5 // pred_check_branch
      %141 = sbr.rel (%p138) target = $region32
    $region31: #{upsample16_forward.6} parent=5 // pred_region
      %s142 = ssub.s32 %s9, 1
      %p143 = pneg %p30
      %p144 = pneg %p27
      %p145 = pneg %p51
      %p146 = pneg %p48
      %p147 = scmp.lt.s32.totalorder %s14, 1
      %s148 = scalar_select %p147, %s14, 1
      %s149 = smul.addr %s148, 4
      %s150 = smul.addr %s149, 4
      %s151 = scalar_lea.vmem %s2, %s150
      %p152 = pneg %p77
      %p153 = pneg %p74
      %p154 = pneg %p103
      %p155 = pneg %p100
      %p156 = scmp.lt.s32.totalorder %s14, 1
      %s157 = scalar_select %p156, %s14, 1
      %s158 = smul.addr %s157, 8
      %s159 = smul.addr %s158, 8
      %s160 = scalar_lea.vmem %s3, %s159
      %p161 = scmp.lt.s32.totalorder %s14, 1
      %s162 = scalar_select %p161, %s14, 1
      %s163 = smul.addr %s162, 4
      %s164 = smul.addr %s163, 4
      %s165 = scalar_lea.vmem %s2, %s164
      %p166 = scmp.lt.s32.totalorder %s14, 1
      %s167 = scalar_select %p166, %s14, 1
      %s168 = smul.addr %s167, 8
      %s169 = smul.addr %s168, 8
      %s170 = scalar_lea.vmem %s3, %s169
      %v171 = vld [vmem:[%s0] sm:$0xff]
      %v172 = vld [vmem:[%s165] ss:$4 sm:$0xf]
      %s173 = scalar_lea.vmem %s165, 1
      %v174 = vld [vmem:[%s173] ss:$4 sm:$0xf]
      %s175 = scalar_lea.vmem %s165, 2
      %v176 = vld [vmem:[%s175] ss:$4 sm:$0xf]
      %s177 = scalar_lea.vmem %s165, 3
      %v178 = vld [vmem:[%s177] ss:$4 sm:$0xf]
      %vm183 = vcmask 31744
      %v185 = vsel %vm183, %v171, 0
      %vm187 = vcmask 1043456
      %v189 = vsel %vm187, %v172, 0
      %v192 = vsel %vm187, %v174, 0
      %v195 = vsel %vm187, %v176, 0
      %v198 = vsel %vm187, %v178, 0
      %200 = vmatprep.subr.mxu0 0.0
      %201 = vmatpush1.msra.mxu0 0.0
      %202 = vmatprep.subr.mxu0 0.0
      %203 = vmatpush1.msra.mxu0 0.0
      %204 = vmatprep.subr.mxu0 0.0
      %205 = vmatpush1.msra.mxu0 0.0
      %206 = vmatprep.subr.mxu0 0.0
      %207 = vmatpush1.msra.mxu0 0.0
      %208 = vmatprep.subr.mxu0 0.0
      %209 = vmatpush1.msra.mxu0 0.0
      %210 = vmatprep.subr.mxu0 0.0
      %211 = vmatpush1.msra.mxu0 0.0
      %212 = vmatprep.subr.mxu0 0.0
      %213 = vmatpush1.msra.mxu0 0.0
      %214 = vmatprep.subr.mxu0 0.0
      %215 = vmatpush1.msra.mxu0 0.0
      %216 = vmatprep.subr.mxu0 0.0
      %217 = vmatpush1.msra.mxu0 0.0
      %218 = vmatprep.subr.mxu0 0.0
      %219 = vmatpush1.msra.mxu0 0.0
      %220 = vmatprep.subr.mxu0 0.0
      %221 = vmatpush1.msra.mxu0 0.0
      %222 = vmatprep.subr.mxu0 0.0
      %223 = vmatpush1.msra.mxu0 0.0
      %224 = vmatprep.subr.mxu0 0.0
      %225 = vmatpush1.msra.mxu0 0.0
      %226 = vmatprep.subr.mxu0 0.0
      %227 = vmatpush1.msra.mxu0 0.0
      %228 = vmatprep.subr.mxu0 0.0
      %229 = vmatpush1.msra.mxu0 0.0
      %230 = vmatprep.subr.mxu0 %v192
      %231 = vmatpush1.msra.mxu0 %v189
      %232 = vmatprep.subr.mxu0 0.0
      %233 = vmatpush2.msra.mxu0 0.0
      %234 = vmatprep.subr.mxu0 0.0
      %235 = vmatpush2.msra.mxu0 0.0
      %236 = vmatprep.subr.mxu0 0.0
      %237 = vmatpush2.msra.mxu0 0.0
      %238 = vmatprep.subr.mxu0 0.0
      %239 = vmatpush2.msra.mxu0 0.0
      %240 = vmatprep.subr.mxu0 0.0
      %241 = vmatpush2.msra.mxu0 0.0
      %242 = vmatprep.subr.mxu0 0.0
      %243 = vmatpush2.msra.mxu0 0.0
      %244 = vmatprep.subr.mxu0 0.0
      %245 = vmatpush2.msra.mxu0 0.0
      %246 = vmatprep.subr.mxu0 0.0
      %247 = vmatpush2.msra.mxu0 0.0
      %248 = vmatprep.subr.mxu0 0.0
      %249 = vmatpush2.msra.mxu0 0.0
      %250 = vmatprep.subr.mxu0 0.0
      %251 = vmatpush2.msra.mxu0 0.0
      %252 = vmatprep.subr.mxu0 0.0
      %253 = vmatpush2.msra.mxu0 0.0
      %254 = vmatprep.subr.mxu0 0.0
      %255 = vmatpush2.msra.mxu0 0.0
      %256 = vmatprep.subr.mxu0 0.0
      %257 = vmatpush2.msra.mxu0 0.0
      %258 = vmatprep.subr.mxu0 0.0
      %259 = vmatpush2.msra.mxu0 0.0
      %260 = vmatprep.subr.mxu0 0.0
      %261 = vmatpush2.msra.mxu0 0.0
      %262 = vmatprep.subr.mxu0 0.0
      %263 = vmatpush2.msra.mxu0 0.0
      %264 = vmatprep.mubr.f32.mxu0 0.0
      %265 = vmatmul.mubr.f32.gmra.mxu0 %v185
      %v266 = vpop.f32.mrf.mxu0
      %v267 = vadd.f32 0.0, %v266
      %v268 = vpop.f32.mrf.mxu0
      %v269 = vadd.f32 0.0, %v268
      %270 = vdwg.mxu0
      %271 = vmatprep.subr.mxu0 0.0
      %272 = vmatpush1.msra.mxu0 0.0
      %273 = vmatprep.subr.mxu0 0.0
      %274 = vmatpush1.msra.mxu0 0.0
      %275 = vmatprep.subr.mxu0 0.0
      %276 = vmatpush1.msra.mxu0 0.0
      %277 = vmatprep.subr.mxu0 0.0
      %278 = vmatpush1.msra.mxu0 0.0
      %279 = vmatprep.subr.mxu0 0.0
      %280 = vmatpush1.msra.mxu0 0.0
      %281 = vmatprep.subr.mxu0 0.0
      %282 = vmatpush1.msra.mxu0 0.0
      %283 = vmatprep.subr.mxu0 0.0
      %284 = vmatpush1.msra.mxu0 0.0
      %285 = vmatprep.subr.mxu0 0.0
      %286 = vmatpush1.msra.mxu0 0.0
      %287 = vmatprep.subr.mxu0 0.0
      %288 = vmatpush1.msra.mxu0 0.0
      %289 = vmatprep.subr.mxu0 0.0
      %290 = vmatpush1.msra.mxu0 0.0
      %291 = vmatprep.subr.mxu0 0.0
      %292 = vmatpush1.msra.mxu0 0.0
      %293 = vmatprep.subr.mxu0 0.0
      %294 = vmatpush1.msra.mxu0 0.0
      %295 = vmatprep.subr.mxu0 0.0
      %296 = vmatpush1.msra.mxu0 0.0
      %297 = vmatprep.subr.mxu0 0.0
      %298 = vmatpush1.msra.mxu0 0.0
      %299 = vmatprep.subr.mxu0 0.0
      %300 = vmatpush1.msra.mxu0 0.0
      %301 = vmatprep.subr.mxu0 %v198
      %302 = vmatpush1.msra.mxu0 %v195
      %303 = vmatprep.subr.mxu0 0.0
      %304 = vmatpush2.msra.mxu0 0.0
      %305 = vmatprep.subr.mxu0 0.0
      %306 = vmatpush2.msra.mxu0 0.0
      %307 = vmatprep.subr.mxu0 0.0
      %308 = vmatpush2.msra.mxu0 0.0
      %309 = vmatprep.subr.mxu0 0.0
      %310 = vmatpush2.msra.mxu0 0.0
      %311 = vmatprep.subr.mxu0 0.0
      %312 = vmatpush2.msra.mxu0 0.0
      %313 = vmatprep.subr.mxu0 0.0
      %314 = vmatpush2.msra.mxu0 0.0
      %315 = vmatprep.subr.mxu0 0.0
      %316 = vmatpush2.msra.mxu0 0.0
      %317 = vmatprep.subr.mxu0 0.0
      %318 = vmatpush2.msra.mxu0 0.0
      %319 = vmatprep.subr.mxu0 0.0
      %320 = vmatpush2.msra.mxu0 0.0
      %321 = vmatprep.subr.mxu0 0.0
      %322 = vmatpush2.msra.mxu0 0.0
      %323 = vmatprep.subr.mxu0 0.0
      %324 = vmatpush2.msra.mxu0 0.0
      %325 = vmatprep.subr.mxu0 0.0
      %326 = vmatpush2.msra.mxu0 0.0
      %327 = vmatprep.subr.mxu0 0.0
      %328 = vmatpush2.msra.mxu0 0.0
      %329 = vmatprep.subr.mxu0 0.0
      %330 = vmatpush2.msra.mxu0 0.0
      %331 = vmatprep.subr.mxu0 0.0
      %332 = vmatpush2.msra.mxu0 0.0
      %333 = vmatprep.subr.mxu0 0.0
      %334 = vmatpush2.msra.mxu0 0.0
      %335 = vmatprep.mubr.f32.mxu0 0.0
      %336 = vmatmul.mubr.f32.gmra.mxu0 %v185
      %v337 = vpop.f32.mrf.mxu0
      %v338 = vadd.f32 0.0, %v337
      %v339 = vpop.f32.mrf.mxu0
      %v340 = vadd.f32 0.0, %v339
      %341 = vdwg.mxu0
      %v342 = vcombine.low %v267, %v338
      %v343 = vcombine.high %v267, %v338
      %v345 = vunpack.c.l.s4 1983009808
      %v346 = vunpack.c.0.s8 %v345
      %v347 = vlaneseq
      %v348 = vshrl.u32 %v347, 7
      %v349 = vsub.s32 %v346, %v348
      %v350 = vrot.slane %v342, %v349
      %v352 = vunpack.c.l.s4 1983009808
      %v353 = vunpack.c.0.s8 %v352
      %v354 = vlaneseq
      %v355 = vshrl.u32 %v354, 7
      %v356 = vsub.s32 %v353, %v355
      %v357 = vrot.slane %v343, %v356
      %v358 = vcombine.low %v269, %v340
      %v359 = vcombine.high %v269, %v340
      %v361 = vunpack.c.l.s4 1983009808
      %v362 = vunpack.c.0.s8 %v361
      %v363 = vlaneseq
      %v364 = vshrl.u32 %v363, 7
      %v365 = vsub.s32 %v362, %v364
      %v366 = vrot.slane %v358, %v365
      %v368 = vunpack.c.l.s4 1983009808
      %v369 = vunpack.c.0.s8 %v368
      %v370 = vlaneseq
      %v371 = vshrl.u32 %v370, 7
      %v372 = vsub.s32 %v369, %v371
      %v373 = vrot.slane %v359, %v372
      %v374 = vcombine.low %v350, %v366
      %v375 = vcombine.high %v350, %v366
      %v377 = vunpack.c.l.s4 1934713408
      %v378 = vunpack.c.0.s8 %v377
      %v379 = vlaneseq
      %v380 = vshrl.u32 %v379, 7
      %v381 = vsub.s32 %v378, %v380
      %v382 = vrot.slane %v374, %v381
      %v384 = vunpack.c.l.s4 1934713408
      %v385 = vunpack.c.0.s8 %v384
      %v386 = vlaneseq
      %v387 = vshrl.u32 %v386, 7
      %v388 = vsub.s32 %v385, %v387
      %v389 = vrot.slane %v375, %v388
      %v390 = vcombine.low %v357, %v373
      %v391 = vcombine.high %v357, %v373
      %v393 = vunpack.c.l.s4 1934713408
      %v394 = vunpack.c.0.s8 %v393
      %v395 = vlaneseq
      %v396 = vshrl.u32 %v395, 7
      %v397 = vsub.s32 %v394, %v396
      %v398 = vrot.slane %v390, %v397
      %v400 = vunpack.c.l.s4 1934713408
      %v401 = vunpack.c.0.s8 %v400
      %v402 = vlaneseq
      %v403 = vshrl.u32 %v402, 7
      %v404 = vsub.s32 %v401, %v403
      %v405 = vrot.slane %v391, %v404
      %v406 = vcombine.high %v382, 0.0
      %v407 = vcombine.high %v389, 0.0
      %v408 = vcombine.high %v398, 0.0
      %v409 = vcombine.high %v405, 0.0
      %v410 = vld [vmem:[%s1] sm:$0xff]
      %v412 = vsel %vm183, %v410, 0
      %v415 = vsel %vm187, %v382, 0
      %417 = vmatprep.subr.mxu0 0.0
      %418 = vmatpush1.msra.mxu0 0.0
      %419 = vmatprep.subr.mxu0 0.0
      %420 = vmatpush1.msra.mxu0 0.0
      %421 = vmatprep.subr.mxu0 0.0
      %422 = vmatpush1.msra.mxu0 0.0
      %423 = vmatprep.subr.mxu0 0.0
      %424 = vmatpush1.msra.mxu0 0.0
      %425 = vmatprep.subr.mxu0 0.0
      %426 = vmatpush1.msra.mxu0 0.0
      %427 = vmatprep.subr.mxu0 0.0
      %428 = vmatpush1.msra.mxu0 0.0
      %429 = vmatprep.subr.mxu0 0.0
      %430 = vmatpush1.msra.mxu0 0.0
      %431 = vmatprep.subr.mxu0 0.0
      %432 = vmatpush1.msra.mxu0 0.0
      %433 = vmatprep.subr.mxu0 0.0
      %434 = vmatpush1.msra.mxu0 0.0
      %435 = vmatprep.subr.mxu0 0.0
      %436 = vmatpush1.msra.mxu0 0.0
      %437 = vmatprep.subr.mxu0 0.0
      %438 = vmatpush1.msra.mxu0 0.0
      %439 = vmatprep.subr.mxu0 0.0
      %440 = vmatpush1.msra.mxu0 0.0
      %441 = vmatprep.subr.mxu0 0.0
      %442 = vmatpush1.msra.mxu0 0.0
      %443 = vmatprep.subr.mxu0 0.0
      %444 = vmatpush1.msra.mxu0 0.0
      %445 = vmatprep.subr.mxu0 0.0
      %446 = vmatpush1.msra.mxu0 0.0
      %447 = vmatprep.subr.mxu0 0.0
      %448 = vmatpush1.msra.mxu0 %v415
      %449 = vmatprep.subr.mxu0 0.0
      %450 = vmatpush2.msra.mxu0 0.0
      %451 = vmatprep.subr.mxu0 0.0
      %452 = vmatpush2.msra.mxu0 0.0
      %453 = vmatprep.subr.mxu0 0.0
      %454 = vmatpush2.msra.mxu0 0.0
      %455 = vmatprep.subr.mxu0 0.0
      %456 = vmatpush2.msra.mxu0 0.0
      %457 = vmatprep.subr.mxu0 0.0
      %458 = vmatpush2.msra.mxu0 0.0
      %459 = vmatprep.subr.mxu0 0.0
      %460 = vmatpush2.msra.mxu0 0.0
      %461 = vmatprep.subr.mxu0 0.0
      %462 = vmatpush2.msra.mxu0 0.0
      %463 = vmatprep.subr.mxu0 0.0
      %464 = vmatpush2.msra.mxu0 0.0
      %465 = vmatprep.subr.mxu0 0.0
      %466 = vmatpush2.msra.mxu0 0.0
      %467 = vmatprep.subr.mxu0 0.0
      %468 = vmatpush2.msra.mxu0 0.0
      %469 = vmatprep.subr.mxu0 0.0
      %470 = vmatpush2.msra.mxu0 0.0
      %471 = vmatprep.subr.mxu0 0.0
      %472 = vmatpush2.msra.mxu0 0.0
      %473 = vmatprep.subr.mxu0 0.0
      %474 = vmatpush2.msra.mxu0 0.0
      %475 = vmatprep.subr.mxu0 0.0
      %476 = vmatpush2.msra.mxu0 0.0
      %477 = vmatprep.subr.mxu0 0.0
      %478 = vmatpush2.msra.mxu0 0.0
      %479 = vmatprep.subr.mxu0 0.0
      %480 = vmatpush2.msra.mxu0 0.0
      %481 = vmatprep.mubr.f32.mxu0 0.0
      %482 = vmatmul.mubr.f32.gmra.mxu0 %v412
      %v483 = vpop.f32.mrf.mxu0
      %v484 = vadd.f32 0.0, %v483
      %v485 = vpop.f32.mrf.mxu0
      %486 = vdwg.mxu0
      %v488 = vsel %vm187, %v406, 0
      %490 = vmatprep.subr.mxu0 0.0
      %491 = vmatpush1.msra.mxu0 0.0
      %492 = vmatprep.subr.mxu0 0.0
      %493 = vmatpush1.msra.mxu0 0.0
      %494 = vmatprep.subr.mxu0 0.0
      %495 = vmatpush1.msra.mxu0 0.0
      %496 = vmatprep.subr.mxu0 0.0
      %497 = vmatpush1.msra.mxu0 0.0
      %498 = vmatprep.subr.mxu0 0.0
      %499 = vmatpush1.msra.mxu0 0.0
      %500 = vmatprep.subr.mxu0 0.0
      %501 = vmatpush1.msra.mxu0 0.0
      %502 = vmatprep.subr.mxu0 0.0
      %503 = vmatpush1.msra.mxu0 0.0
      %504 = vmatprep.subr.mxu0 0.0
      %505 = vmatpush1.msra.mxu0 0.0
      %506 = vmatprep.subr.mxu0 0.0
      %507 = vmatpush1.msra.mxu0 0.0
      %508 = vmatprep.subr.mxu0 0.0
      %509 = vmatpush1.msra.mxu0 0.0
      %510 = vmatprep.subr.mxu0 0.0
      %511 = vmatpush1.msra.mxu0 0.0
      %512 = vmatprep.subr.mxu0 0.0
      %513 = vmatpush1.msra.mxu0 0.0
      %514 = vmatprep.subr.mxu0 0.0
      %515 = vmatpush1.msra.mxu0 0.0
      %516 = vmatprep.subr.mxu0 0.0
      %517 = vmatpush1.msra.mxu0 0.0
      %518 = vmatprep.subr.mxu0 0.0
      %519 = vmatpush1.msra.mxu0 0.0
      %520 = vmatprep.subr.mxu0 0.0
      %521 = vmatpush1.msra.mxu0 %v488
      %522 = vmatprep.subr.mxu0 0.0
      %523 = vmatpush2.msra.mxu0 0.0
      %524 = vmatprep.subr.mxu0 0.0
      %525 = vmatpush2.msra.mxu0 0.0
      %526 = vmatprep.subr.mxu0 0.0
      %527 = vmatpush2.msra.mxu0 0.0
      %528 = vmatprep.subr.mxu0 0.0
      %529 = vmatpush2.msra.mxu0 0.0
      %530 = vmatprep.subr.mxu0 0.0
      %531 = vmatpush2.msra.mxu0 0.0
      %532 = vmatprep.subr.mxu0 0.0
      %533 = vmatpush2.msra.mxu0 0.0
      %534 = vmatprep.subr.mxu0 0.0
      %535 = vmatpush2.msra.mxu0 0.0
      %536 = vmatprep.subr.mxu0 0.0
      %537 = vmatpush2.msra.mxu0 0.0
      %538 = vmatprep.subr.mxu0 0.0
      %539 = vmatpush2.msra.mxu0 0.0
      %540 = vmatprep.subr.mxu0 0.0
      %541 = vmatpush2.msra.mxu0 0.0
      %542 = vmatprep.subr.mxu0 0.0
      %543 = vmatpush2.msra.mxu0 0.0
      %544 = vmatprep.subr.mxu0 0.0
      %545 = vmatpush2.msra.mxu0 0.0
      %546 = vmatprep.subr.mxu0 0.0
      %547 = vmatpush2.msra.mxu0 0.0
      %548 = vmatprep.subr.mxu0 0.0
      %549 = vmatpush2.msra.mxu0 0.0
      %550 = vmatprep.subr.mxu0 0.0
      %551 = vmatpush2.msra.mxu0 0.0
      %552 = vmatprep.subr.mxu0 0.0
      %553 = vmatpush2.msra.mxu0 0.0
      %554 = vmatprep.mubr.f32.mxu0 0.0
      %555 = vmatmul.mubr.f32.gmra.mxu0 %v412
      %v556 = vpop.f32.mrf.mxu0
      %v557 = vadd.f32 0.0, %v556
      %v558 = vpop.f32.mrf.mxu0
      %559 = vdwg.mxu0
      %v561 = vsel %vm187, %v389, 0
      %563 = vmatprep.subr.mxu0 0.0
      %564 = vmatpush1.msra.mxu0 0.0
      %565 = vmatprep.subr.mxu0 0.0
      %566 = vmatpush1.msra.mxu0 0.0
      %567 = vmatprep.subr.mxu0 0.0
      %568 = vmatpush1.msra.mxu0 0.0
      %569 = vmatprep.subr.mxu0 0.0
      %570 = vmatpush1.msra.mxu0 0.0
      %571 = vmatprep.subr.mxu0 0.0
      %572 = vmatpush1.msra.mxu0 0.0
      %573 = vmatprep.subr.mxu0 0.0
      %574 = vmatpush1.msra.mxu0 0.0
      %575 = vmatprep.subr.mxu0 0.0
      %576 = vmatpush1.msra.mxu0 0.0
      %577 = vmatprep.subr.mxu0 0.0
      %578 = vmatpush1.msra.mxu0 0.0
      %579 = vmatprep.subr.mxu0 0.0
      %580 = vmatpush1.msra.mxu0 0.0
      %581 = vmatprep.subr.mxu0 0.0
      %582 = vmatpush1.msra.mxu0 0.0
      %583 = vmatprep.subr.mxu0 0.0
      %584 = vmatpush1.msra.mxu0 0.0
      %585 = vmatprep.subr.mxu0 0.0
      %586 = vmatpush1.msra.mxu0 0.0
      %587 = vmatprep.subr.mxu0 0.0
      %588 = vmatpush1.msra.mxu0 0.0
      %589 = vmatprep.subr.mxu0 0.0
      %590 = vmatpush1.msra.mxu0 0.0
      %591 = vmatprep.subr.mxu0 0.0
      %592 = vmatpush1.msra.mxu0 0.0
      %593 = vmatprep.subr.mxu0 0.0
      %594 = vmatpush1.msra.mxu0 %v561
      %595 = vmatprep.subr.mxu0 0.0
      %596 = vmatpush2.msra.mxu0 0.0
      %597 = vmatprep.subr.mxu0 0.0
      %598 = vmatpush2.msra.mxu0 0.0
      %599 = vmatprep.subr.mxu0 0.0
      %600 = vmatpush2.msra.mxu0 0.0
      %601 = vmatprep.subr.mxu0 0.0
      %602 = vmatpush2.msra.mxu0 0.0
      %603 = vmatprep.subr.mxu0 0.0
      %604 = vmatpush2.msra.mxu0 0.0
      %605 = vmatprep.subr.mxu0 0.0
      %606 = vmatpush2.msra.mxu0 0.0
      %607 = vmatprep.subr.mxu0 0.0
      %608 = vmatpush2.msra.mxu0 0.0
      %609 = vmatprep.subr.mxu0 0.0
      %610 = vmatpush2.msra.mxu0 0.0
      %611 = vmatprep.subr.mxu0 0.0
      %612 = vmatpush2.msra.mxu0 0.0
      %613 = vmatprep.subr.mxu0 0.0
      %614 = vmatpush2.msra.mxu0 0.0
      %615 = vmatprep.subr.mxu0 0.0
      %616 = vmatpush2.msra.mxu0 0.0
      %617 = vmatprep.subr.mxu0 0.0
      %618 = vmatpush2.msra.mxu0 0.0
      %619 = vmatprep.subr.mxu0 0.0
      %620 = vmatpush2.msra.mxu0 0.0
      %621 = vmatprep.subr.mxu0 0.0
      %622 = vmatpush2.msra.mxu0 0.0
      %623 = vmatprep.subr.mxu0 0.0
      %624 = vmatpush2.msra.mxu0 0.0
      %625 = vmatprep.subr.mxu0 0.0
      %626 = vmatpush2.msra.mxu0 0.0
      %627 = vmatprep.mubr.f32.mxu0 0.0
      %628 = vmatmul.mubr.f32.gmra.mxu0 %v412
      %v629 = vpop.f32.mrf.mxu0
      %v630 = vadd.f32 0.0, %v629
      %v631 = vpop.f32.mrf.mxu0
      %632 = vdwg.mxu0
      %v634 = vsel %vm187, %v407, 0
      %636 = vmatprep.subr.mxu0 0.0
      %637 = vmatpush1.msra.mxu0 0.0
      %638 = vmatprep.subr.mxu0 0.0
      %639 = vmatpush1.msra.mxu0 0.0
      %640 = vmatprep.subr.mxu0 0.0
      %641 = vmatpush1.msra.mxu0 0.0
      %642 = vmatprep.subr.mxu0 0.0
      %643 = vmatpush1.msra.mxu0 0.0
      %644 = vmatprep.subr.mxu0 0.0
      %645 = vmatpush1.msra.mxu0 0.0
      %646 = vmatprep.subr.mxu0 0.0
      %647 = vmatpush1.msra.mxu0 0.0
      %648 = vmatprep.subr.mxu0 0.0
      %649 = vmatpush1.msra.mxu0 0.0
      %650 = vmatprep.subr.mxu0 0.0
      %651 = vmatpush1.msra.mxu0 0.0
      %652 = vmatprep.subr.mxu0 0.0
      %653 = vmatpush1.msra.mxu0 0.0
      %654 = vmatprep.subr.mxu0 0.0
      %655 = vmatpush1.msra.mxu0 0.0
      %656 = vmatprep.subr.mxu0 0.0
      %657 = vmatpush1.msra.mxu0 0.0
      %658 = vmatprep.subr.mxu0 0.0
      %659 = vmatpush1.msra.mxu0 0.0
      %660 = vmatprep.subr.mxu0 0.0
      %661 = vmatpush1.msra.mxu0 0.0
      %662 = vmatprep.subr.mxu0 0.0
      %663 = vmatpush1.msra.mxu0 0.0
      %664 = vmatprep.subr.mxu0 0.0
      %665 = vmatpush1.msra.mxu0 0.0
      %666 = vmatprep.subr.mxu0 0.0
      %667 = vmatpush1.msra.mxu0 %v634
      %668 = vmatprep.subr.mxu0 0.0
      %669 = vmatpush2.msra.mxu0 0.0
      %670 = vmatprep.subr.mxu0 0.0
      %671 = vmatpush2.msra.mxu0 0.0
      %672 = vmatprep.subr.mxu0 0.0
      %673 = vmatpush2.msra.mxu0 0.0
      %674 = vmatprep.subr.mxu0 0.0
      %675 = vmatpush2.msra.mxu0 0.0
      %676 = vmatprep.subr.mxu0 0.0
      %677 = vmatpush2.msra.mxu0 0.0
      %678 = vmatprep.subr.mxu0 0.0
      %679 = vmatpush2.msra.mxu0 0.0
      %680 = vmatprep.subr.mxu0 0.0
      %681 = vmatpush2.msra.mxu0 0.0
      %682 = vmatprep.subr.mxu0 0.0
      %683 = vmatpush2.msra.mxu0 0.0
      %684 = vmatprep.subr.mxu0 0.0
      %685 = vmatpush2.msra.mxu0 0.0
      %686 = vmatprep.subr.mxu0 0.0
      %687 = vmatpush2.msra.mxu0 0.0
      %688 = vmatprep.subr.mxu0 0.0
      %689 = vmatpush2.msra.mxu0 0.0
      %690 = vmatprep.subr.mxu0 0.0
      %691 = vmatpush2.msra.mxu0 0.0
      %692 = vmatprep.subr.mxu0 0.0
      %693 = vmatpush2.msra.mxu0 0.0
      %694 = vmatprep.subr.mxu0 0.0
      %695 = vmatpush2.msra.mxu0 0.0
      %696 = vmatprep.subr.mxu0 0.0
      %697 = vmatpush2.msra.mxu0 0.0
      %698 = vmatprep.subr.mxu0 0.0
      %699 = vmatpush2.msra.mxu0 0.0
      %700 = vmatprep.mubr.f32.mxu0 0.0
      %701 = vmatmul.mubr.f32.gmra.mxu0 %v412
      %v702 = vpop.f32.mrf.mxu0
      %v703 = vadd.f32 0.0, %v702
      %v704 = vpop.f32.mrf.mxu0
      %705 = vdwg.mxu0
      %v707 = vsel %vm187, %v398, 0
      %709 = vmatprep.subr.mxu0 0.0
      %710 = vmatpush1.msra.mxu0 0.0
      %711 = vmatprep.subr.mxu0 0.0
      %712 = vmatpush1.msra.mxu0 0.0
      %713 = vmatprep.subr.mxu0 0.0
      %714 = vmatpush1.msra.mxu0 0.0
      %715 = vmatprep.subr.mxu0 0.0
      %716 = vmatpush1.msra.mxu0 0.0
      %717 = vmatprep.subr.mxu0 0.0
      %718 = vmatpush1.msra.mxu0 0.0
      %719 = vmatprep.subr.mxu0 0.0
      %720 = vmatpush1.msra.mxu0 0.0
      %721 = vmatprep.subr.mxu0 0.0
      %722 = vmatpush1.msra.mxu0 0.0
      %723 = vmatprep.subr.mxu0 0.0
      %724 = vmatpush1.msra.mxu0 0.0
      %725 = vmatprep.subr.mxu0 0.0
      %726 = vmatpush1.msra.mxu0 0.0
      %727 = vmatprep.subr.mxu0 0.0
      %728 = vmatpush1.msra.mxu0 0.0
      %729 = vmatprep.subr.mxu0 0.0
      %730 = vmatpush1.msra.mxu0 0.0
      %731 = vmatprep.subr.mxu0 0.0
      %732 = vmatpush1.msra.mxu0 0.0
      %733 = vmatprep.subr.mxu0 0.0
      %734 = vmatpush1.msra.mxu0 0.0
      %735 = vmatprep.subr.mxu0 0.0
      %736 = vmatpush1.msra.mxu0 0.0
      %737 = vmatprep.subr.mxu0 0.0
      %738 = vmatpush1.msra.mxu0 0.0
      %739 = vmatprep.subr.mxu0 0.0
      %740 = vmatpush1.msra.mxu0 %v707
      %741 = vmatprep.subr.mxu0 0.0
      %742 = vmatpush2.msra.mxu0 0.0
      %743 = vmatprep.subr.mxu0 0.0
      %744 = vmatpush2.msra.mxu0 0.0
      %745 = vmatprep.subr.mxu0 0.0
      %746 = vmatpush2.msra.mxu0 0.0
      %747 = vmatprep.subr.mxu0 0.0
      %748 = vmatpush2.msra.mxu0 0.0
      %749 = vmatprep.subr.mxu0 0.0
      %750 = vmatpush2.msra.mxu0 0.0
      %751 = vmatprep.subr.mxu0 0.0
      %752 = vmatpush2.msra.mxu0 0.0
      %753 = vmatprep.subr.mxu0 0.0
      %754 = vmatpush2.msra.mxu0 0.0
      %755 = vmatprep.subr.mxu0 0.0
      %756 = vmatpush2.msra.mxu0 0.0
      %757 = vmatprep.subr.mxu0 0.0
      %758 = vmatpush2.msra.mxu0 0.0
      %759 = vmatprep.subr.mxu0 0.0
      %760 = vmatpush2.msra.mxu0 0.0
      %761 = vmatprep.subr.mxu0 0.0
      %762 = vmatpush2.msra.mxu0 0.0
      %763 = vmatprep.subr.mxu0 0.0
      %764 = vmatpush2.msra.mxu0 0.0
      %765 = vmatprep.subr.mxu0 0.0
      %766 = vmatpush2.msra.mxu0 0.0
      %767 = vmatprep.subr.mxu0 0.0
      %768 = vmatpush2.msra.mxu0 0.0
      %769 = vmatprep.subr.mxu0 0.0
      %770 = vmatpush2.msra.mxu0 0.0
      %771 = vmatprep.subr.mxu0 0.0
      %772 = vmatpush2.msra.mxu0 0.0
      %773 = vmatprep.mubr.f32.mxu0 0.0
      %774 = vmatmul.mubr.f32.gmra.mxu0 %v412
      %v775 = vpop.f32.mrf.mxu0
      %v776 = vadd.f32 0.0, %v775
      %v777 = vpop.f32.mrf.mxu0
      %778 = vdwg.mxu0
      %v780 = vsel %vm187, %v408, 0
      %782 = vmatprep.subr.mxu0 0.0
      %783 = vmatpush1.msra.mxu0 0.0
      %784 = vmatprep.subr.mxu0 0.0
      %785 = vmatpush1.msra.mxu0 0.0
      %786 = vmatprep.subr.mxu0 0.0
      %787 = vmatpush1.msra.mxu0 0.0
      %788 = vmatprep.subr.mxu0 0.0
      %789 = vmatpush1.msra.mxu0 0.0
      %790 = vmatprep.subr.mxu0 0.0
      %791 = vmatpush1.msra.mxu0 0.0
      %792 = vmatprep.subr.mxu0 0.0
      %793 = vmatpush1.msra.mxu0 0.0
      %794 = vmatprep.subr.mxu0 0.0
      %795 = vmatpush1.msra.mxu0 0.0
      %796 = vmatprep.subr.mxu0 0.0
      %797 = vmatpush1.msra.mxu0 0.0
      %798 = vmatprep.subr.mxu0 0.0
      %799 = vmatpush1.msra.mxu0 0.0
      %800 = vmatprep.subr.mxu0 0.0
      %801 = vmatpush1.msra.mxu0 0.0
      %802 = vmatprep.subr.mxu0 0.0
      %803 = vmatpush1.msra.mxu0 0.0
      %804 = vmatprep.subr.mxu0 0.0
      %805 = vmatpush1.msra.mxu0 0.0
      %806 = vmatprep.subr.mxu0 0.0
      %807 = vmatpush1.msra.mxu0 0.0
      %808 = vmatprep.subr.mxu0 0.0
      %809 = vmatpush1.msra.mxu0 0.0
      %810 = vmatprep.subr.mxu0 0.0
      %811 = vmatpush1.msra.mxu0 0.0
      %812 = vmatprep.subr.mxu0 0.0
      %813 = vmatpush1.msra.mxu0 %v780
      %814 = vmatprep.subr.mxu0 0.0
      %815 = vmatpush2.msra.mxu0 0.0
      %816 = vmatprep.subr.mxu0 0.0
      %817 = vmatpush2.msra.mxu0 0.0
      %818 = vmatprep.subr.mxu0 0.0
      %819 = vmatpush2.msra.mxu0 0.0
      %820 = vmatprep.subr.mxu0 0.0
      %821 = vmatpush2.msra.mxu0 0.0
      %822 = vmatprep.subr.mxu0 0.0
      %823 = vmatpush2.msra.mxu0 0.0
      %824 = vmatprep.subr.mxu0 0.0
      %825 = vmatpush2.msra.mxu0 0.0
      %826 = vmatprep.subr.mxu0 0.0
      %827 = vmatpush2.msra.mxu0 0.0
      %828 = vmatprep.subr.mxu0 0.0
      %829 = vmatpush2.msra.mxu0 0.0
      %830 = vmatprep.subr.mxu0 0.0
      %831 = vmatpush2.msra.mxu0 0.0
      %832 = vmatprep.subr.mxu0 0.0
      %833 = vmatpush2.msra.mxu0 0.0
      %834 = vmatprep.subr.mxu0 0.0
      %835 = vmatpush2.msra.mxu0 0.0
      %836 = vmatprep.subr.mxu0 0.0
      %837 = vmatpush2.msra.mxu0 0.0
      %838 = vmatprep.subr.mxu0 0.0
      %839 = vmatpush2.msra.mxu0 0.0
      %840 = vmatprep.subr.mxu0 0.0
      %841 = vmatpush2.msra.mxu0 0.0
      %842 = vmatprep.subr.mxu0 0.0
      %843 = vmatpush2.msra.mxu0 0.0
      %844 = vmatprep.subr.mxu0 0.0
      %845 = vmatpush2.msra.mxu0 0.0
      %846 = vmatprep.mubr.f32.mxu0 0.0
      %847 = vmatmul.mubr.f32.gmra.mxu0 %v412
      %v848 = vpop.f32.mrf.mxu0
      %v849 = vadd.f32 0.0, %v848
      %v850 = vpop.f32.mrf.mxu0
      %851 = vdwg.mxu0
      %v853 = vsel %vm187, %v405, 0
      %855 = vmatprep.subr.mxu0 0.0
      %856 = vmatpush1.msra.mxu0 0.0
      %857 = vmatprep.subr.mxu0 0.0
      %858 = vmatpush1.msra.mxu0 0.0
      %859 = vmatprep.subr.mxu0 0.0
      %860 = vmatpush1.msra.mxu0 0.0
      %861 = vmatprep.subr.mxu0 0.0
      %862 = vmatpush1.msra.mxu0 0.0
      %863 = vmatprep.subr.mxu0 0.0
      %864 = vmatpush1.msra.mxu0 0.0
      %865 = vmatprep.subr.mxu0 0.0
      %866 = vmatpush1.msra.mxu0 0.0
      %867 = vmatprep.subr.mxu0 0.0
      %868 = vmatpush1.msra.mxu0 0.0
      %869 = vmatprep.subr.mxu0 0.0
      %870 = vmatpush1.msra.mxu0 0.0
      %871 = vmatprep.subr.mxu0 0.0
      %872 = vmatpush1.msra.mxu0 0.0
      %873 = vmatprep.subr.mxu0 0.0
      %874 = vmatpush1.msra.mxu0 0.0
      %875 = vmatprep.subr.mxu0 0.0
      %876 = vmatpush1.msra.mxu0 0.0
      %877 = vmatprep.subr.mxu0 0.0
      %878 = vmatpush1.msra.mxu0 0.0
      %879 = vmatprep.subr.mxu0 0.0
      %880 = vmatpush1.msra.mxu0 0.0
      %881 = vmatprep.subr.mxu0 0.0
      %882 = vmatpush1.msra.mxu0 0.0
      %883 = vmatprep.subr.mxu0 0.0
      %884 = vmatpush1.msra.mxu0 0.0
      %885 = vmatprep.subr.mxu0 0.0
      %886 = vmatpush1.msra.mxu0 %v853
      %887 = vmatprep.subr.mxu0 0.0
      %888 = vmatpush2.msra.mxu0 0.0
      %889 = vmatprep.subr.mxu0 0.0
      %890 = vmatpush2.msra.mxu0 0.0
      %891 = vmatprep.subr.mxu0 0.0
      %892 = vmatpush2.msra.mxu0 0.0
      %893 = vmatprep.subr.mxu0 0.0
      %894 = vmatpush2.msra.mxu0 0.0
      %895 = vmatprep.subr.mxu0 0.0
      %896 = vmatpush2.msra.mxu0 0.0
      %897 = vmatprep.subr.mxu0 0.0
      %898 = vmatpush2.msra.mxu0 0.0
      %899 = vmatprep.subr.mxu0 0.0
      %900 = vmatpush2.msra.mxu0 0.0
      %901 = vmatprep.subr.mxu0 0.0
      %902 = vmatpush2.msra.mxu0 0.0
      %903 = vmatprep.subr.mxu0 0.0
      %904 = vmatpush2.msra.mxu0 0.0
      %905 = vmatprep.subr.mxu0 0.0
      %906 = vmatpush2.msra.mxu0 0.0
      %907 = vmatprep.subr.mxu0 0.0
      %908 = vmatpush2.msra.mxu0 0.0
      %909 = vmatprep.subr.mxu0 0.0
      %910 = vmatpush2.msra.mxu0 0.0
      %911 = vmatprep.subr.mxu0 0.0
      %912 = vmatpush2.msra.mxu0 0.0
      %913 = vmatprep.subr.mxu0 0.0
      %914 = vmatpush2.msra.mxu0 0.0
      %915 = vmatprep.subr.mxu0 0.0
      %916 = vmatpush2.msra.mxu0 0.0
      %917 = vmatprep.subr.mxu0 0.0
      %918 = vmatpush2.msra.mxu0 0.0
      %919 = vmatprep.mubr.f32.mxu0 0.0
      %920 = vmatmul.mubr.f32.gmra.mxu0 %v412
      %v921 = vpop.f32.mrf.mxu0
      %v922 = vadd.f32 0.0, %v921
      %v923 = vpop.f32.mrf.mxu0
      %924 = vdwg.mxu0
      %v926 = vsel %vm187, %v409, 0
      %928 = vmatprep.subr.mxu0 0.0
      %929 = vmatpush1.msra.mxu0 0.0
      %930 = vmatprep.subr.mxu0 0.0
      %931 = vmatpush1.msra.mxu0 0.0
      %932 = vmatprep.subr.mxu0 0.0
      %933 = vmatpush1.msra.mxu0 0.0
      %934 = vmatprep.subr.mxu0 0.0
      %935 = vmatpush1.msra.mxu0 0.0
      %936 = vmatprep.subr.mxu0 0.0
      %937 = vmatpush1.msra.mxu0 0.0
      %938 = vmatprep.subr.mxu0 0.0
      %939 = vmatpush1.msra.mxu0 0.0
      %940 = vmatprep.subr.mxu0 0.0
      %941 = vmatpush1.msra.mxu0 0.0
      %942 = vmatprep.subr.mxu0 0.0
      %943 = vmatpush1.msra.mxu0 0.0
      %944 = vmatprep.subr.mxu0 0.0
      %945 = vmatpush1.msra.mxu0 0.0
      %946 = vmatprep.subr.mxu0 0.0
      %947 = vmatpush1.msra.mxu0 0.0
      %948 = vmatprep.subr.mxu0 0.0
      %949 = vmatpush1.msra.mxu0 0.0
      %950 = vmatprep.subr.mxu0 0.0
      %951 = vmatpush1.msra.mxu0 0.0
      %952 = vmatprep.subr.mxu0 0.0
      %953 = vmatpush1.msra.mxu0 0.0
      %954 = vmatprep.subr.mxu0 0.0
      %955 = vmatpush1.msra.mxu0 0.0
      %956 = vmatprep.subr.mxu0 0.0
      %957 = vmatpush1.msra.mxu0 0.0
      %958 = vmatprep.subr.mxu0 0.0
      %959 = vmatpush1.msra.mxu0 %v926
      %960 = vmatprep.subr.mxu0 0.0
      %961 = vmatpush2.msra.mxu0 0.0
      %962 = vmatprep.subr.mxu0 0.0
      %963 = vmatpush2.msra.mxu0 0.0
      %964 = vmatprep.subr.mxu0 0.0
      %965 = vmatpush2.msra.mxu0 0.0
      %966 = vmatprep.subr.mxu0 0.0
      %967 = vmatpush2.msra.mxu0 0.0
      %968 = vmatprep.subr.mxu0 0.0
      %969 = vmatpush2.msra.mxu0 0.0
      %970 = vmatprep.subr.mxu0 0.0
      %971 = vmatpush2.msra.mxu0 0.0
      %972 = vmatprep.subr.mxu0 0.0
      %973 = vmatpush2.msra.mxu0 0.0
      %974 = vmatprep.subr.mxu0 0.0
      %975 = vmatpush2.msra.mxu0 0.0
      %976 = vmatprep.subr.mxu0 0.0
      %977 = vmatpush2.msra.mxu0 0.0
      %978 = vmatprep.subr.mxu0 0.0
      %979 = vmatpush2.msra.mxu0 0.0
      %980 = vmatprep.subr.mxu0 0.0
      %981 = vmatpush2.msra.mxu0 0.0
      %982 = vmatprep.subr.mxu0 0.0
      %983 = vmatpush2.msra.mxu0 0.0
      %984 = vmatprep.subr.mxu0 0.0
      %985 = vmatpush2.msra.mxu0 0.0
      %986 = vmatprep.subr.mxu0 0.0
      %987 = vmatpush2.msra.mxu0 0.0
      %988 = vmatprep.subr.mxu0 0.0
      %989 = vmatpush2.msra.mxu0 0.0
      %990 = vmatprep.subr.mxu0 0.0
      %991 = vmatpush2.msra.mxu0 0.0
      %992 = vmatprep.mubr.f32.mxu0 0.0
      %993 = vmatmul.mubr.f32.gmra.mxu0 %v412
      %v994 = vpop.f32.mrf.mxu0
      %v995 = vadd.f32 0.0, %v994
      %v996 = vpop.f32.mrf.mxu0
      %997 = vdwg.mxu0
      %998 = vst [vmem:[%s170] sm:$0xff] %v484
      %999 = vst [vmem:[%s170 + $0x8] sm:$0xff] %v557
      %1000 = vst [vmem:[%s170 + $0x10] sm:$0xff] %v630
      %1001 = vst [vmem:[%s170 + $0x18] sm:$0xff] %v703
      %1002 = vst [vmem:[%s170 + $0x20] sm:$0xff] %v776
      %1003 = vst [vmem:[%s170 + $0x28] sm:$0xff] %v849
      %1004 = vst [vmem:[%s170 + $0x30] sm:$0xff] %v922
      %1005 = vst [vmem:[%s170 + $0x38] sm:$0xff] %v995
      %p1006 = scmp.lt.s32.totalorder %s14, 1
      %s1007 = scalar_select %p1006, %s14, 1
      %s1008 = smul.addr %s1007, 8
      %s1009 = smul.addr %s1008, 8
      %s1010 = scalar_lea.vmem %s3, %s1009
      // Predicated region
      $region33: #{upsample16_forward.6} parent=31 // pred_check
        %p1011 = pneg %p100
      $region34: #{upsample16_forward.6} parent=31 // pred_check_branch
        %1013 = sbr.rel (%p1011) target = $region36
      $region35: #{upsample16_forward.6} parent=31 // pred_region
        _
      $region36: #{upsample16_forward.6} parent=31 // pred_fallthru
        _
    $region32: #{upsample16_forward.6} parent=5 // pred_fallthru
      _
    %p1014 = scmp.le.s32.totalorder 2, %s9
    // Predicated region
    $region37: #{upsample16_forward.6} parent=5 // pred_check
      %p1015 = pneg %p1014
    $region38: #{upsample16_forward.6} parent=5 // pred_check_branch
      %1017 = sbr.rel (%p1015) target = $region40
    $region39: #{upsample16_forward.6} parent=5 // pred_region
      %s1018 = ssub.s32 %s9, 2
      // Predicated region
      $region41: #{upsample16_forward.6} parent=39 // pred_check
        %p1019 = pneg %p106
      $region42: #{upsample16_forward.6} parent=39 // pred_check_branch
        %1021 = sbr.rel (%p1019) target = $region44
      $region43: #{upsample16_forward.6} parent=39 // pred_region
        %p1022 = scmp.lt.s32.totalorder %s15, 1
        %s1023 = scalar_select %p1022, %s15, 1
        %s1024 = smul.addr %s1023, 8
        %s1025 = smul.addr %s1024, 8
        %s1026 = scalar_lea.vmem %s3, %s1025
      $region44: #{upsample16_forward.6} parent=39 // pred_fallthru
        _
    $region40: #{upsample16_forward.6} parent=5 // pred_fallthru
      _
  $region6: #{upsample16_forward.6} parent=0 // loop_footer
    %s13 = sadd.s32 1, %s9
  $region7: #{upsample16_forward.6} parent=0 // loop_footer_branch
    %8 = sbr.rel target = $region3
  $region8: #{upsample16_forward.6} parent=0 // loop_exit
    _

// kernel: upsample16_forward.7
$region0: #{upsample16_forward.7}
  #allocation0 [shape = 'u32[]', space=smem, size = 0x4, offset = 0x4, fixed_abs, tag = 'smem constant byte address 0x4 - core index']
  #allocation1 [shape = 'u32[144,128]{1,0:T(1,128)}', space=vmem, size = 0x12000, scoped, tag = 'internal scratch']
  %s0 = inlined_call_operand.vmem [shape: f32[128,128], index: 0, kind: input, shape index: {}]
  %s1 = inlined_call_operand.vmem [shape: f32[128,128], index: 1, kind: input, shape index: {}]
  %s2 = inlined_call_operand.vmem [shape: bf16[128,256], index: 2, kind: input, shape index: {}]
  %s3 = inlined_call_operand.vmem [shape: bf16[128,256], index: 3, kind: input, shape index: {}]
  %s4 = inlined_call_operand.vmem [shape: f32[1,256], index: 4, kind: input, shape index: {}]
  %s5 = inlined_call_operand.vmem [shape: f32[1,256], index: 5, kind: input, shape index: {}]
  %s6 = inlined_call_operand.vmem [shape: f32[1,128], index: 6, kind: input, shape index: {}]
  %s7 = inlined_call_operand.vmem [shape: f32[1,128], index: 7, kind: input, shape index: {}]
  %s8 = inlined_call_operand.vmem [shape: f32[1,128], index: 8, kind: input, shape index: {}]
  %s9 = inlined_call_operand.vmem [shape: f32[1,128], index: 9, kind: input, shape index: {}]
  %s10 = inlined_call_operand.vmem [shape: bf16[128,128], index: 10, kind: input, shape index: {}]
  %s11 = inlined_call_operand.vmem [shape: bf16[128,128], index: 11, kind: input, shape index: {}]
  %s12 = inlined_call_operand.vmem [shape: f32[128,128], index: 12, kind: output, shape index: {0}]
  %s13 = inlined_call_operand.vmem [shape: f32[128,2], index: 13, kind: output, shape index: {1}]
  %14 = xla_tuple %s12, %s13
  %s15 = sld [smem:[#allocation0]]
  $region66: #{upsample16_forward.7} parent=0
    _
  %s17 = ssub.s32 1, %s15
  %s18 = scalar_select 0, %s17, %s15
  // Predicated region
  $region2: #{upsample16_forward.7} parent=0 // pred_check
    _
  $region3: #{upsample16_forward.7} parent=0 // pred_check_branch
    %20 = sbr.rel (0) target = $region5
  $region4: #{upsample16_forward.7} parent=0 // pred_region
    _
  $region5: #{upsample16_forward.7} parent=0 // pred_fallthru
    _
  // Predicated region
  $region6: #{upsample16_forward.7} parent=0 // pred_check
    _
  $region7: #{upsample16_forward.7} parent=0 // pred_check_branch
    %22 = sbr.rel (0) target = $region9
  $region8: #{upsample16_forward.7} parent=0 // pred_region
    _
  $region9: #{upsample16_forward.7} parent=0 // pred_fallthru
    _
  // Predicated region
  $region10: #{upsample16_forward.7} parent=0 // pred_check
    _
  $region11: #{upsample16_forward.7} parent=0 // pred_check_branch
    %24 = sbr.rel (0) target = $region13
  $region12: #{upsample16_forward.7} parent=0 // pred_region
    _
  $region13: #{upsample16_forward.7} parent=0 // pred_fallthru
    _
  // Predicated region
  $region14: #{upsample16_forward.7} parent=0 // pred_check
    _
  $region15: #{upsample16_forward.7} parent=0 // pred_check_branch
    %26 = sbr.rel (0) target = $region17
  $region16: #{upsample16_forward.7} parent=0 // pred_region
    _
  $region17: #{upsample16_forward.7} parent=0 // pred_fallthru
    _
  // Predicated region
  $region18: #{upsample16_forward.7} parent=0 // pred_check
    _
  $region19: #{upsample16_forward.7} parent=0 // pred_check_branch
    %28 = sbr.rel (0) target = $region21
  $region20: #{upsample16_forward.7} parent=0 // pred_region
    _
  $region21: #{upsample16_forward.7} parent=0 // pred_fallthru
    _
  // Predicated region
  $region22: #{upsample16_forward.7} parent=0 // pred_check
    _
  $region23: #{upsample16_forward.7} parent=0 // pred_check_branch
    %30 = sbr.rel (0) target = $region25
  $region24: #{upsample16_forward.7} parent=0 // pred_region
    _
  $region25: #{upsample16_forward.7} parent=0 // pred_fallthru
    _
  // Predicated region
  $region26: #{upsample16_forward.7} parent=0 // pred_check
    _
  $region27: #{upsample16_forward.7} parent=0 // pred_check_branch
    %32 = sbr.rel (0) target = $region29
  $region28: #{upsample16_forward.7} parent=0 // pred_region
    _
  $region29: #{upsample16_forward.7} parent=0 // pred_fallthru
    _
  // Predicated region
  $region30: #{upsample16_forward.7} parent=0 // pred_check
    _
  $region31: #{upsample16_forward.7} parent=0 // pred_check_branch
    %34 = sbr.rel (0) target = $region33
  $region32: #{upsample16_forward.7} parent=0 // pred_region
    _
  $region33: #{upsample16_forward.7} parent=0 // pred_fallthru
    _
  // Predicated region
  $region34: #{upsample16_forward.7} parent=0 // pred_check
    _
  $region35: #{upsample16_forward.7} parent=0 // pred_check_branch
    %36 = sbr.rel (0) target = $region37
  $region36: #{upsample16_forward.7} parent=0 // pred_region
    _
  $region37: #{upsample16_forward.7} parent=0 // pred_fallthru
    _
  // Predicated region
  $region38: #{upsample16_forward.7} parent=0 // pred_check
    _
  $region39: #{upsample16_forward.7} parent=0 // pred_check_branch
    %38 = sbr.rel (0) target = $region41
  $region40: #{upsample16_forward.7} parent=0 // pred_region
    _
  $region41: #{upsample16_forward.7} parent=0 // pred_fallthru
    _
  // Predicated region
  $region42: #{upsample16_forward.7} parent=0 // pred_check
    _
  $region43: #{upsample16_forward.7} parent=0 // pred_check_branch
    %40 = sbr.rel (0) target = $region45
  $region44: #{upsample16_forward.7} parent=0 // pred_region
    _
  $region45: #{upsample16_forward.7} parent=0 // pred_fallthru
    _
  // Predicated region
  $region46: #{upsample16_forward.7} parent=0 // pred_check
    _
  $region47: #{upsample16_forward.7} parent=0 // pred_check_branch
    %42 = sbr.rel (0) target = $region49
  $region48: #{upsample16_forward.7} parent=0 // pred_region
    _
  $region49: #{upsample16_forward.7} parent=0 // pred_fallthru
    _
  %v44 = vld [vmem:[%s0] sm:$0xff]
  %v45 = vld [vmem:[%s0 + $0x8] sm:$0xff]
  %v46 = vld [vmem:[%s0 + $0x10] sm:$0xff]
  %v47 = vld [vmem:[%s0 + $0x18] sm:$0xff]
  %v48 = vld [vmem:[%s0 + $0x20] sm:$0xff]
  %v49 = vld [vmem:[%s0 + $0x28] sm:$0xff]
  %v50 = vld [vmem:[%s0 + $0x30] sm:$0xff]
  %v51 = vld [vmem:[%s0 + $0x38] sm:$0xff]
  %v52 = vld [vmem:[%s0 + $0x40] sm:$0xff]
  %v53 = vld [vmem:[%s0 + $0x48] sm:$0xff]
  %v54 = vld [vmem:[%s0 + $0x50] sm:$0xff]
  %v55 = vld [vmem:[%s0 + $0x58] sm:$0xff]
  %v56 = vld [vmem:[%s0 + $0x60] sm:$0xff]
  %v57 = vld [vmem:[%s0 + $0x68] sm:$0xff]
  %v58 = vld [vmem:[%s0 + $0x70] sm:$0xff]
  %v59 = vld [vmem:[%s0 + $0x78] sm:$0xff]
  %v60 = vld [vmem:[%s1] sm:$0xff]
  %v61 = vld [vmem:[%s1 + $0x8] sm:$0xff]
  %v62 = vld [vmem:[%s1 + $0x10] sm:$0xff]
  %v63 = vld [vmem:[%s1 + $0x18] sm:$0xff]
  %v64 = vld [vmem:[%s1 + $0x20] sm:$0xff]
  %v65 = vld [vmem:[%s1 + $0x28] sm:$0xff]
  %v66 = vld [vmem:[%s1 + $0x30] sm:$0xff]
  %v67 = vld [vmem:[%s1 + $0x38] sm:$0xff]
  %v68 = vld [vmem:[%s1 + $0x40] sm:$0xff]
  %v69 = vld [vmem:[%s1 + $0x48] sm:$0xff]
  %v70 = vld [vmem:[%s1 + $0x50] sm:$0xff]
  %v71 = vld [vmem:[%s1 + $0x58] sm:$0xff]
  %v72 = vld [vmem:[%s1 + $0x60] sm:$0xff]
  %v73 = vld [vmem:[%s1 + $0x68] sm:$0xff]
  %v74 = vld [vmem:[%s1 + $0x70] sm:$0xff]
  %v75 = vld [vmem:[%s1 + $0x78] sm:$0xff]
  %v76 = vpack.c.bf16 %v45, %v44
  %v77 = vpack.c.bf16 %v47, %v46
  %v78 = vpack.c.bf16 %v49, %v48
  %v79 = vpack.c.bf16 %v51, %v50
  %v80 = vpack.c.bf16 %v53, %v52
  %v81 = vpack.c.bf16 %v55, %v54
  %v82 = vpack.c.bf16 %v57, %v56
  %v83 = vpack.c.bf16 %v59, %v58
  %v84 = vpack.c.bf16 %v61, %v60
  %v85 = vpack.c.bf16 %v63, %v62
  %v86 = vpack.c.bf16 %v65, %v64
  %v87 = vpack.c.bf16 %v67, %v66
  %v88 = vpack.c.bf16 %v69, %v68
  %v89 = vpack.c.bf16 %v71, %v70
  %v90 = vpack.c.bf16 %v73, %v72
  %v91 = vpack.c.bf16 %v75, %v74
  %v92 = vld [vmem:[%s2] sm:$0xff]
  %v93 = vld [vmem:[%s2 + $0x8] sm:$0xff]
  %v94 = vld [vmem:[%s2 + $0x10] sm:$0xff]
  %v95 = vld [vmem:[%s2 + $0x18] sm:$0xff]
  %v96 = vld [vmem:[%s2 + $0x20] sm:$0xff]
  %v97 = vld [vmem:[%s2 + $0x28] sm:$0xff]
  %v98 = vld [vmem:[%s2 + $0x30] sm:$0xff]
  %v99 = vld [vmem:[%s2 + $0x38] sm:$0xff]
  %v100 = vld [vmem:[%s2 + $0x40] sm:$0xff]
  %v101 = vld [vmem:[%s2 + $0x48] sm:$0xff]
  %v102 = vld [vmem:[%s2 + $0x50] sm:$0xff]
  %v103 = vld [vmem:[%s2 + $0x58] sm:$0xff]
  %v104 = vld [vmem:[%s2 + $0x60] sm:$0xff]
  %v105 = vld [vmem:[%s2 + $0x68] sm:$0xff]
  %v106 = vld [vmem:[%s2 + $0x70] sm:$0xff]
  %v107 = vld [vmem:[%s2 + $0x78] sm:$0xff]
  %v108 = vld [vmem:[%s3] sm:$0xff]
  %v109 = vld [vmem:[%s3 + $0x8] sm:$0xff]
  %v110 = vld [vmem:[%s3 + $0x10] sm:$0xff]
  %v111 = vld [vmem:[%s3 + $0x18] sm:$0xff]
  %v112 = vld [vmem:[%s3 + $0x20] sm:$0xff]
  %v113 = vld [vmem:[%s3 + $0x28] sm:$0xff]
  %v114 = vld [vmem:[%s3 + $0x30] sm:$0xff]
  %v115 = vld [vmem:[%s3 + $0x38] sm:$0xff]
  %v116 = vld [vmem:[%s3 + $0x40] sm:$0xff]
  %v117 = vld [vmem:[%s3 + $0x48] sm:$0xff]
  %v118 = vld [vmem:[%s3 + $0x50] sm:$0xff]
  %v119 = vld [vmem:[%s3 + $0x58] sm:$0xff]
  %v120 = vld [vmem:[%s3 + $0x60] sm:$0xff]
  %v121 = vld [vmem:[%s3 + $0x68] sm:$0xff]
  %v122 = vld [vmem:[%s3 + $0x70] sm:$0xff]
  %v123 = vld [vmem:[%s3 + $0x78] sm:$0xff]
  %v140 = vunpack.c.l.b16 %v108
  %v141 = vunpack.c.h.b16 %v108
  %v142 = vunpack.c.l.b16 %v109
  %v143 = vunpack.c.h.b16 %v109
  %v144 = vunpack.c.l.b16 %v110
  %v145 = vunpack.c.h.b16 %v110
  %v146 = vunpack.c.l.b16 %v111
  %v147 = vunpack.c.h.b16 %v111
  %v148 = vunpack.c.l.b16 %v112
  %v149 = vunpack.c.h.b16 %v112
  %v150 = vunpack.c.l.b16 %v113
  %v151 = vunpack.c.h.b16 %v113
  %v152 = vunpack.c.l.b16 %v114
  %v153 = vunpack.c.h.b16 %v114
  %v154 = vunpack.c.l.b16 %v115
  %v155 = vunpack.c.h.b16 %v115
  %v156 = vunpack.c.l.b16 %v116
  %v157 = vunpack.c.h.b16 %v116
  %v158 = vunpack.c.l.b16 %v117
  %v159 = vunpack.c.h.b16 %v117
  %v160 = vunpack.c.l.b16 %v118
  %v161 = vunpack.c.h.b16 %v118
  %v162 = vunpack.c.l.b16 %v119
  %v163 = vunpack.c.h.b16 %v119
  %v164 = vunpack.c.l.b16 %v120
  %v165 = vunpack.c.h.b16 %v120
  %v166 = vunpack.c.l.b16 %v121
  %v167 = vunpack.c.h.b16 %v121
  %v168 = vunpack.c.l.b16 %v122
  %v169 = vunpack.c.h.b16 %v122
  %v170 = vunpack.c.l.b16 %v123
  %v171 = vunpack.c.h.b16 %v123
  %v172 = vpack.c.b16 %v142, %v140
  %v173 = vpack.c.b16 %v143, %v141
  %v174 = vpack.c.b16 %v146, %v144
  %v175 = vpack.c.b16 %v147, %v145
  %v176 = vpack.c.b16 %v150, %v148
  %v177 = vpack.c.b16 %v151, %v149
  %v178 = vpack.c.b16 %v154, %v152
  %v179 = vpack.c.b16 %v155, %v153
  %v180 = vpack.c.b16 %v158, %v156
  %v181 = vpack.c.b16 %v159, %v157
  %v182 = vpack.c.b16 %v162, %v160
  %v183 = vpack.c.b16 %v163, %v161
  %v184 = vpack.c.b16 %v166, %v164
  %v185 = vpack.c.b16 %v167, %v165
  %v186 = vpack.c.b16 %v170, %v168
  %v187 = vpack.c.b16 %v171, %v169
  %204 = vmatprep.subr.bf16.mxu0 %v187
  %205 = vmatpush1.bf16.msra.mxu0 %v186
  %206 = vmatprep.subr.bf16.mxu0 %v185
  %207 = vmatpush1.bf16.msra.mxu0 %v184
  %208 = vmatprep.subr.bf16.mxu0 %v183
  %209 = vmatpush1.bf16.msra.mxu0 %v182
  %210 = vmatprep.subr.bf16.mxu0 %v181
  %211 = vmatpush1.bf16.msra.mxu0 %v180
  %212 = vmatprep.subr.bf16.mxu0 %v179
  %213 = vmatpush1.bf16.msra.mxu0 %v178
  %214 = vmatprep.subr.bf16.mxu0 %v177
  %215 = vmatpush1.bf16.msra.mxu0 %v176
  %216 = vmatprep.subr.bf16.mxu0 %v175
  %217 = vmatpush1.bf16.msra.mxu0 %v174
  %218 = vmatprep.subr.bf16.mxu0 %v173
  %219 = vmatpush1.bf16.msra.mxu0 %v172
  %220 = vmatprep.subr.bf16.mxu0 0
  %221 = vmatpush2.bf16.msra.mxu0 0
  %222 = vmatprep.subr.bf16.mxu0 0
  %223 = vmatpush2.bf16.msra.mxu0 0
  %224 = vmatprep.subr.bf16.mxu0 0
  %225 = vmatpush2.bf16.msra.mxu0 0
  %226 = vmatprep.subr.bf16.mxu0 0
  %227 = vmatpush2.bf16.msra.mxu0 0
  %228 = vmatprep.subr.bf16.mxu0 0
  %229 = vmatpush2.bf16.msra.mxu0 0
  %230 = vmatprep.subr.bf16.mxu0 0
  %231 = vmatpush2.bf16.msra.mxu0 0
  %232 = vmatprep.subr.bf16.mxu0 0
  %233 = vmatpush2.bf16.msra.mxu0 0
  %234 = vmatprep.subr.bf16.mxu0 0
  %235 = vmatpush2.bf16.msra.mxu0 0
  %236 = vmatprep.mubr.bf16.mxu0 0
  %237 = vmatmul.mubr.bf16.gmra.mxu0 %v84
  %v238 = vpop.f32.mrf.mxu0
  %v239 = vadd.f32 0.0, %v238
  %v240 = vpop.f32.mrf.mxu0
  %v241 = vadd.f32 0.0, %v240
  %v242 = vpop.f32.mrf.mxu0
  %v243 = vadd.f32 0.0, %v242
  %v244 = vpop.f32.mrf.mxu0
  %v245 = vadd.f32 0.0, %v244
  %246 = vmatprep.mubr.bf16.mxu0 0
  %247 = vmatmul.mubr.bf16.gmra.mxu0 %v85
  %v248 = vpop.f32.mrf.mxu0
  %v249 = vadd.f32 0.0, %v248
  %v250 = vpop.f32.mrf.mxu0
  %v251 = vadd.f32 0.0, %v250
  %v252 = vpop.f32.mrf.mxu0
  %v253 = vadd.f32 0.0, %v252
  %v254 = vpop.f32.mrf.mxu0
  %v255 = vadd.f32 0.0, %v254
  %256 = vmatprep.mubr.bf16.mxu0 0
  %257 = vmatmul.mubr.bf16.gmra.mxu0 %v86
  %v258 = vpop.f32.mrf.mxu0
  %v259 = vadd.f32 0.0, %v258
  %v260 = vpop.f32.mrf.mxu0
  %v261 = vadd.f32 0.0, %v260
  %v262 = vpop.f32.mrf.mxu0
  %v263 = vadd.f32 0.0, %v262
  %v264 = vpop.f32.mrf.mxu0
  %v265 = vadd.f32 0.0, %v264
  %266 = vmatprep.mubr.bf16.mxu0 0
  %267 = vmatmul.mubr.bf16.gmra.mxu0 %v87
  %v268 = vpop.f32.mrf.mxu0
  %v269 = vadd.f32 0.0, %v268
  %v270 = vpop.f32.mrf.mxu0
  %v271 = vadd.f32 0.0, %v270
  %v272 = vpop.f32.mrf.mxu0
  %v273 = vadd.f32 0.0, %v272
  %v274 = vpop.f32.mrf.mxu0
  %v275 = vadd.f32 0.0, %v274
  %276 = vmatprep.mubr.bf16.mxu0 0
  %277 = vmatmul.mubr.bf16.gmra.mxu0 %v88
  %v278 = vpop.f32.mrf.mxu0
  %v279 = vadd.f32 0.0, %v278
  %v280 = vpop.f32.mrf.mxu0
  %v281 = vadd.f32 0.0, %v280
  %v282 = vpop.f32.mrf.mxu0
  %v283 = vadd.f32 0.0, %v282
  %v284 = vpop.f32.mrf.mxu0
  %v285 = vadd.f32 0.0, %v284
  %286 = vmatprep.mubr.bf16.mxu0 0
  %287 = vmatmul.mubr.bf16.gmra.mxu0 %v89
  %v288 = vpop.f32.mrf.mxu0
  %v289 = vadd.f32 0.0, %v288
  %v290 = vpop.f32.mrf.mxu0
  %v291 = vadd.f32 0.0, %v290
  %v292 = vpop.f32.mrf.mxu0
  %v293 = vadd.f32 0.0, %v292
  %v294 = vpop.f32.mrf.mxu0
  %v295 = vadd.f32 0.0, %v294
  %296 = vmatprep.mubr.bf16.mxu0 0
  %297 = vmatmul.mubr.bf16.gmra.mxu0 %v90
  %v298 = vpop.f32.mrf.mxu0
  %v299 = vadd.f32 0.0, %v298
  %v300 = vpop.f32.mrf.mxu0
  %v301 = vadd.f32 0.0, %v300
  %v302 = vpop.f32.mrf.mxu0
  %v303 = vadd.f32 0.0, %v302
  %v304 = vpop.f32.mrf.mxu0
  %v305 = vadd.f32 0.0, %v304
  %306 = vmatprep.mubr.bf16.mxu0 0
  %307 = vmatmul.mubr.bf16.gmra.mxu0 %v91
  %v308 = vpop.f32.mrf.mxu0
  %v309 = vadd.f32 0.0, %v308
  %v310 = vpop.f32.mrf.mxu0
  %v311 = vadd.f32 0.0, %v310
  %v312 = vpop.f32.mrf.mxu0
  %v313 = vadd.f32 0.0, %v312
  %v314 = vpop.f32.mrf.mxu0
  %v315 = vadd.f32 0.0, %v314
  %316 = vdwg.mxu0
  %v333 = vunpack.c.l.b16 %v92
  %v334 = vunpack.c.h.b16 %v92
  %v335 = vunpack.c.l.b16 %v93
  %v336 = vunpack.c.h.b16 %v93
  %v337 = vunpack.c.l.b16 %v94
  %v338 = vunpack.c.h.b16 %v94
  %v339 = vunpack.c.l.b16 %v95
  %v340 = vunpack.c.h.b16 %v95
  %v341 = vunpack.c.l.b16 %v96
  %v342 = vunpack.c.h.b16 %v96
  %v343 = vunpack.c.l.b16 %v97
  %v344 = vunpack.c.h.b16 %v97
  %v345 = vunpack.c.l.b16 %v98
  %v346 = vunpack.c.h.b16 %v98
  %v347 = vunpack.c.l.b16 %v99
  %v348 = vunpack.c.h.b16 %v99
  %v349 = vunpack.c.l.b16 %v100
  %v350 = vunpack.c.h.b16 %v100
  %v351 = vunpack.c.l.b16 %v101
  %v352 = vunpack.c.h.b16 %v101
  %v353 = vunpack.c.l.b16 %v102
  %v354 = vunpack.c.h.b16 %v102
  %v355 = vunpack.c.l.b16 %v103
  %v356 = vunpack.c.h.b16 %v103
  %v357 = vunpack.c.l.b16 %v104
  %v358 = vunpack.c.h.b16 %v104
  %v359 = vunpack.c.l.b16 %v105
  %v360 = vunpack.c.h.b16 %v105
  %v361 = vunpack.c.l.b16 %v106
  %v362 = vunpack.c.h.b16 %v106
  %v363 = vunpack.c.l.b16 %v107
  %v364 = vunpack.c.h.b16 %v107
  %v365 = vpack.c.b16 %v335, %v333
  %v366 = vpack.c.b16 %v336, %v334
  %v367 = vpack.c.b16 %v339, %v337
  %v368 = vpack.c.b16 %v340, %v338
  %v369 = vpack.c.b16 %v343, %v341
  %v370 = vpack.c.b16 %v344, %v342
  %v371 = vpack.c.b16 %v347, %v345
  %v372 = vpack.c.b16 %v348, %v346
  %v373 = vpack.c.b16 %v351, %v349
  %v374 = vpack.c.b16 %v352, %v350
  %v375 = vpack.c.b16 %v355, %v353
  %v376 = vpack.c.b16 %v356, %v354
  %v377 = vpack.c.b16 %v359, %v357
  %v378 = vpack.c.b16 %v360, %v358
  %v379 = vpack.c.b16 %v363, %v361
  %v380 = vpack.c.b16 %v364, %v362
  %397 = vmatprep.subr.bf16.mxu0 %v380
  %398 = vmatpush1.bf16.msra.mxu0 %v379
  %399 = vmatprep.subr.bf16.mxu0 %v378
  %400 = vmatpush1.bf16.msra.mxu0 %v377
  %401 = vmatprep.subr.bf16.mxu0 %v376
  %402 = vmatpush1.bf16.msra.mxu0 %v375
  %403 = vmatprep.subr.bf16.mxu0 %v374
  %404 = vmatpush1.bf16.msra.mxu0 %v373
  %405 = vmatprep.subr.bf16.mxu0 %v372
  %406 = vmatpush1.bf16.msra.mxu0 %v371
  %407 = vmatprep.subr.bf16.mxu0 %v370
  %408 = vmatpush1.bf16.msra.mxu0 %v369
  %409 = vmatprep.subr.bf16.mxu0 %v368
  %410 = vmatpush1.bf16.msra.mxu0 %v367
  %411 = vmatprep.subr.bf16.mxu0 %v366
  %412 = vmatpush1.bf16.msra.mxu0 %v365
  %413 = vmatprep.subr.bf16.mxu0 0
  %414 = vmatpush2.bf16.msra.mxu0 0
  %415 = vmatprep.subr.bf16.mxu0 0
  %416 = vmatpush2.bf16.msra.mxu0 0
  %417 = vmatprep.subr.bf16.mxu0 0
  %418 = vmatpush2.bf16.msra.mxu0 0
  %419 = vmatprep.subr.bf16.mxu0 0
  %420 = vmatpush2.bf16.msra.mxu0 0
  %421 = vmatprep.subr.bf16.mxu0 0
  %422 = vmatpush2.bf16.msra.mxu0 0
  %423 = vmatprep.subr.bf16.mxu0 0
  %424 = vmatpush2.bf16.msra.mxu0 0
  %425 = vmatprep.subr.bf16.mxu0 0
  %426 = vmatpush2.bf16.msra.mxu0 0
  %427 = vmatprep.subr.bf16.mxu0 0
  %428 = vmatpush2.bf16.msra.mxu0 0
  %429 = vmatprep.mubr.bf16.mxu0 0
  %430 = vmatmul.mubr.bf16.gmra.mxu0 %v76
  %v431 = vpop.f32.mrf.mxu0
  %v432 = vadd.f32 %v239, %v431
  %v433 = vpop.f32.mrf.mxu0
  %v434 = vadd.f32 %v241, %v433
  %v435 = vpop.f32.mrf.mxu0
  %v436 = vadd.f32 %v243, %v435
  %v437 = vpop.f32.mrf.mxu0
  %v438 = vadd.f32 %v245, %v437
  %439 = vmatprep.mubr.bf16.mxu0 0
  %440 = vmatmul.mubr.bf16.gmra.mxu0 %v77
  %v441 = vpop.f32.mrf.mxu0
  %v442 = vadd.f32 %v249, %v441
  %v443 = vpop.f32.mrf.mxu0
  %v444 = vadd.f32 %v251, %v443
  %v445 = vpop.f32.mrf.mxu0
  %v446 = vadd.f32 %v253, %v445
  %v447 = vpop.f32.mrf.mxu0
  %v448 = vadd.f32 %v255, %v447
  %449 = vmatprep.mubr.bf16.mxu0 0
  %450 = vmatmul.mubr.bf16.gmra.mxu0 %v78
  %v451 = vpop.f32.mrf.mxu0
  %v452 = vadd.f32 %v259, %v451
  %v453 = vpop.f32.mrf.mxu0
  %v454 = vadd.f32 %v261, %v453
  %v455 = vpop.f32.mrf.mxu0
  %v456 = vadd.f32 %v263, %v455
  %v457 = vpop.f32.mrf.mxu0
  %v458 = vadd.f32 %v265, %v457
  %459 = vmatprep.mubr.bf16.mxu0 0
  %460 = vmatmul.mubr.bf16.gmra.mxu0 %v79
  %v461 = vpop.f32.mrf.mxu0
  %v462 = vadd.f32 %v269, %v461
  %v463 = vpop.f32.mrf.mxu0
  %v464 = vadd.f32 %v271, %v463
  %v465 = vpop.f32.mrf.mxu0
  %v466 = vadd.f32 %v273, %v465
  %v467 = vpop.f32.mrf.mxu0
  %v468 = vadd.f32 %v275, %v467
  %469 = vmatprep.mubr.bf16.mxu0 0
  %470 = vmatmul.mubr.bf16.gmra.mxu0 %v80
  %v471 = vpop.f32.mrf.mxu0
  %v472 = vadd.f32 %v279, %v471
  %v473 = vpop.f32.mrf.mxu0
  %v474 = vadd.f32 %v281, %v473
  %v475 = vpop.f32.mrf.mxu0
  %v476 = vadd.f32 %v283, %v475
  %v477 = vpop.f32.mrf.mxu0
  %v478 = vadd.f32 %v285, %v477
  %479 = vmatprep.mubr.bf16.mxu0 0
  %480 = vmatmul.mubr.bf16.gmra.mxu0 %v81
  %v481 = vpop.f32.mrf.mxu0
  %v482 = vadd.f32 %v289, %v481
  %v483 = vpop.f32.mrf.mxu0
  %v484 = vadd.f32 %v291, %v483
  %v485 = vpop.f32.mrf.mxu0
  %v486 = vadd.f32 %v293, %v485
  %v487 = vpop.f32.mrf.mxu0
  %v488 = vadd.f32 %v295, %v487
  %489 = vmatprep.mubr.bf16.mxu0 0
  %490 = vmatmul.mubr.bf16.gmra.mxu0 %v82
  %v491 = vpop.f32.mrf.mxu0
  %v492 = vadd.f32 %v299, %v491
  %v493 = vpop.f32.mrf.mxu0
  %v494 = vadd.f32 %v301, %v493
  %v495 = vpop.f32.mrf.mxu0
  %v496 = vadd.f32 %v303, %v495
  %v497 = vpop.f32.mrf.mxu0
  %v498 = vadd.f32 %v305, %v497
  %499 = vmatprep.mubr.bf16.mxu0 0
  %500 = vmatmul.mubr.bf16.gmra.mxu0 %v83
  %v501 = vpop.f32.mrf.mxu0
  %v502 = vadd.f32 %v309, %v501
  %v503 = vpop.f32.mrf.mxu0
  %v504 = vadd.f32 %v311, %v503
  %v505 = vpop.f32.mrf.mxu0
  %v506 = vadd.f32 %v313, %v505
  %v507 = vpop.f32.mrf.mxu0
  %v508 = vadd.f32 %v315, %v507
  %509 = vdwg.mxu0
  %v510 = vld [vmem:[%s4] sm:$0x3]
  %v512 = vlaneseq
  %v513 = vshrl.u32 %v512, 7
  %v514 = vsub.s32 0, %v513
  %v515 = vrot.slane %v510, %v514
  %v516 = vlaneseq
  %v517 = vshrl.u32 %v516, 7
  %v518 = vsub.s32 1, %v517
  %v519 = vrot.slane %v510, %v518
  %v522 = vmul.f32 %v432, %v515
  %v523 = vmul.f32 %v434, %v519
  %v524 = vmul.f32 %v436, %v515
  %v525 = vmul.f32 %v438, %v519
  %v526 = vmul.f32 %v442, %v515
  %v527 = vmul.f32 %v444, %v519
  %v528 = vmul.f32 %v446, %v515
  %v529 = vmul.f32 %v448, %v519
  %v530 = vmul.f32 %v452, %v515
  %v531 = vmul.f32 %v454, %v519
  %v532 = vmul.f32 %v456, %v515
  %v533 = vmul.f32 %v458, %v519
  %v534 = vmul.f32 %v462, %v515
  %v535 = vmul.f32 %v464, %v519
  %v536 = vmul.f32 %v466, %v515
  %v537 = vmul.f32 %v468, %v519
  %v538 = vmul.f32 %v472, %v515
  %v539 = vmul.f32 %v474, %v519
  %v540 = vmul.f32 %v476, %v515
  %v541 = vmul.f32 %v478, %v519
  %v542 = vmul.f32 %v482, %v515
  %v543 = vmul.f32 %v484, %v519
  %v544 = vmul.f32 %v486, %v515
  %v545 = vmul.f32 %v488, %v519
  %v546 = vmul.f32 %v492, %v515
  %v547 = vmul.f32 %v494, %v519
  %v548 = vmul.f32 %v496, %v515
  %v549 = vmul.f32 %v498, %v519
  %v550 = vmul.f32 %v502, %v515
  %v551 = vmul.f32 %v504, %v519
  %v552 = vmul.f32 %v506, %v515
  %v553 = vmul.f32 %v508, %v519
  %v554 = vld [vmem:[%s5] sm:$0x3]
  %v556 = vlaneseq
  %v557 = vshrl.u32 %v556, 7
  %v558 = vsub.s32 0, %v557
  %v559 = vrot.slane %v554, %v558
  %v560 = vlaneseq
  %v561 = vshrl.u32 %v560, 7
  %v562 = vsub.s32 1, %v561
  %v563 = vrot.slane %v554, %v562
  %v566 = vadd.f32 %v522, %v559
  %v567 = vadd.f32 %v523, %v563
  %v568 = vadd.f32 %v524, %v559
  %v569 = vadd.f32 %v525, %v563
  %v570 = vadd.f32 %v526, %v559
  %v571 = vadd.f32 %v527, %v563
  %v572 = vadd.f32 %v528, %v559
  %v573 = vadd.f32 %v529, %v563
  %v574 = vadd.f32 %v530, %v559
  %v575 = vadd.f32 %v531, %v563
  %v576 = vadd.f32 %v532, %v559
  %v577 = vadd.f32 %v533, %v563
  %v578 = vadd.f32 %v534, %v559
  %v579 = vadd.f32 %v535, %v563
  %v580 = vadd.f32 %v536, %v559
  %v581 = vadd.f32 %v537, %v563
  %v582 = vadd.f32 %v538, %v559
  %v583 = vadd.f32 %v539, %v563
  %v584 = vadd.f32 %v540, %v559
  %v585 = vadd.f32 %v541, %v563
  %v586 = vadd.f32 %v542, %v559
  %v587 = vadd.f32 %v543, %v563
  %v588 = vadd.f32 %v544, %v559
  %v589 = vadd.f32 %v545, %v563
  %v590 = vadd.f32 %v546, %v559
  %v591 = vadd.f32 %v547, %v563
  %v592 = vadd.f32 %v548, %v559
  %v593 = vadd.f32 %v549, %v563
  %v594 = vadd.f32 %v550, %v559
  %v595 = vadd.f32 %v551, %v563
  %v596 = vadd.f32 %v552, %v559
  %v597 = vadd.f32 %v553, %v563
  %v598 = vmax.f32 %v566, 0.0
  %v599 = vmax.f32 %v567, 0.0
  %v600 = vmax.f32 %v568, 0.0
  %v601 = vmax.f32 %v569, 0.0
  %v602 = vmax.f32 %v570, 0.0
  %v603 = vmax.f32 %v571, 0.0
  %v604 = vmax.f32 %v572, 0.0
  %v605 = vmax.f32 %v573, 0.0
  %v606 = vmax.f32 %v574, 0.0
  %v607 = vmax.f32 %v575, 0.0
  %v608 = vmax.f32 %v576, 0.0
  %v609 = vmax.f32 %v577, 0.0
  %v610 = vmax.f32 %v578, 0.0
  %v611 = vmax.f32 %v579, 0.0
  %v612 = vmax.f32 %v580, 0.0
  %v613 = vmax.f32 %v581, 0.0
  %v614 = vmax.f32 %v582, 0.0
  %v615 = vmax.f32 %v583, 0.0
  %v616 = vmax.f32 %v584, 0.0
  %v617 = vmax.f32 %v585, 0.0
  %v618 = vmax.f32 %v586, 0.0
  %v619 = vmax.f32 %v587, 0.0
  %v620 = vmax.f32 %v588, 0.0
  %v621 = vmax.f32 %v589, 0.0
  %v622 = vmax.f32 %v590, 0.0
  %v623 = vmax.f32 %v591, 0.0
  %v624 = vmax.f32 %v592, 0.0
  %v625 = vmax.f32 %v593, 0.0
  %v626 = vmax.f32 %v594, 0.0
  %v627 = vmax.f32 %v595, 0.0
  %v628 = vmax.f32 %v596, 0.0
  %v629 = vmax.f32 %v597, 0.0
  %v630 = vmax.f32 %v598, %v599
  %631 = vmax.xlane.f32.xlu0 %v630
  %v632 = vpop.xlane.xlu0 %631
  %v633 = vmax.f32 %v600, %v601
  %634 = vmax.xlane.f32.xlu0 %v633
  %v635 = vpop.xlane.xlu0 %634
  %v636 = vmax.f32 %v602, %v603
  %637 = vmax.xlane.f32.xlu0 %v636
  %v638 = vpop.xlane.xlu0 %637
  %v639 = vmax.f32 %v604, %v605
  %640 = vmax.xlane.f32.xlu0 %v639
  %v641 = vpop.xlane.xlu0 %640
  %v642 = vmax.f32 %v606, %v607
  %643 = vmax.xlane.f32.xlu0 %v642
  %v644 = vpop.xlane.xlu0 %643
  %v645 = vmax.f32 %v608, %v609
  %646 = vmax.xlane.f32.xlu0 %v645
  %v647 = vpop.xlane.xlu0 %646
  %v648 = vmax.f32 %v610, %v611
  %649 = vmax.xlane.f32.xlu0 %v648
  %v650 = vpop.xlane.xlu0 %649
  %v651 = vmax.f32 %v612, %v613
  %652 = vmax.xlane.f32.xlu0 %v651
  %v653 = vpop.xlane.xlu0 %652
  %v654 = vmax.f32 %v614, %v615
  %655 = vmax.xlane.f32.xlu0 %v654
  %v656 = vpop.xlane.xlu0 %655
  %v657 = vmax.f32 %v616, %v617
  %658 = vmax.xlane.f32.xlu0 %v657
  %v659 = vpop.xlane.xlu0 %658
  %v660 = vmax.f32 %v618, %v619
  %661 = vmax.xlane.f32.xlu0 %v660
  %v662 = vpop.xlane.xlu0 %661
  %v663 = vmax.f32 %v620, %v621
  %664 = vmax.xlane.f32.xlu0 %v663
  %v665 = vpop.xlane.xlu0 %664
  %v666 = vmax.f32 %v622, %v623
  %667 = vmax.xlane.f32.xlu0 %v666
  %v668 = vpop.xlane.xlu0 %667
  %v669 = vmax.f32 %v624, %v625
  %670 = vmax.xlane.f32.xlu0 %v669
  %v671 = vpop.xlane.xlu0 %670
  %v672 = vmax.f32 %v626, %v627
  %673 = vmax.xlane.f32.xlu0 %v672
  %v674 = vpop.xlane.xlu0 %673
  %v675 = vmax.f32 %v628, %v629
  %676 = vmax.xlane.f32.xlu0 %v675
  %v677 = vpop.xlane.xlu0 %676
  %vm678 = vcmask 7168
  %679 = vst.msk [vmem:[%s13] sm:$0xff] %vm678, %v632
  %680 = vst.msk [vmem:[%s13 + $0x8] sm:$0xff] %vm678, %v635
  %681 = vst.msk [vmem:[%s13 + $0x10] sm:$0xff] %vm678, %v638
  %682 = vst.msk [vmem:[%s13 + $0x18] sm:$0xff] %vm678, %v641
  %683 = vst.msk [vmem:[%s13 + $0x20] sm:$0xff] %vm678, %v644
  %684 = vst.msk [vmem:[%s13 + $0x28] sm:$0xff] %vm678, %v647
  %685 = vst.msk [vmem:[%s13 + $0x30] sm:$0xff] %vm678, %v650
  %686 = vst.msk [vmem:[%s13 + $0x38] sm:$0xff] %vm678, %v653
  %687 = vst.msk [vmem:[%s13 + $0x40] sm:$0xff] %vm678, %v656
  %688 = vst.msk [vmem:[%s13 + $0x48] sm:$0xff] %vm678, %v659
  %689 = vst.msk [vmem:[%s13 + $0x50] sm:$0xff] %vm678, %v662
  %690 = vst.msk [vmem:[%s13 + $0x58] sm:$0xff] %vm678, %v665
  %691 = vst.msk [vmem:[%s13 + $0x60] sm:$0xff] %vm678, %v668
  %692 = vst.msk [vmem:[%s13 + $0x68] sm:$0xff] %vm678, %v671
  %693 = vst.msk [vmem:[%s13 + $0x70] sm:$0xff] %vm678, %v674
  %694 = vst.msk [vmem:[%s13 + $0x78] sm:$0xff] %vm678, %v677
  %v695 = vadd.f32 %v598, %v599
  %696 = vadd.xlane.f32.xlu0 %v695
  %v697 = vpop.xlane.xlu0 %696
  %v698 = vadd.f32 %v600, %v601
  %699 = vadd.xlane.f32.xlu0 %v698
  %v700 = vpop.xlane.xlu0 %699
  %v701 = vadd.f32 %v602, %v603
  %702 = vadd.xlane.f32.xlu0 %v701
  %v703 = vpop.xlane.xlu0 %702
  %v704 = vadd.f32 %v604, %v605
  %705 = vadd.xlane.f32.xlu0 %v704
  %v706 = vpop.xlane.xlu0 %705
  %v707 = vadd.f32 %v606, %v607
  %708 = vadd.xlane.f32.xlu0 %v707
  %v709 = vpop.xlane.xlu0 %708
  %v710 = vadd.f32 %v608, %v609
  %711 = vadd.xlane.f32.xlu0 %v710
  %v712 = vpop.xlane.xlu0 %711
  %v713 = vadd.f32 %v610, %v611
  %714 = vadd.xlane.f32.xlu0 %v713
  %v715 = vpop.xlane.xlu0 %714
  %v716 = vadd.f32 %v612, %v613
  %717 = vadd.xlane.f32.xlu0 %v716
  %v718 = vpop.xlane.xlu0 %717
  %v719 = vadd.f32 %v614, %v615
  %720 = vadd.xlane.f32.xlu0 %v719
  %v721 = vpop.xlane.xlu0 %720
  %v722 = vadd.f32 %v616, %v617
  %723 = vadd.xlane.f32.xlu0 %v722
  %v724 = vpop.xlane.xlu0 %723
  %v725 = vadd.f32 %v618, %v619
  %726 = vadd.xlane.f32.xlu0 %v725
  %v727 = vpop.xlane.xlu0 %726
  %v728 = vadd.f32 %v620, %v621
  %729 = vadd.xlane.f32.xlu0 %v728
  %v730 = vpop.xlane.xlu0 %729
  %v731 = vadd.f32 %v622, %v623
  %732 = vadd.xlane.f32.xlu0 %v731
  %v733 = vpop.xlane.xlu0 %732
  %v734 = vadd.f32 %v624, %v625
  %735 = vadd.xlane.f32.xlu0 %v734
  %v736 = vpop.xlane.xlu0 %735
  %v737 = vadd.f32 %v626, %v627
  %738 = vadd.xlane.f32.xlu0 %v737
  %v739 = vpop.xlane.xlu0 %738
  %v740 = vadd.f32 %v628, %v629
  %741 = vadd.xlane.f32.xlu0 %v740
  %v742 = vpop.xlane.xlu0 %741
  %v743 = vrcp.pop 256.0
  %v744 = vmul.f32 %v697, %v743
  %v745 = vmul.f32 %v700, %v743
  %v746 = vmul.f32 %v703, %v743
  %v747 = vmul.f32 %v706, %v743
  %v748 = vmul.f32 %v709, %v743
  %v749 = vmul.f32 %v712, %v743
  %v750 = vmul.f32 %v715, %v743
  %v751 = vmul.f32 %v718, %v743
  %v752 = vmul.f32 %v721, %v743
  %v753 = vmul.f32 %v724, %v743
  %v754 = vmul.f32 %v727, %v743
  %v755 = vmul.f32 %v730, %v743
  %v756 = vmul.f32 %v733, %v743
  %v757 = vmul.f32 %v736, %v743
  %v758 = vmul.f32 %v739, %v743
  %v759 = vmul.f32 %v742, %v743
  %vm760 = vcmask 15368
  %761 = vst.msk [vmem:[%s13] sm:$0xff] %vm760, %v744
  %762 = vst.msk [vmem:[%s13 + $0x8] sm:$0xff] %vm760, %v745
  %763 = vst.msk [vmem:[%s13 + $0x10] sm:$0xff] %vm760, %v746
  %764 = vst.msk [vmem:[%s13 + $0x18] sm:$0xff] %vm760, %v747
  %765 = vst.msk [vmem:[%s13 + $0x20] sm:$0xff] %vm760, %v748
  %766 = vst.msk [vmem:[%s13 + $0x28] sm:$0xff] %vm760, %v749
  %767 = vst.msk [vmem:[%s13 + $0x30] sm:$0xff] %vm760, %v750
  %768 = vst.msk [vmem:[%s13 + $0x38] sm:$0xff] %vm760, %v751
  %769 = vst.msk [vmem:[%s13 + $0x40] sm:$0xff] %vm760, %v752
  %770 = vst.msk [vmem:[%s13 + $0x48] sm:$0xff] %vm760, %v753
  %771 = vst.msk [vmem:[%s13 + $0x50] sm:$0xff] %vm760, %v754
  %772 = vst.msk [vmem:[%s13 + $0x58] sm:$0xff] %vm760, %v755
  %773 = vst.msk [vmem:[%s13 + $0x60] sm:$0xff] %vm760, %v756
  %774 = vst.msk [vmem:[%s13 + $0x68] sm:$0xff] %vm760, %v757
  %775 = vst.msk [vmem:[%s13 + $0x70] sm:$0xff] %vm760, %v758
  %776 = vst.msk [vmem:[%s13 + $0x78] sm:$0xff] %vm760, %v759
  %v777 = vld [vmem:[%s6] sm:$0x1]
  %v779 = vlaneseq
  %v780 = vshrl.u32 %v779, 7
  %v781 = vsub.s32 0, %v780
  %v782 = vrot.slane %v777, %v781
  %v784 = vmul.f32 %v44, %v782
  %v785 = vmul.f32 %v45, %v782
  %v786 = vmul.f32 %v46, %v782
  %v787 = vmul.f32 %v47, %v782
  %v788 = vmul.f32 %v48, %v782
  %v789 = vmul.f32 %v49, %v782
  %v790 = vmul.f32 %v50, %v782
  %v791 = vmul.f32 %v51, %v782
  %v792 = vmul.f32 %v52, %v782
  %v793 = vmul.f32 %v53, %v782
  %v794 = vmul.f32 %v54, %v782
  %v795 = vmul.f32 %v55, %v782
  %v796 = vmul.f32 %v56, %v782
  %v797 = vmul.f32 %v57, %v782
  %v798 = vmul.f32 %v58, %v782
  %v799 = vmul.f32 %v59, %v782
  %v800 = vld [vmem:[%s7] sm:$0x1]
  %v802 = vlaneseq
  %v803 = vshrl.u32 %v802, 7
  %v804 = vsub.s32 0, %v803
  %v805 = vrot.slane %v800, %v804
  %v807 = vadd.f32 %v784, %v805
  %v808 = vadd.f32 %v785, %v805
  %v809 = vadd.f32 %v786, %v805
  %v810 = vadd.f32 %v787, %v805
  %v811 = vadd.f32 %v788, %v805
  %v812 = vadd.f32 %v789, %v805
  %v813 = vadd.f32 %v790, %v805
  %v814 = vadd.f32 %v791, %v805
  %v815 = vadd.f32 %v792, %v805
  %v816 = vadd.f32 %v793, %v805
  %v817 = vadd.f32 %v794, %v805
  %v818 = vadd.f32 %v795, %v805
  %v819 = vadd.f32 %v796, %v805
  %v820 = vadd.f32 %v797, %v805
  %v821 = vadd.f32 %v798, %v805
  %v822 = vadd.f32 %v799, %v805
  %v823 = vmax.f32 %v807, 0.0
  %v824 = vmax.f32 %v808, 0.0
  %v825 = vmax.f32 %v809, 0.0
  %v826 = vmax.f32 %v810, 0.0
  %v827 = vmax.f32 %v811, 0.0
  %v828 = vmax.f32 %v812, 0.0
  %v829 = vmax.f32 %v813, 0.0
  %v830 = vmax.f32 %v814, 0.0
  %v831 = vmax.f32 %v815, 0.0
  %v832 = vmax.f32 %v816, 0.0
  %v833 = vmax.f32 %v817, 0.0
  %v834 = vmax.f32 %v818, 0.0
  %v835 = vmax.f32 %v819, 0.0
  %v836 = vmax.f32 %v820, 0.0
  %v837 = vmax.f32 %v821, 0.0
  %v838 = vmax.f32 %v822, 0.0
  %v839 = vpack.c.bf16 %v824, %v823
  %v840 = vpack.c.bf16 %v826, %v825
  %v841 = vpack.c.bf16 %v828, %v827
  %v842 = vpack.c.bf16 %v830, %v829
  %v843 = vpack.c.bf16 %v832, %v831
  %v844 = vpack.c.bf16 %v834, %v833
  %v845 = vpack.c.bf16 %v836, %v835
  %v846 = vpack.c.bf16 %v838, %v837
  %v847 = vld [vmem:[%s8] sm:$0x1]
  %v849 = vlaneseq
  %v850 = vshrl.u32 %v849, 7
  %v851 = vsub.s32 0, %v850
  %v852 = vrot.slane %v847, %v851
  %v854 = vmul.f32 %v60, %v852
  %v855 = vmul.f32 %v61, %v852
  %v856 = vmul.f32 %v62, %v852
  %v857 = vmul.f32 %v63, %v852
  %v858 = vmul.f32 %v64, %v852
  %v859 = vmul.f32 %v65, %v852
  %v860 = vmul.f32 %v66, %v852
  %v861 = vmul.f32 %v67, %v852
  %v862 = vmul.f32 %v68, %v852
  %v863 = vmul.f32 %v69, %v852
  %v864 = vmul.f32 %v70, %v852
  %v865 = vmul.f32 %v71, %v852
  %v866 = vmul.f32 %v72, %v852
  %v867 = vmul.f32 %v73, %v852
  %v868 = vmul.f32 %v74, %v852
  %v869 = vmul.f32 %v75, %v852
  %v870 = vld [vmem:[%s9] sm:$0x1]
  %v872 = vlaneseq
  %v873 = vshrl.u32 %v872, 7
  %v874 = vsub.s32 0, %v873
  %v875 = vrot.slane %v870, %v874
  %v877 = vadd.f32 %v854, %v875
  %v878 = vadd.f32 %v855, %v875
  %v879 = vadd.f32 %v856, %v875
  %v880 = vadd.f32 %v857, %v875
  %v881 = vadd.f32 %v858, %v875
  %v882 = vadd.f32 %v859, %v875
  %v883 = vadd.f32 %v860, %v875
  %v884 = vadd.f32 %v861, %v875
  %v885 = vadd.f32 %v862, %v875
  %v886 = vadd.f32 %v863, %v875
  %v887 = vadd.f32 %v864, %v875
  %v888 = vadd.f32 %v865, %v875
  %v889 = vadd.f32 %v866, %v875
  %v890 = vadd.f32 %v867, %v875
  %v891 = vadd.f32 %v868, %v875
  %v892 = vadd.f32 %v869, %v875
  %v893 = vmax.f32 %v877, 0.0
  %v894 = vmax.f32 %v878, 0.0
  %v895 = vmax.f32 %v879, 0.0
  %v896 = vmax.f32 %v880, 0.0
  %v897 = vmax.f32 %v881, 0.0
  %v898 = vmax.f32 %v882, 0.0
  %v899 = vmax.f32 %v883, 0.0
  %v900 = vmax.f32 %v884, 0.0
  %v901 = vmax.f32 %v885, 0.0
  %v902 = vmax.f32 %v886, 0.0
  %v903 = vmax.f32 %v887, 0.0
  %v904 = vmax.f32 %v888, 0.0
  %v905 = vmax.f32 %v889, 0.0
  %v906 = vmax.f32 %v890, 0.0
  %v907 = vmax.f32 %v891, 0.0
  %v908 = vmax.f32 %v892, 0.0
  %v909 = vpack.c.bf16 %v894, %v893
  %v910 = vpack.c.bf16 %v896, %v895
  %v911 = vpack.c.bf16 %v898, %v897
  %v912 = vpack.c.bf16 %v900, %v899
  %v913 = vpack.c.bf16 %v902, %v901
  %v914 = vpack.c.bf16 %v904, %v903
  %v915 = vpack.c.bf16 %v906, %v905
  %v916 = vpack.c.bf16 %v908, %v907
  %v917 = vld [vmem:[%s10] sm:$0xf]
  %v918 = vld [vmem:[%s10 + $0x4] sm:$0xf]
  %v919 = vld [vmem:[%s10 + $0x8] sm:$0xf]
  %v920 = vld [vmem:[%s10 + $0xc] sm:$0xf]
  %v921 = vld [vmem:[%s10 + $0x10] sm:$0xf]
  %v922 = vld [vmem:[%s10 + $0x14] sm:$0xf]
  %v923 = vld [vmem:[%s10 + $0x18] sm:$0xf]
  %v924 = vld [vmem:[%s10 + $0x1c] sm:$0xf]
  %v925 = vld [vmem:[%s10 + $0x20] sm:$0xf]
  %v926 = vld [vmem:[%s10 + $0x24] sm:$0xf]
  %v927 = vld [vmem:[%s10 + $0x28] sm:$0xf]
  %v928 = vld [vmem:[%s10 + $0x2c] sm:$0xf]
  %v929 = vld [vmem:[%s10 + $0x30] sm:$0xf]
  %v930 = vld [vmem:[%s10 + $0x34] sm:$0xf]
  %v931 = vld [vmem:[%s10 + $0x38] sm:$0xf]
  %v932 = vld [vmem:[%s10 + $0x3c] sm:$0xf]
  %v933 = vld [vmem:[%s11] sm:$0xf]
  %v934 = vld [vmem:[%s11 + $0x4] sm:$0xf]
  %v935 = vld [vmem:[%s11 + $0x8] sm:$0xf]
  %v936 = vld [vmem:[%s11 + $0xc] sm:$0xf]
  %v937 = vld [vmem:[%s11 + $0x10] sm:$0xf]
  %v938 = vld [vmem:[%s11 + $0x14] sm:$0xf]
  %v939 = vld [vmem:[%s11 + $0x18] sm:$0xf]
  %v940 = vld [vmem:[%s11 + $0x1c] sm:$0xf]
  %v941 = vld [vmem:[%s11 + $0x20] sm:$0xf]
  %v942 = vld [vmem:[%s11 + $0x24] sm:$0xf]
  %v943 = vld [vmem:[%s11 + $0x28] sm:$0xf]
  %v944 = vld [vmem:[%s11 + $0x2c] sm:$0xf]
  %v945 = vld [vmem:[%s11 + $0x30] sm:$0xf]
  %v946 = vld [vmem:[%s11 + $0x34] sm:$0xf]
  %v947 = vld [vmem:[%s11 + $0x38] sm:$0xf]
  %v948 = vld [vmem:[%s11 + $0x3c] sm:$0xf]
  %v965 = vunpack.c.l.b16 %v933
  %v966 = vunpack.c.l.b16 %v934
  %v967 = vunpack.c.l.b16 %v935
  %v968 = vunpack.c.l.b16 %v936
  %v969 = vunpack.c.l.b16 %v937
  %v970 = vunpack.c.l.b16 %v938
  %v971 = vunpack.c.l.b16 %v939
  %v972 = vunpack.c.l.b16 %v940
  %v973 = vunpack.c.l.b16 %v941
  %v974 = vunpack.c.l.b16 %v942
  %v975 = vunpack.c.l.b16 %v943
  %v976 = vunpack.c.l.b16 %v944
  %v977 = vunpack.c.l.b16 %v945
  %v978 = vunpack.c.l.b16 %v946
  %v979 = vunpack.c.l.b16 %v947
  %v980 = vunpack.c.l.b16 %v948
  %v981 = vpack.c.b16 %v966, %v965
  %v982 = vpack.c.b16 %v968, %v967
  %v983 = vpack.c.b16 %v970, %v969
  %v984 = vpack.c.b16 %v972, %v971
  %v985 = vpack.c.b16 %v974, %v973
  %v986 = vpack.c.b16 %v976, %v975
  %v987 = vpack.c.b16 %v978, %v977
  %v988 = vpack.c.b16 %v980, %v979
  %997 = vmatprep.subr.bf16.mxu0 0
  %998 = vmatpush1.bf16.msra.mxu0 %v988
  %999 = vmatprep.subr.bf16.mxu0 0
  %1000 = vmatpush1.bf16.msra.mxu0 %v987
  %1001 = vmatprep.subr.bf16.mxu0 0
  %1002 = vmatpush1.bf16.msra.mxu0 %v986
  %1003 = vmatprep.subr.bf16.mxu0 0
  %1004 = vmatpush1.bf16.msra.mxu0 %v985
  %1005 = vmatprep.subr.bf16.mxu0 0
  %1006 = vmatpush1.bf16.msra.mxu0 %v984
  %1007 = vmatprep.subr.bf16.mxu0 0
  %1008 = vmatpush1.bf16.msra.mxu0 %v983
  %1009 = vmatprep.subr.bf16.mxu0 0
  %1010 = vmatpush1.bf16.msra.mxu0 %v982
  %1011 = vmatprep.subr.bf16.mxu0 0
  %1012 = vmatpush1.bf16.msra.mxu0 %v981
  %1013 = vmatprep.subr.bf16.mxu0 0
  %1014 = vmatpush2.bf16.msra.mxu0 0
  %1015 = vmatprep.subr.bf16.mxu0 0
  %1016 = vmatpush2.bf16.msra.mxu0 0
  %1017 = vmatprep.subr.bf16.mxu0 0
  %1018 = vmatpush2.bf16.msra.mxu0 0
  %1019 = vmatprep.subr.bf16.mxu0 0
  %1020 = vmatpush2.bf16.msra.mxu0 0
  %1021 = vmatprep.subr.bf16.mxu0 0
  %1022 = vmatpush2.bf16.msra.mxu0 0
  %1023 = vmatprep.subr.bf16.mxu0 0
  %1024 = vmatpush2.bf16.msra.mxu0 0
  %1025 = vmatprep.subr.bf16.mxu0 0
  %1026 = vmatpush2.bf16.msra.mxu0 0
  %1027 = vmatprep.subr.bf16.mxu0 0
  %1028 = vmatpush2.bf16.msra.mxu0 0
  %1029 = vmatprep.mubr.bf16.mxu0 0
  %1030 = vmatmul.mubr.bf16.gmra.mxu0 %v909
  %v1031 = vpop.f32.mrf.mxu0
  %v1032 = vadd.f32 0.0, %v1031
  %v1033 = vpop.f32.mrf.mxu0
  %v1034 = vpop.f32.mrf.mxu0
  %v1035 = vadd.f32 0.0, %v1034
  %v1036 = vpop.f32.mrf.mxu0
  %1037 = vmatprep.mubr.bf16.mxu0 0
  %1038 = vmatmul.mubr.bf16.gmra.mxu0 %v910
  %v1039 = vpop.f32.mrf.mxu0
  %v1040 = vadd.f32 0.0, %v1039
  %v1041 = vpop.f32.mrf.mxu0
  %v1042 = vpop.f32.mrf.mxu0
  %v1043 = vadd.f32 0.0, %v1042
  %v1044 = vpop.f32.mrf.mxu0
  %1045 = vmatprep.mubr.bf16.mxu0 0
  %1046 = vmatmul.mubr.bf16.gmra.mxu0 %v911
  %v1047 = vpop.f32.mrf.mxu0
  %v1048 = vadd.f32 0.0, %v1047
  %v1049 = vpop.f32.mrf.mxu0
  %v1050 = vpop.f32.mrf.mxu0
  %v1051 = vadd.f32 0.0, %v1050
  %v1052 = vpop.f32.mrf.mxu0
  %1053 = vmatprep.mubr.bf16.mxu0 0
  %1054 = vmatmul.mubr.bf16.gmra.mxu0 %v912
  %v1055 = vpop.f32.mrf.mxu0
  %v1056 = vadd.f32 0.0, %v1055
  %v1057 = vpop.f32.mrf.mxu0
  %v1058 = vpop.f32.mrf.mxu0
  %v1059 = vadd.f32 0.0, %v1058
  %v1060 = vpop.f32.mrf.mxu0
  %1061 = vmatprep.mubr.bf16.mxu0 0
  %1062 = vmatmul.mubr.bf16.gmra.mxu0 %v913
  %v1063 = vpop.f32.mrf.mxu0
  %v1064 = vadd.f32 0.0, %v1063
  %v1065 = vpop.f32.mrf.mxu0
  %v1066 = vpop.f32.mrf.mxu0
  %v1067 = vadd.f32 0.0, %v1066
  %v1068 = vpop.f32.mrf.mxu0
  %1069 = vmatprep.mubr.bf16.mxu0 0
  %1070 = vmatmul.mubr.bf16.gmra.mxu0 %v914
  %v1071 = vpop.f32.mrf.mxu0
  %v1072 = vadd.f32 0.0, %v1071
  %v1073 = vpop.f32.mrf.mxu0
  %v1074 = vpop.f32.mrf.mxu0
  %v1075 = vadd.f32 0.0, %v1074
  %v1076 = vpop.f32.mrf.mxu0
  %1077 = vmatprep.mubr.bf16.mxu0 0
  %1078 = vmatmul.mubr.bf16.gmra.mxu0 %v915
  %v1079 = vpop.f32.mrf.mxu0
  %v1080 = vadd.f32 0.0, %v1079
  %v1081 = vpop.f32.mrf.mxu0
  %v1082 = vpop.f32.mrf.mxu0
  %v1083 = vadd.f32 0.0, %v1082
  %v1084 = vpop.f32.mrf.mxu0
  %1085 = vmatprep.mubr.bf16.mxu0 0
  %1086 = vmatmul.mubr.bf16.gmra.mxu0 %v916
  %v1087 = vpop.f32.mrf.mxu0
  %v1088 = vadd.f32 0.0, %v1087
  %v1089 = vpop.f32.mrf.mxu0
  %v1090 = vpop.f32.mrf.mxu0
  %v1091 = vadd.f32 0.0, %v1090
  %v1092 = vpop.f32.mrf.mxu0
  %1093 = vdwg.mxu0
  %v1110 = vunpack.c.l.b16 %v917
  %v1111 = vunpack.c.l.b16 %v918
  %v1112 = vunpack.c.l.b16 %v919
  %v1113 = vunpack.c.l.b16 %v920
  %v1114 = vunpack.c.l.b16 %v921
  %v1115 = vunpack.c.l.b16 %v922
  %v1116 = vunpack.c.l.b16 %v923
  %v1117 = vunpack.c.l.b16 %v924
  %v1118 = vunpack.c.l.b16 %v925
  %v1119 = vunpack.c.l.b16 %v926
  %v1120 = vunpack.c.l.b16 %v927
  %v1121 = vunpack.c.l.b16 %v928
  %v1122 = vunpack.c.l.b16 %v929
  %v1123 = vunpack.c.l.b16 %v930
  %v1124 = vunpack.c.l.b16 %v931
  %v1125 = vunpack.c.l.b16 %v932
  %v1126 = vpack.c.b16 %v1111, %v1110
  %v1127 = vpack.c.b16 %v1113, %v1112
  %v1128 = vpack.c.b16 %v1115, %v1114
  %v1129 = vpack.c.b16 %v1117, %v1116
  %v1130 = vpack.c.b16 %v1119, %v1118
  %v1131 = vpack.c.b16 %v1121, %v1120
  %v1132 = vpack.c.b16 %v1123, %v1122
  %v1133 = vpack.c.b16 %v1125, %v1124
  %1142 = vmatprep.subr.bf16.mxu0 0
  %1143 = vmatpush1.bf16.msra.mxu0 %v1133
  %1144 = vmatprep.subr.bf16.mxu0 0
  %1145 = vmatpush1.bf16.msra.mxu0 %v1132
  %1146 = vmatprep.subr.bf16.mxu0 0
  %1147 = vmatpush1.bf16.msra.mxu0 %v1131
  %1148 = vmatprep.subr.bf16.mxu0 0
  %1149 = vmatpush1.bf16.msra.mxu0 %v1130
  %1150 = vmatprep.subr.bf16.mxu0 0
  %1151 = vmatpush1.bf16.msra.mxu0 %v1129
  %1152 = vmatprep.subr.bf16.mxu0 0
  %1153 = vmatpush1.bf16.msra.mxu0 %v1128
  %1154 = vmatprep.subr.bf16.mxu0 0
  %1155 = vmatpush1.bf16.msra.mxu0 %v1127
  %1156 = vmatprep.subr.bf16.mxu0 0
  %1157 = vmatpush1.bf16.msra.mxu0 %v1126
  %1158 = vmatprep.subr.bf16.mxu0 0
  %1159 = vmatpush2.bf16.msra.mxu0 0
  %1160 = vmatprep.subr.bf16.mxu0 0
  %1161 = vmatpush2.bf16.msra.mxu0 0
  %1162 = vmatprep.subr.bf16.mxu0 0
  %1163 = vmatpush2.bf16.msra.mxu0 0
  %1164 = vmatprep.subr.bf16.mxu0 0
  %1165 = vmatpush2.bf16.msra.mxu0 0
  %1166 = vmatprep.subr.bf16.mxu0 0
  %1167 = vmatpush2.bf16.msra.mxu0 0
  %1168 = vmatprep.subr.bf16.mxu0 0
  %1169 = vmatpush2.bf16.msra.mxu0 0
  %1170 = vmatprep.subr.bf16.mxu0 0
  %1171 = vmatpush2.bf16.msra.mxu0 0
  %1172 = vmatprep.subr.bf16.mxu0 0
  %1173 = vmatpush2.bf16.msra.mxu0 0
  %1174 = vmatprep.mubr.bf16.mxu0 0
  %1175 = vmatmul.mubr.bf16.gmra.mxu0 %v839
  %v1176 = vpop.f32.mrf.mxu0
  %v1177 = vadd.f32 %v1032, %v1176
  %v1178 = vpop.f32.mrf.mxu0
  %v1179 = vpop.f32.mrf.mxu0
  %v1180 = vadd.f32 %v1035, %v1179
  %v1181 = vpop.f32.mrf.mxu0
  %1182 = vmatprep.mubr.bf16.mxu0 0
  %1183 = vmatmul.mubr.bf16.gmra.mxu0 %v840
  %v1184 = vpop.f32.mrf.mxu0
  %v1185 = vadd.f32 %v1040, %v1184
  %v1186 = vpop.f32.mrf.mxu0
  %v1187 = vpop.f32.mrf.mxu0
  %v1188 = vadd.f32 %v1043, %v1187
  %v1189 = vpop.f32.mrf.mxu0
  %1190 = vmatprep.mubr.bf16.mxu0 0
  %1191 = vmatmul.mubr.bf16.gmra.mxu0 %v841
  %v1192 = vpop.f32.mrf.mxu0
  %v1193 = vadd.f32 %v1048, %v1192
  %v1194 = vpop.f32.mrf.mxu0
  %v1195 = vpop.f32.mrf.mxu0
  %v1196 = vadd.f32 %v1051, %v1195
  %v1197 = vpop.f32.mrf.mxu0
  %1198 = vmatprep.mubr.bf16.mxu0 0
  %1199 = vmatmul.mubr.bf16.gmra.mxu0 %v842
  %v1200 = vpop.f32.mrf.mxu0
  %v1201 = vadd.f32 %v1056, %v1200
  %v1202 = vpop.f32.mrf.mxu0
  %v1203 = vpop.f32.mrf.mxu0
  %v1204 = vadd.f32 %v1059, %v1203
  %v1205 = vpop.f32.mrf.mxu0
  %1206 = vmatprep.mubr.bf16.mxu0 0
  %1207 = vmatmul.mubr.bf16.gmra.mxu0 %v843
  %v1208 = vpop.f32.mrf.mxu0
  %v1209 = vadd.f32 %v1064, %v1208
  %v1210 = vpop.f32.mrf.mxu0
  %v1211 = vpop.f32.mrf.mxu0
  %v1212 = vadd.f32 %v1067, %v1211
  %v1213 = vpop.f32.mrf.mxu0
  %1214 = vmatprep.mubr.bf16.mxu0 0
  %1215 = vmatmul.mubr.bf16.gmra.mxu0 %v844
  %v1216 = vpop.f32.mrf.mxu0
  %v1217 = vadd.f32 %v1072, %v1216
  %v1218 = vpop.f32.mrf.mxu0
  %v1219 = vpop.f32.mrf.mxu0
  %v1220 = vadd.f32 %v1075, %v1219
  %v1221 = vpop.f32.mrf.mxu0
  %1222 = vmatprep.mubr.bf16.mxu0 0
  %1223 = vmatmul.mubr.bf16.gmra.mxu0 %v845
  %v1224 = vpop.f32.mrf.mxu0
  %v1225 = vadd.f32 %v1080, %v1224
  %v1226 = vpop.f32.mrf.mxu0
  %v1227 = vpop.f32.mrf.mxu0
  %v1228 = vadd.f32 %v1083, %v1227
  %v1229 = vpop.f32.mrf.mxu0
  %1230 = vmatprep.mubr.bf16.mxu0 0
  %1231 = vmatmul.mubr.bf16.gmra.mxu0 %v846
  %v1232 = vpop.f32.mrf.mxu0
  %v1233 = vadd.f32 %v1088, %v1232
  %v1234 = vpop.f32.mrf.mxu0
  %v1235 = vpop.f32.mrf.mxu0
  %v1236 = vadd.f32 %v1091, %v1235
  %v1237 = vpop.f32.mrf.mxu0
  %1238 = vdwg.mxu0
  %1239 = vst [vmem:[%s12] sm:$0xff] %v1177
  %1240 = vst [vmem:[%s12 + $0x8] sm:$0xff] %v1180
  %1241 = vst [vmem:[%s12 + $0x10] sm:$0xff] %v1185
  %1242 = vst [vmem:[%s12 + $0x18] sm:$0xff] %v1188
  %1243 = vst [vmem:[%s12 + $0x20] sm:$0xff] %v1193
  %1244 = vst [vmem:[%s12 + $0x28] sm:$0xff] %v1196
  %1245 = vst [vmem:[%s12 + $0x30] sm:$0xff] %v1201
  %1246 = vst [vmem:[%s12 + $0x38] sm:$0xff] %v1204
  %1247 = vst [vmem:[%s12 + $0x40] sm:$0xff] %v1209
  %1248 = vst [vmem:[%s12 + $0x48] sm:$0xff] %v1212
  %1249 = vst [vmem:[%s12 + $0x50] sm:$0xff] %v1217
  %1250 = vst [vmem:[%s12 + $0x58] sm:$0xff] %v1220
  %1251 = vst [vmem:[%s12 + $0x60] sm:$0xff] %v1225
  %1252 = vst [vmem:[%s12 + $0x68] sm:$0xff] %v1228
  %1253 = vst [vmem:[%s12 + $0x70] sm:$0xff] %v1233
  %1254 = vst [vmem:[%s12 + $0x78] sm:$0xff] %v1236
  // Predicated region
  $region50: #{upsample16_forward.7} parent=0 // pred_check
    _
  $region51: #{upsample16_forward.7} parent=0 // pred_check_branch
    %1256 = sbr.rel (0) target = $region53
  $region52: #{upsample16_forward.7} parent=0 // pred_region
    _
  $region53: #{upsample16_forward.7} parent=0 // pred_fallthru
    _
  // Predicated region
  $region54: #{upsample16_forward.7} parent=0 // pred_check
    _
  $region55: #{upsample16_forward.7} parent=0 // pred_check_branch
    %1258 = sbr.rel (0) target = $region57
  $region56: #{upsample16_forward.7} parent=0 // pred_region
    _
  $region57: #{upsample16_forward.7} parent=0 // pred_fallthru
    _
  // Predicated region
  $region58: #{upsample16_forward.7} parent=0 // pred_check
    _
  $region59: #{upsample16_forward.7} parent=0 // pred_check_branch
    %1260 = sbr.rel (0) target = $region61
  $region60: #{upsample16_forward.7} parent=0 // pred_region
    _
  $region61: #{upsample16_forward.7} parent=0 // pred_fallthru
    _
  // Predicated region
  $region62: #{upsample16_forward.7} parent=0 // pred_check
    _
  $region63: #{upsample16_forward.7} parent=0 // pred_check_branch
    %1262 = sbr.rel (0) target = $region65
  $region64: #{upsample16_forward.7} parent=0 // pred_region
    _
  $region65: #{upsample16_forward.7} parent=0 // pred_fallthru
    _

// kernel: upsample16_forward.8
$region0: #{upsample16_forward.8}
  #allocation0 [shape = 'u32[]', space=smem, size = 0x4, offset = 0x4, fixed_abs, tag = 'smem constant byte address 0x4 - core index']
  #allocation1 [shape = 'u32[144,128]{1,0:T(1,128)}', space=vmem, size = 0x12000, scoped, tag = 'internal scratch']
  %s0 = inlined_call_operand.vmem [shape: f32[16,8,50], index: 0, kind: input, shape index: {}]
  %s1 = inlined_call_operand.vmem [shape: f32[1,1,50], index: 1, kind: input, shape index: {}]
  %s2 = inlined_call_operand.vmem [shape: f32[16,8], index: 2, kind: output, shape index: {}]
  %s3 = sld [smem:[#allocation0]]
  $region18: #{upsample16_forward.8} parent=0
    _
  %s5 = ssub.s32 1, %s3
  %s6 = scalar_select 0, %s5, %s3
  // Predicated region
  $region2: #{upsample16_forward.8} parent=0 // pred_check
    _
  $region3: #{upsample16_forward.8} parent=0 // pred_check_branch
    %8 = sbr.rel (0) target = $region5
  $region4: #{upsample16_forward.8} parent=0 // pred_region
    _
  $region5: #{upsample16_forward.8} parent=0 // pred_fallthru
    _
  // Predicated region
  $region6: #{upsample16_forward.8} parent=0 // pred_check
    _
  $region7: #{upsample16_forward.8} parent=0 // pred_check_branch
    %10 = sbr.rel (0) target = $region9
  $region8: #{upsample16_forward.8} parent=0 // pred_region
    _
  $region9: #{upsample16_forward.8} parent=0 // pred_fallthru
    _
  %v11 = vld [vmem:[%s0] sm:$0xff]
  %v12 = vld [vmem:[%s0 + $0x8] sm:$0xff]
  %v13 = vld [vmem:[%s0 + $0x10] sm:$0xff]
  %v14 = vld [vmem:[%s0 + $0x18] sm:$0xff]
  %v15 = vld [vmem:[%s0 + $0x20] sm:$0xff]
  %v16 = vld [vmem:[%s0 + $0x28] sm:$0xff]
  %v17 = vld [vmem:[%s0 + $0x30] sm:$0xff]
  %v18 = vld [vmem:[%s0 + $0x38] sm:$0xff]
  %v19 = vld [vmem:[%s0 + $0x40] sm:$0xff]
  %v20 = vld [vmem:[%s0 + $0x48] sm:$0xff]
  %v21 = vld [vmem:[%s0 + $0x50] sm:$0xff]
  %v22 = vld [vmem:[%s0 + $0x58] sm:$0xff]
  %v23 = vld [vmem:[%s0 + $0x60] sm:$0xff]
  %v24 = vld [vmem:[%s0 + $0x68] sm:$0xff]
  %v25 = vld [vmem:[%s0 + $0x70] sm:$0xff]
  %v26 = vld [vmem:[%s0 + $0x78] sm:$0xff]
  %v27 = vld [vmem:[%s1] sm:$0x1]
  %v29 = vlaneseq
  %v30 = vshrl.u32 %v29, 7
  %v31 = vsub.s32 0, %v30
  %v32 = vrot.slane %v27, %v31
  %v34 = vmul.f32 %v11, %v32
  %v35 = vmul.f32 %v12, %v32
  %v36 = vmul.f32 %v13, %v32
  %v37 = vmul.f32 %v14, %v32
  %v38 = vmul.f32 %v15, %v32
  %v39 = vmul.f32 %v16, %v32
  %v40 = vmul.f32 %v17, %v32
  %v41 = vmul.f32 %v18, %v32
  %v42 = vmul.f32 %v19, %v32
  %v43 = vmul.f32 %v20, %v32
  %v44 = vmul.f32 %v21, %v32
  %v45 = vmul.f32 %v22, %v32
  %v46 = vmul.f32 %v23, %v32
  %v47 = vmul.f32 %v24, %v32
  %v48 = vmul.f32 %v25, %v32
  %v49 = vmul.f32 %v26, %v32
  %vm50 = vcmask 408576
  %v51 = vsel %vm50, %v34, 0.0
  %52 = vadd.xlane.f32.xlu0 %v51
  %v53 = vpop.xlane.xlu0 %52
  %v54 = vsel %vm50, %v35, 0.0
  %55 = vadd.xlane.f32.xlu0 %v54
  %v56 = vpop.xlane.xlu0 %55
  %v57 = vsel %vm50, %v36, 0.0
  %58 = vadd.xlane.f32.xlu0 %v57
  %v59 = vpop.xlane.xlu0 %58
  %v60 = vsel %vm50, %v37, 0.0
  %61 = vadd.xlane.f32.xlu0 %v60
  %v62 = vpop.xlane.xlu0 %61
  %v63 = vsel %vm50, %v38, 0.0
  %64 = vadd.xlane.f32.xlu0 %v63
  %v65 = vpop.xlane.xlu0 %64
  %v66 = vsel %vm50, %v39, 0.0
  %67 = vadd.xlane.f32.xlu0 %v66
  %v68 = vpop.xlane.xlu0 %67
  %v69 = vsel %vm50, %v40, 0.0
  %70 = vadd.xlane.f32.xlu0 %v69
  %v71 = vpop.xlane.xlu0 %70
  %v72 = vsel %vm50, %v41, 0.0
  %73 = vadd.xlane.f32.xlu0 %v72
  %v74 = vpop.xlane.xlu0 %73
  %v75 = vsel %vm50, %v42, 0.0
  %76 = vadd.xlane.f32.xlu0 %v75
  %v77 = vpop.xlane.xlu0 %76
  %v78 = vsel %vm50, %v43, 0.0
  %79 = vadd.xlane.f32.xlu0 %v78
  %v80 = vpop.xlane.xlu0 %79
  %v81 = vsel %vm50, %v44, 0.0
  %82 = vadd.xlane.f32.xlu0 %v81
  %v83 = vpop.xlane.xlu0 %82
  %v84 = vsel %vm50, %v45, 0.0
  %85 = vadd.xlane.f32.xlu0 %v84
  %v86 = vpop.xlane.xlu0 %85
  %v87 = vsel %vm50, %v46, 0.0
  %88 = vadd.xlane.f32.xlu0 %v87
  %v89 = vpop.xlane.xlu0 %88
  %v90 = vsel %vm50, %v47, 0.0
  %91 = vadd.xlane.f32.xlu0 %v90
  %v92 = vpop.xlane.xlu0 %91
  %v93 = vsel %vm50, %v48, 0.0
  %94 = vadd.xlane.f32.xlu0 %v93
  %v95 = vpop.xlane.xlu0 %94
  %v96 = vsel %vm50, %v49, 0.0
  %97 = vadd.xlane.f32.xlu0 %v96
  %v98 = vpop.xlane.xlu0 %97
  %v99 = vxor.u32 %v53, 2147483648
  %v100 = vxor.u32 %v56, 2147483648
  %v101 = vxor.u32 %v59, 2147483648
  %v102 = vxor.u32 %v62, 2147483648
  %v103 = vxor.u32 %v65, 2147483648
  %v104 = vxor.u32 %v68, 2147483648
  %v105 = vxor.u32 %v71, 2147483648
  %v106 = vxor.u32 %v74, 2147483648
  %v107 = vxor.u32 %v77, 2147483648
  %v108 = vxor.u32 %v80, 2147483648
  %v109 = vxor.u32 %v83, 2147483648
  %v110 = vxor.u32 %v86, 2147483648
  %v111 = vxor.u32 %v89, 2147483648
  %v112 = vxor.u32 %v92, 2147483648
  %v113 = vxor.u32 %v95, 2147483648
  %v114 = vxor.u32 %v98, 2147483648
  %v115 = vmul.f32 %v99, 1.442695
  %v116 = vpow.pop %v115
  %v117 = vmul.f32 %v100, 1.442695
  %v118 = vpow.pop %v117
  %v119 = vmul.f32 %v101, 1.442695
  %v120 = vpow.pop %v119
  %v121 = vmul.f32 %v102, 1.442695
  %v122 = vpow.pop %v121
  %v123 = vmul.f32 %v103, 1.442695
  %v124 = vpow.pop %v123
  %v125 = vmul.f32 %v104, 1.442695
  %v126 = vpow.pop %v125
  %v127 = vmul.f32 %v105, 1.442695
  %v128 = vpow.pop %v127
  %v129 = vmul.f32 %v106, 1.442695
  %v130 = vpow.pop %v129
  %v131 = vmul.f32 %v107, 1.442695
  %v132 = vpow.pop %v131
  %v133 = vmul.f32 %v108, 1.442695
  %v134 = vpow.pop %v133
  %v135 = vmul.f32 %v109, 1.442695
  %v136 = vpow.pop %v135
  %v137 = vmul.f32 %v110, 1.442695
  %v138 = vpow.pop %v137
  %v139 = vmul.f32 %v111, 1.442695
  %v140 = vpow.pop %v139
  %v141 = vmul.f32 %v112, 1.442695
  %v142 = vpow.pop %v141
  %v143 = vmul.f32 %v113, 1.442695
  %v144 = vpow.pop %v143
  %v145 = vmul.f32 %v114, 1.442695
  %v146 = vpow.pop %v145
  %v147 = vadd.f32 %v116, 1.0
  %v148 = vadd.f32 %v118, 1.0
  %v149 = vadd.f32 %v120, 1.0
  %v150 = vadd.f32 %v122, 1.0
  %v151 = vadd.f32 %v124, 1.0
  %v152 = vadd.f32 %v126, 1.0
  %v153 = vadd.f32 %v128, 1.0
  %v154 = vadd.f32 %v130, 1.0
  %v155 = vadd.f32 %v132, 1.0
  %v156 = vadd.f32 %v134, 1.0
  %v157 = vadd.f32 %v136, 1.0
  %v158 = vadd.f32 %v138, 1.0
  %v159 = vadd.f32 %v140, 1.0
  %v160 = vadd.f32 %v142, 1.0
  %v161 = vadd.f32 %v144, 1.0
  %v162 = vadd.f32 %v146, 1.0
  %v163 = vrcp.pop %v147
  %v164 = vmul.f32 1.0, %v163
  %v165 = vrcp.pop %v148
  %v166 = vmul.f32 1.0, %v165
  %v167 = vrcp.pop %v149
  %v168 = vmul.f32 1.0, %v167
  %v169 = vrcp.pop %v150
  %v170 = vmul.f32 1.0, %v169
  %v171 = vrcp.pop %v151
  %v172 = vmul.f32 1.0, %v171
  %v173 = vrcp.pop %v152
  %v174 = vmul.f32 1.0, %v173
  %v175 = vrcp.pop %v153
  %v176 = vmul.f32 1.0, %v175
  %v177 = vrcp.pop %v154
  %v178 = vmul.f32 1.0, %v177
  %v179 = vrcp.pop %v155
  %v180 = vmul.f32 1.0, %v179
  %v181 = vrcp.pop %v156
  %v182 = vmul.f32 1.0, %v181
  %v183 = vrcp.pop %v157
  %v184 = vmul.f32 1.0, %v183
  %v185 = vrcp.pop %v158
  %v186 = vmul.f32 1.0, %v185
  %v187 = vrcp.pop %v159
  %v188 = vmul.f32 1.0, %v187
  %v189 = vrcp.pop %v160
  %v190 = vmul.f32 1.0, %v189
  %v191 = vrcp.pop %v161
  %v192 = vmul.f32 1.0, %v191
  %v193 = vrcp.pop %v162
  %v194 = vmul.f32 1.0, %v193
  %v211 = vlaneseq
  %v212 = vand.u32 %v211, 127
  %v213 = vlaneseq
  %v214 = vshrl.u32 %v213, 7
  %v215 = vsub.s32 %v212, %v214
  %v216 = vrot.slane %v164, %v215
  %v217 = vlaneseq
  %v218 = vshrl.u32 %v217, 7
  %v219 = vsub.s32 %v212, %v218
  %v220 = vrot.slane %v166, %v219
  %v221 = vlaneseq
  %v222 = vshrl.u32 %v221, 7
  %v223 = vsub.s32 %v212, %v222
  %v224 = vrot.slane %v168, %v223
  %v225 = vlaneseq
  %v226 = vshrl.u32 %v225, 7
  %v227 = vsub.s32 %v212, %v226
  %v228 = vrot.slane %v170, %v227
  %v229 = vlaneseq
  %v230 = vshrl.u32 %v229, 7
  %v231 = vsub.s32 %v212, %v230
  %v232 = vrot.slane %v172, %v231
  %v233 = vlaneseq
  %v234 = vshrl.u32 %v233, 7
  %v235 = vsub.s32 %v212, %v234
  %v236 = vrot.slane %v174, %v235
  %v237 = vlaneseq
  %v238 = vshrl.u32 %v237, 7
  %v239 = vsub.s32 %v212, %v238
  %v240 = vrot.slane %v176, %v239
  %v241 = vlaneseq
  %v242 = vshrl.u32 %v241, 7
  %v243 = vsub.s32 %v212, %v242
  %v244 = vrot.slane %v178, %v243
  %v245 = vlaneseq
  %v246 = vshrl.u32 %v245, 7
  %v247 = vsub.s32 %v212, %v246
  %v248 = vrot.slane %v180, %v247
  %v249 = vlaneseq
  %v250 = vshrl.u32 %v249, 7
  %v251 = vsub.s32 %v212, %v250
  %v252 = vrot.slane %v182, %v251
  %v253 = vlaneseq
  %v254 = vshrl.u32 %v253, 7
  %v255 = vsub.s32 %v212, %v254
  %v256 = vrot.slane %v184, %v255
  %v257 = vlaneseq
  %v258 = vshrl.u32 %v257, 7
  %v259 = vsub.s32 %v212, %v258
  %v260 = vrot.slane %v186, %v259
  %v261 = vlaneseq
  %v262 = vshrl.u32 %v261, 7
  %v263 = vsub.s32 %v212, %v262
  %v264 = vrot.slane %v188, %v263
  %v265 = vlaneseq
  %v266 = vshrl.u32 %v265, 7
  %v267 = vsub.s32 %v212, %v266
  %v268 = vrot.slane %v190, %v267
  %v269 = vlaneseq
  %v270 = vshrl.u32 %v269, 7
  %v271 = vsub.s32 %v212, %v270
  %v272 = vrot.slane %v192, %v271
  %v273 = vlaneseq
  %v274 = vshrl.u32 %v273, 7
  %v275 = vsub.s32 %v212, %v274
  %v276 = vrot.slane %v194, %v275
  %vm277 = vcmask 1041409
  %v278 = vsel %vm277, %v220, %v216
  %vm279 = vcmask 1042434
  %v280 = vsel %vm279, %v224, %v278
  %vm281 = vcmask 1043459
  %v282 = vsel %vm281, %v228, %v280
  %vm283 = vcmask 1044484
  %v284 = vsel %vm283, %v232, %v282
  %vm285 = vcmask 1045509
  %v286 = vsel %vm285, %v236, %v284
  %vm287 = vcmask 1046534
  %v288 = vsel %vm287, %v240, %v286
  %vm289 = vcmask 1047559
  %v290 = vsel %vm289, %v244, %v288
  %v291 = vsel %vm277, %v252, %v248
  %v292 = vsel %vm279, %v256, %v291
  %v293 = vsel %vm281, %v260, %v292
  %v294 = vsel %vm283, %v264, %v293
  %v295 = vsel %vm285, %v268, %v294
  %v296 = vsel %vm287, %v272, %v295
  %v297 = vsel %vm289, %v276, %v296
  %vm300 = vcmask 64512
  %301 = vst.msk [vmem:[%s2] sm:$0xff] %vm300, %v290
  %302 = vst.msk [vmem:[%s2 + $0x8] sm:$0xff] %vm300, %v297
  // Predicated region
  $region10: #{upsample16_forward.8} parent=0 // pred_check
    _
  $region11: #{upsample16_forward.8} parent=0 // pred_check_branch
    %304 = sbr.rel (0) target = $region13
  $region12: #{upsample16_forward.8} parent=0 // pred_region
    _
  $region13: #{upsample16_forward.8} parent=0 // pred_fallthru
    _
  // Predicated region
  $region14: #{upsample16_forward.8} parent=0 // pred_check
    _
  $region15: #{upsample16_forward.8} parent=0 // pred_check_branch
    %306 = sbr.rel (0) target = $region17
  $region16: #{upsample16_forward.8} parent=0 // pred_region
    _
  $region17: #{upsample16_forward.8} parent=0 // pred_fallthru
    _

// kernel: upsample16_forward.9
$region0: #{upsample16_forward.9}
  #allocation0 [shape = 'u32[]', space=smem, size = 0x4, offset = 0x4, fixed_abs, tag = 'smem constant byte address 0x4 - core index']
  #allocation1 [shape = 'u32[144,128]{1,0:T(1,128)}', space=vmem, size = 0x12000, scoped, tag = 'internal scratch']
  %s0 = inlined_call_operand.vmem [shape: f32[2,10,10,128], index: 0, kind: input, shape index: {}]
  %s1 = inlined_call_operand.vmem [shape: f32[2,10,10,1], index: 1, kind: input, shape index: {}]
  %s2 = inlined_call_operand.vmem [shape: f32[1,128], index: 2, kind: input, shape index: {}]
  %s3 = inlined_call_operand.vmem [shape: f32[1,128], index: 3, kind: input, shape index: {}]
  %s4 = inlined_call_operand.vmem [shape: bf16[9,128,128], index: 4, kind: input, shape index: {}]
  %s5 = inlined_call_operand.hbm [shape: f32[2,8,8,128], index: 5, kind: output, shape index: {}]
  %s6 = sld [smem:[#allocation0]]
  $region53: #{upsample16_forward.9} parent=0
    _
  %s8 = ssub.s32 1, %s6
  %s9 = scalar_select 0, %s8, %s6
  $region1: #{upsample16_forward.9} parent=0
    #allocation2 [shape = 'u8[65536]{0}', space=vmem, size = 0x10000, scoped, tag = 'output window, operand 0']
    #allocation3 [shape = 's32[2]{0}', space=sflag, size = 0x8, scoped, tag = 'scoped memory for upsample16_forward.9']
    %10 = vsyncpa [#allocation3], 0
    %s11 = scalar_lea.sflag [#allocation3], 1
    %12 = vsyncpa %s11, 0
    loop: start=0, step=1, limit=4
    $region2: #{upsample16_forward.9} parent=1 // loop_pre_header
      _
    $region3: #{upsample16_forward.9} parent=1 // loop_header
      %s14 = sphi 0, %s18
      %p15 = scmp.ge.s32.totalorder %s14, 4
      %s24 = sphi 0, %s26
      %s27 = sphi 0, %s24
      %s28 = sphi 0, %s27
      %s44 = sphi 0, %s28
      %s50 = sphi 0, %s52
      %s53 = sphi 0, %s50
      %s54 = sphi 0, %s53
      %s70 = sphi 0, %s54
      %s74 = sphi 0, %s74
      %s76 = sphi 0, %s74
      %s77 = sphi 0, %s76
      %s91 = sphi 0, %s77
      %s95 = sphi 0, %s95
      %s97 = sphi 0, %s95
      %s98 = sphi 0, %s97
      %s112 = sphi 0, %s98
      %s116 = sphi 0, %s116
      %s118 = sphi 0, %s116
      %s119 = sphi 0, %s118
      %s133 = sphi 0, %s119
      %s139 = sphi 0, %s141
      %s142 = sphi 0, %s139
      %s143 = sphi 0, %s142
      %s159 = sphi 0, %s143
    $region4: #{upsample16_forward.9} parent=1 // loop_header_branch
      %17 = sbr.rel (%p15) target = $region8
    $region5: #{upsample16_forward.9} parent=1 // loop_body
      %s19 = ssub.s32 %s14, 1
      %s20 = ssub.s32 %s14, 2
      %s21 = sadd.s32 %s14, 1
      %s22 = ssub.s32 %s14, %s21
      %p23 = scmp.eq.s32.totalorder %s22, 0
      %s25 = sadd.s32 %s24, 1
      %s26 = scalar_select %p23, %s24, %s25
      %p29 = pneg %p23
      %p30 = scmp.eq.s32.totalorder %s14, 1
      %p31 = por %p29, %p30
      %p32 = scmp.ne.s32.totalorder %s24, %s27
      %p33 = scmp.eq.s32.totalorder %s14, 0
      %p34 = por %p32, %p33
      %p35 = scmp.ne.s32.totalorder %s24, %s27
      %p36 = scmp.eq.s32.totalorder %s19, 1
      %p37 = por %p35, %p36
      %p38 = scmp.ne.s32.totalorder %s27, %s28
      %p39 = scmp.eq.s32.totalorder %s19, 0
      %p40 = por %p38, %p39
      %p41 = scmp.ne.s32.totalorder %s27, %s28
      %p42 = scmp.eq.s32.totalorder %s20, 1
      %p43 = por %p41, %p42
      %p45 = scmp.ne.s32.totalorder %s28, %s44
      %p46 = scmp.eq.s32.totalorder %s20, 0
      %p47 = por %p45, %p46
      %s48 = ssub.s32 %s14, %s21
      %p49 = scmp.eq.s32.totalorder %s48, 0
      %s51 = sadd.s32 %s50, 1
      %s52 = scalar_select %p49, %s50, %s51
      %p55 = pneg %p49
      %p56 = scmp.eq.s32.totalorder %s14, 1
      %p57 = por %p55, %p56
      %p58 = scmp.ne.s32.totalorder %s50, %s53
      %p59 = scmp.eq.s32.totalorder %s14, 0
      %p60 = por %p58, %p59
      %p61 = scmp.ne.s32.totalorder %s50, %s53
      %p62 = scmp.eq.s32.totalorder %s19, 1
      %p63 = por %p61, %p62
      %p64 = scmp.ne.s32.totalorder %s53, %s54
      %p65 = scmp.eq.s32.totalorder %s19, 0
      %p66 = por %p64, %p65
      %p67 = scmp.ne.s32.totalorder %s53, %s54
      %p68 = scmp.eq.s32.totalorder %s20, 1
      %p69 = por %p67, %p68
      %p71 = scmp.ne.s32.totalorder %s54, %s70
      %p72 = scmp.eq.s32.totalorder %s20, 0
      %p73 = por %p71, %p72
      %s75 = sadd.s32 %s74, 1
      %p78 = scmp.eq.s32.totalorder %s14, 1
      %p79 = scmp.ne.s32.totalorder %s74, %s76
      %p80 = scmp.eq.s32.totalorder %s14, 0
      %p81 = por %p79, %p80
      %p82 = scmp.ne.s32.totalorder %s74, %s76
      %p83 = scmp.eq.s32.totalorder %s19, 1
      %p84 = por %p82, %p83
      %p85 = scmp.ne.s32.totalorder %s76, %s77
      %p86 = scmp.eq.s32.totalorder %s19, 0
      %p87 = por %p85, %p86
      %p88 = scmp.ne.s32.totalorder %s76, %s77
      %p89 = scmp.eq.s32.totalorder %s20, 1
      %p90 = por %p88, %p89
      %p92 = scmp.ne.s32.totalorder %s77, %s91
      %p93 = scmp.eq.s32.totalorder %s20, 0
      %p94 = por %p92, %p93
      %s96 = sadd.s32 %s95, 1
      %p99 = scmp.eq.s32.totalorder %s14, 1
      %p100 = scmp.ne.s32.totalorder %s95, %s97
      %p101 = scmp.eq.s32.totalorder %s14, 0
      %p102 = por %p100, %p101
      %p103 = scmp.ne.s32.totalorder %s95, %s97
      %p104 = scmp.eq.s32.totalorder %s19, 1
      %p105 = por %p103, %p104
      %p106 = scmp.ne.s32.totalorder %s97, %s98
      %p107 = scmp.eq.s32.totalorder %s19, 0
      %p108 = por %p106, %p107
      %p109 = scmp.ne.s32.totalorder %s97, %s98
      %p110 = scmp.eq.s32.totalorder %s20, 1
      %p111 = por %p109, %p110
      %p113 = scmp.ne.s32.totalorder %s98, %s112
      %p114 = scmp.eq.s32.totalorder %s20, 0
      %p115 = por %p113, %p114
      %s117 = sadd.s32 %s116, 1
      %p120 = scmp.eq.s32.totalorder %s14, 1
      %p121 = scmp.ne.s32.totalorder %s116, %s118
      %p122 = scmp.eq.s32.totalorder %s14, 0
      %p123 = por %p121, %p122
      %p124 = scmp.ne.s32.totalorder %s116, %s118
      %p125 = scmp.eq.s32.totalorder %s19, 1
      %p126 = por %p124, %p125
      %p127 = scmp.ne.s32.totalorder %s118, %s119
      %p128 = scmp.eq.s32.totalorder %s19, 0
      %p129 = por %p127, %p128
      %p130 = scmp.ne.s32.totalorder %s118, %s119
      %p131 = scmp.eq.s32.totalorder %s20, 1
      %p132 = por %p130, %p131
      %p134 = scmp.ne.s32.totalorder %s119, %s133
      %p135 = scmp.eq.s32.totalorder %s20, 0
      %p136 = por %p134, %p135
      %s137 = ssub.s32 %s14, %s21
      %p138 = scmp.eq.s32.totalorder %s137, 0
      %s140 = sadd.s32 %s139, 1
      %s141 = scalar_select %p138, %s139, %s140
      %p144 = pneg %p138
      %p145 = scmp.eq.s32.totalorder %s14, 1
      %p146 = por %p144, %p145
      %p147 = scmp.ne.s32.totalorder %s139, %s142
      %p148 = scmp.eq.s32.totalorder %s14, 0
      %p149 = por %p147, %p148
      %p150 = scmp.ne.s32.totalorder %s139, %s142
      %p151 = scmp.eq.s32.totalorder %s19, 1
      %p152 = por %p150, %p151
      %p153 = scmp.ne.s32.totalorder %s142, %s143
      %p154 = scmp.eq.s32.totalorder %s19, 0
      %p155 = por %p153, %p154
      %p156 = scmp.ne.s32.totalorder %s142, %s143
      %p157 = scmp.eq.s32.totalorder %s20, 1
      %p158 = por %p156, %p157
      %p160 = scmp.ne.s32.totalorder %s143, %s159
      %p161 = scmp.eq.s32.totalorder %s20, 0
      %p162 = por %p160, %p161
      %p163 = scmp.le.s32.totalorder 1, %s14
      %p164 = scmp.lt.s32.totalorder %s14, 3
      %p165 = pnand %p163, %p164
      %p166 = pneg %p165
      // Predicated region
      $region9: #{upsample16_forward.9} parent=5 // pred_check
        _
      $region10: #{upsample16_forward.9} parent=5 // pred_check_branch
        %168 = sbr.rel (%p165) target = $region12
      $region11: #{upsample16_forward.9} parent=5 // pred_region
        %s169 = ssub.s32 %s14, 1
        // Predicated region
        $region13: #{upsample16_forward.9} parent=11 // pred_check
          %p170 = pneg %p87
        $region14: #{upsample16_forward.9} parent=11 // pred_check_branch
          %172 = sbr.rel (%p170) target = $region16
        $region15: #{upsample16_forward.9} parent=11 // pred_region
          _
        $region16: #{upsample16_forward.9} parent=11 // pred_fallthru
          _
        // Predicated region
        $region17: #{upsample16_forward.9} parent=11 // pred_check
          %p173 = pneg %p108
        $region18: #{upsample16_forward.9} parent=11 // pred_check_branch
          %175 = sbr.rel (%p173) target = $region20
        $region19: #{upsample16_forward.9} parent=11 // pred_region
          _
        $region20: #{upsample16_forward.9} parent=11 // pred_fallthru
          _
        // Predicated region
        $region21: #{upsample16_forward.9} parent=11 // pred_check
          %p176 = pneg %p129
        $region22: #{upsample16_forward.9} parent=11 // pred_check_branch
          %178 = sbr.rel (%p176) target = $region24
        $region23: #{upsample16_forward.9} parent=11 // pred_region
          _
        $region24: #{upsample16_forward.9} parent=11 // pred_fallthru
          _
      $region12: #{upsample16_forward.9} parent=5 // pred_fallthru
        _
      %p179 = scmp.lt.s32.totalorder %s14, 2
      // Predicated region
      $region25: #{upsample16_forward.9} parent=5 // pred_check
        %p180 = pneg %p179
      $region26: #{upsample16_forward.9} parent=5 // pred_check_branch
        %182 = sbr.rel (%p180) target = $region28
      $region27: #{upsample16_forward.9} parent=5 // pred_region
        // Predicated region
        $region29: #{upsample16_forward.9} parent=27 // pred_check
          %p183 = pneg %p34
        $region30: #{upsample16_forward.9} parent=27 // pred_check_branch
          %185 = sbr.rel (%p183) target = $region32
        $region31: #{upsample16_forward.9} parent=27 // pred_region
          %p186 = scmp.lt.s32.totalorder %s14, 1
          %s187 = scalar_select %p186, %s14, 1
          %s188 = smul.addr %s187, 20
          %s189 = smul.addr %s188, 8
          %s190 = scalar_lea.vmem %s0, %s189
        $region32: #{upsample16_forward.9} parent=27 // pred_fallthru
          _
        // Predicated region
        $region33: #{upsample16_forward.9} parent=27 // pred_check
          %p191 = pneg %p60
        $region34: #{upsample16_forward.9} parent=27 // pred_check_branch
          %193 = sbr.rel (%p191) target = $region36
        $region35: #{upsample16_forward.9} parent=27 // pred_region
          %p194 = scmp.lt.s32.totalorder %s14, 1
          %s195 = scalar_select %p194, %s14, 1
          %s196 = smul.addr %s195, 20
          %s197 = smul.addr %s196, 8
          %s198 = scalar_lea.vmem %s1, %s197
        $region36: #{upsample16_forward.9} parent=27 // pred_fallthru
          _
      $region28: #{upsample16_forward.9} parent=5 // pred_fallthru
        _
      %p199 = scmp.le.s32.totalorder 1, %s14
      %p200 = scmp.lt.s32.totalorder %s14, 3
      %p201 = pnand %p199, %p200
      %p202 = pneg %p201
      // Predicated region
      $region37: #{upsample16_forward.9} parent=5 // pred_check
        _
      $region38: #{upsample16_forward.9} parent=5 // pred_check_branch
        %204 = sbr.rel (%p201) target = $region40
      $region39: #{upsample16_forward.9} parent=5 // pred_region
        %s205 = ssub.s32 %s14, 1
        %p206 = scmp.lt.s32.totalorder %s19, 1
        %s207 = scalar_select %p206, %s19, 1
        %s208 = smul.addr %s207, 20
        %s209 = smul.addr %s208, 8
        %s210 = scalar_lea.vmem %s0, %s209
        %p211 = pneg %p40
        %p212 = pneg %p37
        %p213 = scmp.lt.s32.totalorder %s19, 1
        %s214 = scalar_select %p213, %s19, 1
        %s215 = smul.addr %s214, 20
        %s216 = smul.addr %s215, 8
        %s217 = scalar_lea.vmem %s1, %s216
        %p218 = pneg %p66
        %p219 = pneg %p63
        %p220 = pneg %p87
        %p221 = pneg %p84
        %p222 = pneg %p108
        %p223 = pneg %p105
        %p224 = pneg %p129
        %p225 = pneg %p126
        %p226 = pneg %p155
        %p227 = pneg %p152
        %s228 = sand.u32 %s142, 1
        %s229 = scalar_lea.sflag [#allocation3], %s228
        %s230 = sand.u32 %s142, 1
        %s231 = smul.addr %s230, 64
        %s232 = scalar_lea.vmem [#allocation2], %s231
        %p233 = scmp.lt.s32.totalorder %s19, 1
        %s234 = scalar_select %p233, %s19, 1
        %s235 = smul.addr %s234, 20
        %s236 = smul.addr %s235, 8
        %s237 = scalar_lea.vmem %s0, %s236
        %p238 = scmp.lt.s32.totalorder %s19, 1
        %s239 = scalar_select %p238, %s19, 1
        %s240 = smul.addr %s239, 20
        %s241 = smul.addr %s240, 8
        %s242 = scalar_lea.vmem %s1, %s241
        %v244 = vld [vmem:[%s237] sm:$0xff]
        %v245 = vld [vmem:[%s237 + $0x8] sm:$0x3]
        %v246 = vld [vmem:[%s237 + $0x10] sm:$0xff]
        %v247 = vld [vmem:[%s237 + $0x18] sm:$0x3]
        %v248 = vld [vmem:[%s237 + $0x20] sm:$0xff]
        %v249 = vld [vmem:[%s237 + $0x28] sm:$0x3]
        %v250 = vld [vmem:[%s237 + $0x30] sm:$0xff]
        %v251 = vld [vmem:[%s237 + $0x38] sm:$0x3]
        %v252 = vld [vmem:[%s237 + $0x40] sm:$0xff]
        %v253 = vld [vmem:[%s237 + $0x48] sm:$0x3]
        %v254 = vld [vmem:[%s237 + $0x50] sm:$0xff]
        %v255 = vld [vmem:[%s237 + $0x58] sm:$0x3]
        %v256 = vld [vmem:[%s237 + $0x60] sm:$0xff]
        %v257 = vld [vmem:[%s237 + $0x68] sm:$0x3]
        %v258 = vld [vmem:[%s237 + $0x70] sm:$0xff]
        %v259 = vld [vmem:[%s237 + $0x78] sm:$0x3]
        %v260 = vld [vmem:[%s237 + $0x80] sm:$0xff]
        %v261 = vld [vmem:[%s237 + $0x88] sm:$0x3]
        %v262 = vld [vmem:[%s237 + $0x90] sm:$0xff]
        %v263 = vld [vmem:[%s237 + $0x98] sm:$0x3]
        %v264 = vld [vmem:[%s242] sm:$0xff]
        %v265 = vld [vmem:[%s242 + $0x8] sm:$0x3]
        %v266 = vld [vmem:[%s242 + $0x10] sm:$0xff]
        %v267 = vld [vmem:[%s242 + $0x18] sm:$0x3]
        %v268 = vld [vmem:[%s242 + $0x20] sm:$0xff]
        %v269 = vld [vmem:[%s242 + $0x28] sm:$0x3]
        %v270 = vld [vmem:[%s242 + $0x30] sm:$0xff]
        %v271 = vld [vmem:[%s242 + $0x38] sm:$0x3]
        %v272 = vld [vmem:[%s242 + $0x40] sm:$0xff]
        %v273 = vld [vmem:[%s242 + $0x48] sm:$0x3]
        %v274 = vld [vmem:[%s242 + $0x50] sm:$0xff]
        %v275 = vld [vmem:[%s242 + $0x58] sm:$0x3]
        %v276 = vld [vmem:[%s242 + $0x60] sm:$0xff]
        %v277 = vld [vmem:[%s242 + $0x68] sm:$0x3]
        %v278 = vld [vmem:[%s242 + $0x70] sm:$0xff]
        %v279 = vld [vmem:[%s242 + $0x78] sm:$0x3]
        %v280 = vld [vmem:[%s242 + $0x80] sm:$0xff]
        %v281 = vld [vmem:[%s242 + $0x88] sm:$0x3]
        %v282 = vld [vmem:[%s242 + $0x90] sm:$0xff]
        %v283 = vld [vmem:[%s242 + $0x98] sm:$0x3]
        %v284 = vlaneseq
        %v285 = vshrl.u32 %v284, 7
        %v286 = vadd.s32 %v285, 8
        %v287 = vlaneseq
        %v288 = vand.u32 %v287, 127
        %vm289 = vcmp.ge.s32.totalorder %v285, 1
        %vm290 = vcmp.ge.s32.totalorder %v286, 1
        %vm291 = vcmp.le.s32.totalorder %v285, 8
        %vm292 = vcmp.le.s32.totalorder %v286, 8
        %vm293 = vmand %vm289, %vm291
        %vm294 = vmand %vm290, %vm292
        %vm295 = vcmp.ge.s32.totalorder %v288, 1
        %vm296 = vmand %vm293, %vm295
        %vm297 = vmand %vm294, %vm295
        %vm298 = vcmp.le.s32.totalorder %v288, 8
        %vm299 = vmand %vm296, %vm298
        %vm300 = vmand %vm297, %vm298
        %v301 = vsel %vm299, 1, 0
        %v302 = vsel %vm300, 1, 0
        %v303 = vcvt.s32.f32 %v301
        %v304 = vcvt.s32.f32 %v302
        %v305 = vadd.f32 %v264, 1.0
        %v306 = vadd.f32 %v265, 1.0
        %v307 = vadd.f32 %v266, 1.0
        %v308 = vadd.f32 %v267, 1.0
        %v309 = vadd.f32 %v268, 1.0
        %v310 = vadd.f32 %v269, 1.0
        %v311 = vadd.f32 %v270, 1.0
        %v312 = vadd.f32 %v271, 1.0
        %v313 = vadd.f32 %v272, 1.0
        %v314 = vadd.f32 %v273, 1.0
        %v315 = vadd.f32 %v274, 1.0
        %v316 = vadd.f32 %v275, 1.0
        %v317 = vadd.f32 %v276, 1.0
        %v318 = vadd.f32 %v277, 1.0
        %v319 = vadd.f32 %v278, 1.0
        %v320 = vadd.f32 %v279, 1.0
        %v321 = vadd.f32 %v280, 1.0
        %v322 = vadd.f32 %v281, 1.0
        %v323 = vadd.f32 %v282, 1.0
        %v324 = vadd.f32 %v283, 1.0
        %326 = vset.pattern.permute.xlu0 0
        %327 = vperm.xlu0 %326, %v305
        %v328 = vpop.permute.xlu0 %327
        %331 = vset.pattern.permute.xlu0 0
        %332 = vperm.xlu0 %331, %v306
        %v333 = vpop.permute.xlu0 %332
        %336 = vset.pattern.permute.xlu0 0
        %337 = vperm.xlu0 %336, %v307
        %v338 = vpop.permute.xlu0 %337
        %341 = vset.pattern.permute.xlu0 0
        %342 = vperm.xlu0 %341, %v308
        %v343 = vpop.permute.xlu0 %342
        %346 = vset.pattern.permute.xlu0 0
        %347 = vperm.xlu0 %346, %v309
        %v348 = vpop.permute.xlu0 %347
        %351 = vset.pattern.permute.xlu0 0
        %352 = vperm.xlu0 %351, %v310
        %v353 = vpop.permute.xlu0 %352
        %356 = vset.pattern.permute.xlu0 0
        %357 = vperm.xlu0 %356, %v311
        %v358 = vpop.permute.xlu0 %357
        %361 = vset.pattern.permute.xlu0 0
        %362 = vperm.xlu0 %361, %v312
        %v363 = vpop.permute.xlu0 %362
        %366 = vset.pattern.permute.xlu0 0
        %367 = vperm.xlu0 %366, %v313
        %v368 = vpop.permute.xlu0 %367
        %371 = vset.pattern.permute.xlu0 0
        %372 = vperm.xlu0 %371, %v314
        %v373 = vpop.permute.xlu0 %372
        %376 = vset.pattern.permute.xlu0 0
        %377 = vperm.xlu0 %376, %v315
        %v378 = vpop.permute.xlu0 %377
        %381 = vset.pattern.permute.xlu0 0
        %382 = vperm.xlu0 %381, %v316
        %v383 = vpop.permute.xlu0 %382
        %386 = vset.pattern.permute.xlu0 0
        %387 = vperm.xlu0 %386, %v317
        %v388 = vpop.permute.xlu0 %387
        %391 = vset.pattern.permute.xlu0 0
        %392 = vperm.xlu0 %391, %v318
        %v393 = vpop.permute.xlu0 %392
        %396 = vset.pattern.permute.xlu0 0
        %397 = vperm.xlu0 %396, %v319
        %v398 = vpop.permute.xlu0 %397
        %401 = vset.pattern.permute.xlu0 0
        %402 = vperm.xlu0 %401, %v320
        %v403 = vpop.permute.xlu0 %402
        %406 = vset.pattern.permute.xlu0 0
        %407 = vperm.xlu0 %406, %v321
        %v408 = vpop.permute.xlu0 %407
        %411 = vset.pattern.permute.xlu0 0
        %412 = vperm.xlu0 %411, %v322
        %v413 = vpop.permute.xlu0 %412
        %416 = vset.pattern.permute.xlu0 0
        %417 = vperm.xlu0 %416, %v323
        %v418 = vpop.permute.xlu0 %417
        %421 = vset.pattern.permute.xlu0 0
        %422 = vperm.xlu0 %421, %v324
        %v423 = vpop.permute.xlu0 %422
        %v425 = vmul.f32 %v244, %v328
        %v426 = vmul.f32 %v245, %v333
        %v427 = vmul.f32 %v246, %v338
        %v428 = vmul.f32 %v247, %v343
        %v429 = vmul.f32 %v248, %v348
        %v430 = vmul.f32 %v249, %v353
        %v431 = vmul.f32 %v250, %v358
        %v432 = vmul.f32 %v251, %v363
        %v433 = vmul.f32 %v252, %v368
        %v434 = vmul.f32 %v253, %v373
        %v435 = vmul.f32 %v254, %v378
        %v436 = vmul.f32 %v255, %v383
        %v437 = vmul.f32 %v256, %v388
        %v438 = vmul.f32 %v257, %v393
        %v439 = vmul.f32 %v258, %v398
        %v440 = vmul.f32 %v259, %v403
        %v441 = vmul.f32 %v260, %v408
        %v442 = vmul.f32 %v261, %v413
        %v443 = vmul.f32 %v262, %v418
        %v444 = vmul.f32 %v263, %v423
        %v445 = vld [vmem:[%s2] sm:$0x1]
        %v447 = vlaneseq
        %v448 = vshrl.u32 %v447, 7
        %v449 = vsub.s32 0, %v448
        %v450 = vrot.slane %v445, %v449
        %v452 = vmul.f32 %v425, %v450
        %v453 = vmul.f32 %v426, %v450
        %v454 = vmul.f32 %v427, %v450
        %v455 = vmul.f32 %v428, %v450
        %v456 = vmul.f32 %v429, %v450
        %v457 = vmul.f32 %v430, %v450
        %v458 = vmul.f32 %v431, %v450
        %v459 = vmul.f32 %v432, %v450
        %v460 = vmul.f32 %v433, %v450
        %v461 = vmul.f32 %v434, %v450
        %v462 = vmul.f32 %v435, %v450
        %v463 = vmul.f32 %v436, %v450
        %v464 = vmul.f32 %v437, %v450
        %v465 = vmul.f32 %v438, %v450
        %v466 = vmul.f32 %v439, %v450
        %v467 = vmul.f32 %v440, %v450
        %v468 = vmul.f32 %v441, %v450
        %v469 = vmul.f32 %v442, %v450
        %v470 = vmul.f32 %v443, %v450
        %v471 = vmul.f32 %v444, %v450
        %v472 = vld [vmem:[%s3] sm:$0x1]
        %v474 = vlaneseq
        %v475 = vshrl.u32 %v474, 7
        %v476 = vsub.s32 0, %v475
        %v477 = vrot.slane %v472, %v476
        %v479 = vadd.f32 %v452, %v477
        %v480 = vadd.f32 %v453, %v477
        %v481 = vadd.f32 %v454, %v477
        %v482 = vadd.f32 %v455, %v477
        %v483 = vadd.f32 %v456, %v477
        %v484 = vadd.f32 %v457, %v477
        %v485 = vadd.f32 %v458, %v477
        %v486 = vadd.f32 %v459, %v477
        %v487 = vadd.f32 %v460, %v477
        %v488 = vadd.f32 %v461, %v477
        %v489 = vadd.f32 %v462, %v477
        %v490 = vadd.f32 %v463, %v477
        %v491 = vadd.f32 %v464, %v477
        %v492 = vadd.f32 %v465, %v477
        %v493 = vadd.f32 %v466, %v477
        %v494 = vadd.f32 %v467, %v477
        %v495 = vadd.f32 %v468, %v477
        %v496 = vadd.f32 %v469, %v477
        %v497 = vadd.f32 %v470, %v477
        %v498 = vadd.f32 %v471, %v477
        %v499 = vmax.f32 %v479, 0.0
        %v500 = vmax.f32 %v480, 0.0
        %v501 = vmax.f32 %v481, 0.0
        %v502 = vmax.f32 %v482, 0.0
        %v503 = vmax.f32 %v483, 0.0
        %v504 = vmax.f32 %v484, 0.0
        %v505 = vmax.f32 %v485, 0.0
        %v506 = vmax.f32 %v486, 0.0
        %v507 = vmax.f32 %v487, 0.0
        %v508 = vmax.f32 %v488, 0.0
        %v509 = vmax.f32 %v489, 0.0
        %v510 = vmax.f32 %v490, 0.0
        %v511 = vmax.f32 %v491, 0.0
        %v512 = vmax.f32 %v492, 0.0
        %v513 = vmax.f32 %v493, 0.0
        %v514 = vmax.f32 %v494, 0.0
        %v515 = vmax.f32 %v495, 0.0
        %v516 = vmax.f32 %v496, 0.0
        %v517 = vmax.f32 %v497, 0.0
        %v518 = vmax.f32 %v498, 0.0
        %v519 = vlaneseq
        %v520 = vshrl.u32 %v519, 7
        %v521 = vsub.s32 0, %v520
        %v522 = vrot.slane %v303, %v521
        %524 = vbcast.lane.b32.xlu0 %v522, 256
        %v525 = vpop.permute.xlu0 %524
        %s527 = sor.u32 256, 8
        %528 = vbcast.lane.b32.xlu0 %v522, %s527
        %v529 = vpop.permute.xlu0 %528
        %v530 = vlaneseq
        %v531 = vshrl.u32 %v530, 7
        %v532 = vsub.s32 1, %v531
        %v533 = vrot.slane %v303, %v532
        %535 = vbcast.lane.b32.xlu0 %v533, 256
        %v536 = vpop.permute.xlu0 %535
        %s538 = sor.u32 256, 8
        %539 = vbcast.lane.b32.xlu0 %v533, %s538
        %v540 = vpop.permute.xlu0 %539
        %v541 = vlaneseq
        %v542 = vshrl.u32 %v541, 7
        %v543 = vsub.s32 2, %v542
        %v544 = vrot.slane %v303, %v543
        %546 = vbcast.lane.b32.xlu0 %v544, 256
        %v547 = vpop.permute.xlu0 %546
        %s549 = sor.u32 256, 8
        %550 = vbcast.lane.b32.xlu0 %v544, %s549
        %v551 = vpop.permute.xlu0 %550
        %v552 = vlaneseq
        %v553 = vshrl.u32 %v552, 7
        %v554 = vsub.s32 3, %v553
        %v555 = vrot.slane %v303, %v554
        %557 = vbcast.lane.b32.xlu0 %v555, 256
        %v558 = vpop.permute.xlu0 %557
        %s560 = sor.u32 256, 8
        %561 = vbcast.lane.b32.xlu0 %v555, %s560
        %v562 = vpop.permute.xlu0 %561
        %v563 = vlaneseq
        %v564 = vshrl.u32 %v563, 7
        %v565 = vsub.s32 4, %v564
        %v566 = vrot.slane %v303, %v565
        %568 = vbcast.lane.b32.xlu0 %v566, 256
        %v569 = vpop.permute.xlu0 %568
        %s571 = sor.u32 256, 8
        %572 = vbcast.lane.b32.xlu0 %v566, %s571
        %v573 = vpop.permute.xlu0 %572
        %v574 = vlaneseq
        %v575 = vshrl.u32 %v574, 7
        %v576 = vsub.s32 5, %v575
        %v577 = vrot.slane %v303, %v576
        %579 = vbcast.lane.b32.xlu0 %v577, 256
        %v580 = vpop.permute.xlu0 %579
        %s582 = sor.u32 256, 8
        %583 = vbcast.lane.b32.xlu0 %v577, %s582
        %v584 = vpop.permute.xlu0 %583
        %v585 = vlaneseq
        %v586 = vshrl.u32 %v585, 7
        %v587 = vsub.s32 6, %v586
        %v588 = vrot.slane %v303, %v587
        %590 = vbcast.lane.b32.xlu0 %v588, 256
        %v591 = vpop.permute.xlu0 %590
        %s593 = sor.u32 256, 8
        %594 = vbcast.lane.b32.xlu0 %v588, %s593
        %v595 = vpop.permute.xlu0 %594
        %v596 = vlaneseq
        %v597 = vshrl.u32 %v596, 7
        %v598 = vsub.s32 7, %v597
        %v599 = vrot.slane %v303, %v598
        %601 = vbcast.lane.b32.xlu0 %v599, 256
        %v602 = vpop.permute.xlu0 %601
        %s604 = sor.u32 256, 8
        %605 = vbcast.lane.b32.xlu0 %v599, %s604
        %v606 = vpop.permute.xlu0 %605
        %v607 = vlaneseq
        %v608 = vshrl.u32 %v607, 7
        %v609 = vsub.s32 0, %v608
        %v610 = vrot.slane %v304, %v609
        %612 = vbcast.lane.b32.xlu0 %v610, 256
        %v613 = vpop.permute.xlu0 %612
        %s615 = sor.u32 256, 8
        %616 = vbcast.lane.b32.xlu0 %v610, %s615
        %v617 = vpop.permute.xlu0 %616
        %v618 = vlaneseq
        %v619 = vshrl.u32 %v618, 7
        %v620 = vsub.s32 1, %v619
        %v621 = vrot.slane %v304, %v620
        %623 = vbcast.lane.b32.xlu0 %v621, 256
        %v624 = vpop.permute.xlu0 %623
        %s626 = sor.u32 256, 8
        %627 = vbcast.lane.b32.xlu0 %v621, %s626
        %v628 = vpop.permute.xlu0 %627
        %v629 = vmul.f32 %v499, %v525
        %v630 = vmul.f32 %v500, %v529
        %v631 = vmul.f32 %v501, %v536
        %v632 = vmul.f32 %v502, %v540
        %v633 = vmul.f32 %v503, %v547
        %v634 = vmul.f32 %v504, %v551
        %v635 = vmul.f32 %v505, %v558
        %v636 = vmul.f32 %v506, %v562
        %v637 = vmul.f32 %v507, %v569
        %v638 = vmul.f32 %v508, %v573
        %v639 = vmul.f32 %v509, %v580
        %v640 = vmul.f32 %v510, %v584
        %v641 = vmul.f32 %v511, %v591
        %v642 = vmul.f32 %v512, %v595
        %v643 = vmul.f32 %v513, %v602
        %v644 = vmul.f32 %v514, %v606
        %v645 = vmul.f32 %v515, %v613
        %v646 = vmul.f32 %v516, %v617
        %v647 = vmul.f32 %v517, %v624
        %v648 = vmul.f32 %v518, %v628
        %v649 = vpack.c.bf16 %v630, %v629
        %v650 = vpack.c.bf16 %v632, %v631
        %v651 = vpack.c.bf16 %v634, %v633
        %v652 = vpack.c.bf16 %v636, %v635
        %v653 = vpack.c.bf16 %v638, %v637
        %v654 = vpack.c.bf16 %v640, %v639
        %v655 = vpack.c.bf16 %v642, %v641
        %v656 = vpack.c.bf16 %v644, %v643
        %v657 = vpack.c.bf16 %v646, %v645
        %v658 = vpack.c.bf16 %v648, %v647
        %v659 = vld [vmem:[%s4] sm:$0xf]
        %v660 = vld [vmem:[%s4 + $0x4] sm:$0xf]
        %v661 = vld [vmem:[%s4 + $0x8] sm:$0xf]
        %v662 = vld [vmem:[%s4 + $0xc] sm:$0xf]
        %v663 = vld [vmem:[%s4 + $0x10] sm:$0xf]
        %v664 = vld [vmem:[%s4 + $0x14] sm:$0xf]
        %v665 = vld [vmem:[%s4 + $0x18] sm:$0xf]
        %v666 = vld [vmem:[%s4 + $0x1c] sm:$0xf]
        %v667 = vld [vmem:[%s4 + $0x20] sm:$0xf]
        %v668 = vld [vmem:[%s4 + $0x24] sm:$0xf]
        %v669 = vld [vmem:[%s4 + $0x28] sm:$0xf]
        %v670 = vld [vmem:[%s4 + $0x2c] sm:$0xf]
        %v671 = vld [vmem:[%s4 + $0x30] sm:$0xf]
        %v672 = vld [vmem:[%s4 + $0x34] sm:$0xf]
        %v673 = vld [vmem:[%s4 + $0x38] sm:$0xf]
        %v674 = vld [vmem:[%s4 + $0x3c] sm:$0xf]
        %v683 = vunpack.c.l.b16 %v649
        %v684 = vunpack.c.h.b16 %v649
        %v685 = vunpack.c.l.b16 %v650
        %v686 = vunpack.c.h.b16 %v650
        %v687 = vunpack.c.l.b16 %v651
        %v688 = vunpack.c.h.b16 %v651
        %v689 = vunpack.c.l.b16 %v652
        %v690 = vunpack.c.h.b16 %v652
        %v691 = vunpack.c.l.b16 %v653
        %v692 = vunpack.c.h.b16 %v653
        %v693 = vunpack.c.l.b16 %v654
        %v694 = vunpack.c.h.b16 %v654
        %v695 = vunpack.c.l.b16 %v655
        %v696 = vunpack.c.h.b16 %v655
        %v697 = vunpack.c.l.b16 %v656
        %v698 = vunpack.c.h.b16 %v656
        %v699 = vpack.c.b16 %v683, %v683
        %v700 = vpack.c.b16 %v684, %v684
        %v701 = vpack.c.b16 %v685, %v685
        %v702 = vpack.c.b16 %v686, %v686
        %v703 = vpack.c.b16 %v687, %v687
        %v704 = vpack.c.b16 %v688, %v688
        %v705 = vpack.c.b16 %v689, %v689
        %v706 = vpack.c.b16 %v690, %v690
        %v707 = vpack.c.b16 %v691, %v691
        %v708 = vpack.c.b16 %v692, %v692
        %v709 = vpack.c.b16 %v693, %v693
        %v710 = vpack.c.b16 %v694, %v694
        %v711 = vpack.c.b16 %v695, %v695
        %v712 = vpack.c.b16 %v696, %v696
        %v713 = vpack.c.b16 %v697, %v697
        %v714 = vpack.c.b16 %v698, %v698
        %vm715 = vsmask.f32 3328
        %vm716 = vsmask.f32 7440
        %vm717 = vmor %vm715, %vm716
        %v719 = vshrl.u32 %v699, 16
        %v721 = vrot.slane %v719, 4
        %v722 = vshll.u32 %v699, 16
        %v724 = vrot.slane %v722, 5
        %v725 = vor.u32 %v721, %v724
        %v726 = vrot.slane %v725, 4
        %v728 = vshll.u32 %v700, 16
        %v730 = vrot.slane %v728, 5
        %v731 = vsel %vm717, %v726, %v730
        %v733 = vshrl.u32 %v701, 16
        %v735 = vrot.slane %v733, 4
        %v736 = vshll.u32 %v701, 16
        %v738 = vrot.slane %v736, 5
        %v739 = vor.u32 %v735, %v738
        %v740 = vrot.slane %v739, 4
        %v742 = vshll.u32 %v702, 16
        %v744 = vrot.slane %v742, 5
        %v745 = vsel %vm717, %v740, %v744
        %v747 = vshrl.u32 %v703, 16
        %v749 = vrot.slane %v747, 4
        %v750 = vshll.u32 %v703, 16
        %v752 = vrot.slane %v750, 5
        %v753 = vor.u32 %v749, %v752
        %v754 = vrot.slane %v753, 4
        %v756 = vshll.u32 %v704, 16
        %v758 = vrot.slane %v756, 5
        %v759 = vsel %vm717, %v754, %v758
        %v761 = vshrl.u32 %v705, 16
        %v763 = vrot.slane %v761, 4
        %v764 = vshll.u32 %v705, 16
        %v766 = vrot.slane %v764, 5
        %v767 = vor.u32 %v763, %v766
        %v768 = vrot.slane %v767, 4
        %v770 = vshll.u32 %v706, 16
        %v772 = vrot.slane %v770, 5
        %v773 = vsel %vm717, %v768, %v772
        %v775 = vshrl.u32 %v707, 16
        %v777 = vrot.slane %v775, 4
        %v778 = vshll.u32 %v707, 16
        %v780 = vrot.slane %v778, 5
        %v781 = vor.u32 %v777, %v780
        %v782 = vrot.slane %v781, 4
        %v784 = vshll.u32 %v708, 16
        %v786 = vrot.slane %v784, 5
        %v787 = vsel %vm717, %v782, %v786
        %v789 = vshrl.u32 %v709, 16
        %v791 = vrot.slane %v789, 4
        %v792 = vshll.u32 %v709, 16
        %v794 = vrot.slane %v792, 5
        %v795 = vor.u32 %v791, %v794
        %v796 = vrot.slane %v795, 4
        %v798 = vshll.u32 %v710, 16
        %v800 = vrot.slane %v798, 5
        %v801 = vsel %vm717, %v796, %v800
        %v803 = vshrl.u32 %v711, 16
        %v805 = vrot.slane %v803, 4
        %v806 = vshll.u32 %v711, 16
        %v808 = vrot.slane %v806, 5
        %v809 = vor.u32 %v805, %v808
        %v810 = vrot.slane %v809, 4
        %v812 = vshll.u32 %v712, 16
        %v814 = vrot.slane %v812, 5
        %v815 = vsel %vm717, %v810, %v814
        %v817 = vshrl.u32 %v713, 16
        %v819 = vrot.slane %v817, 4
        %v820 = vshll.u32 %v713, 16
        %v822 = vrot.slane %v820, 5
        %v823 = vor.u32 %v819, %v822
        %v824 = vrot.slane %v823, 4
        %v826 = vshll.u32 %v714, 16
        %v828 = vrot.slane %v826, 5
        %v829 = vsel %vm717, %v824, %v828
        %s830 = scalar_lea.vmem %s4, 64
        %v831 = vld [vmem:[%s830] sm:$0xf]
        %v832 = vld [vmem:[%s830 + $0x4] sm:$0xf]
        %v833 = vld [vmem:[%s830 + $0x8] sm:$0xf]
        %v834 = vld [vmem:[%s830 + $0xc] sm:$0xf]
        %v835 = vld [vmem:[%s830 + $0x10] sm:$0xf]
        %v836 = vld [vmem:[%s830 + $0x14] sm:$0xf]
        %v837 = vld [vmem:[%s830 + $0x18] sm:$0xf]
        %v838 = vld [vmem:[%s830 + $0x1c] sm:$0xf]
        %v839 = vld [vmem:[%s830 + $0x20] sm:$0xf]
        %v840 = vld [vmem:[%s830 + $0x24] sm:$0xf]
        %v841 = vld [vmem:[%s830 + $0x28] sm:$0xf]
        %v842 = vld [vmem:[%s830 + $0x2c] sm:$0xf]
        %v843 = vld [vmem:[%s830 + $0x30] sm:$0xf]
        %v844 = vld [vmem:[%s830 + $0x34] sm:$0xf]
        %v845 = vld [vmem:[%s830 + $0x38] sm:$0xf]
        %v846 = vld [vmem:[%s830 + $0x3c] sm:$0xf]
        %v847 = vunpack.c.l.b16 %v731
        %v848 = vunpack.c.l.b16 %v745
        %v849 = vunpack.c.l.b16 %v759
        %v850 = vunpack.c.l.b16 %v773
        %v851 = vunpack.c.l.b16 %v787
        %v852 = vunpack.c.l.b16 %v801
        %v853 = vunpack.c.l.b16 %v815
        %v854 = vunpack.c.l.b16 %v829
        %v855 = vpack.c.b16 %v848, %v847
        %v856 = vpack.c.b16 %v850, %v849
        %v857 = vpack.c.b16 %v852, %v851
        %v858 = vpack.c.b16 %v854, %v853
        %v879 = vunpack.c.l.b16 %v831
        %v880 = vunpack.c.l.b16 %v832
        %v881 = vunpack.c.l.b16 %v833
        %v882 = vunpack.c.l.b16 %v834
        %v883 = vunpack.c.l.b16 %v835
        %v884 = vunpack.c.l.b16 %v836
        %v885 = vunpack.c.l.b16 %v837
        %v886 = vunpack.c.l.b16 %v838
        %v887 = vunpack.c.l.b16 %v839
        %v888 = vunpack.c.l.b16 %v840
        %v889 = vunpack.c.l.b16 %v841
        %v890 = vunpack.c.l.b16 %v842
        %v891 = vunpack.c.l.b16 %v843
        %v892 = vunpack.c.l.b16 %v844
        %v893 = vunpack.c.l.b16 %v845
        %v894 = vunpack.c.l.b16 %v846
        %v895 = vpack.c.b16 %v880, %v879
        %v896 = vpack.c.b16 %v882, %v881
        %v897 = vpack.c.b16 %v884, %v883
        %v898 = vpack.c.b16 %v886, %v885
        %v899 = vpack.c.b16 %v888, %v887
        %v900 = vpack.c.b16 %v890, %v889
        %v901 = vpack.c.b16 %v892, %v891
        %v902 = vpack.c.b16 %v894, %v893
        %911 = vmatprep.subr.bf16.mxu0 0
        %912 = vmatpush1.bf16.msra.mxu0 %v902
        %913 = vmatprep.subr.bf16.mxu0 0
        %914 = vmatpush1.bf16.msra.mxu0 %v901
        %915 = vmatprep.subr.bf16.mxu0 0
        %916 = vmatpush1.bf16.msra.mxu0 %v900
        %917 = vmatprep.subr.bf16.mxu0 0
        %918 = vmatpush1.bf16.msra.mxu0 %v899
        %919 = vmatprep.subr.bf16.mxu0 0
        %920 = vmatpush1.bf16.msra.mxu0 %v898
        %921 = vmatprep.subr.bf16.mxu0 0
        %922 = vmatpush1.bf16.msra.mxu0 %v897
        %923 = vmatprep.subr.bf16.mxu0 0
        %924 = vmatpush1.bf16.msra.mxu0 %v896
        %925 = vmatprep.subr.bf16.mxu0 0
        %926 = vmatpush1.bf16.msra.mxu0 %v895
        %927 = vmatprep.subr.bf16.mxu0 0
        %928 = vmatpush2.bf16.msra.mxu0 0
        %929 = vmatprep.subr.bf16.mxu0 0
        %930 = vmatpush2.bf16.msra.mxu0 0
        %931 = vmatprep.subr.bf16.mxu0 0
        %932 = vmatpush2.bf16.msra.mxu0 0
        %933 = vmatprep.subr.bf16.mxu0 0
        %934 = vmatpush2.bf16.msra.mxu0 0
        %935 = vmatprep.subr.bf16.mxu0 0
        %936 = vmatpush2.bf16.msra.mxu0 0
        %937 = vmatprep.subr.bf16.mxu0 0
        %938 = vmatpush2.bf16.msra.mxu0 0
        %939 = vmatprep.subr.bf16.mxu0 0
        %940 = vmatpush2.bf16.msra.mxu0 0
        %941 = vmatprep.subr.bf16.mxu0 0
        %942 = vmatpush2.bf16.msra.mxu0 0
        %943 = vmatprep.mubr.bf16.mxu0 0
        %944 = vmatmul.mubr.bf16.gmra.mxu0 %v855
        %v945 = vpop.f32.mrf.mxu0
        %v946 = vadd.f32 0.0, %v945
        %v947 = vpop.f32.mrf.mxu0
        %v948 = vpop.f32.mrf.mxu0
        %v949 = vadd.f32 0.0, %v948
        %v950 = vpop.f32.mrf.mxu0
        %951 = vmatprep.mubr.bf16.mxu0 0
        %952 = vmatmul.mubr.bf16.gmra.mxu0 %v856
        %v953 = vpop.f32.mrf.mxu0
        %v954 = vadd.f32 0.0, %v953
        %v955 = vpop.f32.mrf.mxu0
        %v956 = vpop.f32.mrf.mxu0
        %v957 = vadd.f32 0.0, %v956
        %v958 = vpop.f32.mrf.mxu0
        %959 = vmatprep.mubr.bf16.mxu0 0
        %960 = vmatmul.mubr.bf16.gmra.mxu0 %v857
        %v961 = vpop.f32.mrf.mxu0
        %v962 = vadd.f32 0.0, %v961
        %v963 = vpop.f32.mrf.mxu0
        %v964 = vpop.f32.mrf.mxu0
        %v965 = vadd.f32 0.0, %v964
        %v966 = vpop.f32.mrf.mxu0
        %967 = vmatprep.mubr.bf16.mxu0 0
        %968 = vmatmul.mubr.bf16.gmra.mxu0 %v858
        %v969 = vpop.f32.mrf.mxu0
        %v970 = vadd.f32 0.0, %v969
        %v971 = vpop.f32.mrf.mxu0
        %v972 = vpop.f32.mrf.mxu0
        %v973 = vadd.f32 0.0, %v972
        %v974 = vpop.f32.mrf.mxu0
        %975 = vdwg.mxu0
        %v976 = vpack.c.b16 %v685, %v683
        %v977 = vpack.c.b16 %v689, %v687
        %v978 = vpack.c.b16 %v693, %v691
        %v979 = vpack.c.b16 %v697, %v695
        %v1000 = vunpack.c.l.b16 %v659
        %v1001 = vunpack.c.l.b16 %v660
        %v1002 = vunpack.c.l.b16 %v661
        %v1003 = vunpack.c.l.b16 %v662
        %v1004 = vunpack.c.l.b16 %v663
        %v1005 = vunpack.c.l.b16 %v664
        %v1006 = vunpack.c.l.b16 %v665
        %v1007 = vunpack.c.l.b16 %v666
        %v1008 = vunpack.c.l.b16 %v667
        %v1009 = vunpack.c.l.b16 %v668
        %v1010 = vunpack.c.l.b16 %v669
        %v1011 = vunpack.c.l.b16 %v670
        %v1012 = vunpack.c.l.b16 %v671
        %v1013 = vunpack.c.l.b16 %v672
        %v1014 = vunpack.c.l.b16 %v673
        %v1015 = vunpack.c.l.b16 %v674
        %v1016 = vpack.c.b16 %v1001, %v1000
        %v1017 = vpack.c.b16 %v1003, %v1002
        %v1018 = vpack.c.b16 %v1005, %v1004
        %v1019 = vpack.c.b16 %v1007, %v1006
        %v1020 = vpack.c.b16 %v1009, %v1008
        %v1021 = vpack.c.b16 %v1011, %v1010
        %v1022 = vpack.c.b16 %v1013, %v1012
        %v1023 = vpack.c.b16 %v1015, %v1014
        %1032 = vmatprep.subr.bf16.mxu0 0
        %1033 = vmatpush1.bf16.msra.mxu0 %v1023
        %1034 = vmatprep.subr.bf16.mxu0 0
        %1035 = vmatpush1.bf16.msra.mxu0 %v1022
        %1036 = vmatprep.subr.bf16.mxu0 0
        %1037 = vmatpush1.bf16.msra.mxu0 %v1021
        %1038 = vmatprep.subr.bf16.mxu0 0
        %1039 = vmatpush1.bf16.msra.mxu0 %v1020
        %1040 = vmatprep.subr.bf16.mxu0 0
        %1041 = vmatpush1.bf16.msra.mxu0 %v1019
        %1042 = vmatprep.subr.bf16.mxu0 0
        %1043 = vmatpush1.bf16.msra.mxu0 %v1018
        %1044 = vmatprep.subr.bf16.mxu0 0
        %1045 = vmatpush1.bf16.msra.mxu0 %v1017
        %1046 = vmatprep.subr.bf16.mxu0 0
        %1047 = vmatpush1.bf16.msra.mxu0 %v1016
        %1048 = vmatprep.subr.bf16.mxu0 0
        %1049 = vmatpush2.bf16.msra.mxu0 0
        %1050 = vmatprep.subr.bf16.mxu0 0
        %1051 = vmatpush2.bf16.msra.mxu0 0
        %1052 = vmatprep.subr.bf16.mxu0 0
        %1053 = vmatpush2.bf16.msra.mxu0 0
        %1054 = vmatprep.subr.bf16.mxu0 0
        %1055 = vmatpush2.bf16.msra.mxu0 0
        %1056 = vmatprep.subr.bf16.mxu0 0
        %1057 = vmatpush2.bf16.msra.mxu0 0
        %1058 = vmatprep.subr.bf16.mxu0 0
        %1059 = vmatpush2.bf16.msra.mxu0 0
        %1060 = vmatprep.subr.bf16.mxu0 0
        %1061 = vmatpush2.bf16.msra.mxu0 0
        %1062 = vmatprep.subr.bf16.mxu0 0
        %1063 = vmatpush2.bf16.msra.mxu0 0
        %1064 = vmatprep.mubr.bf16.mxu0 0
        %1065 = vmatmul.mubr.bf16.gmra.mxu0 %v976
        %v1066 = vpop.f32.mrf.mxu0
        %v1067 = vadd.f32 %v946, %v1066
        %v1068 = vpop.f32.mrf.mxu0
        %v1069 = vpop.f32.mrf.mxu0
        %v1070 = vadd.f32 %v949, %v1069
        %v1071 = vpop.f32.mrf.mxu0
        %1072 = vmatprep.mubr.bf16.mxu0 0
        %1073 = vmatmul.mubr.bf16.gmra.mxu0 %v977
        %v1074 = vpop.f32.mrf.mxu0
        %v1075 = vadd.f32 %v954, %v1074
        %v1076 = vpop.f32.mrf.mxu0
        %v1077 = vpop.f32.mrf.mxu0
        %v1078 = vadd.f32 %v957, %v1077
        %v1079 = vpop.f32.mrf.mxu0
        %1080 = vmatprep.mubr.bf16.mxu0 0
        %1081 = vmatmul.mubr.bf16.gmra.mxu0 %v978
        %v1082 = vpop.f32.mrf.mxu0
        %v1083 = vadd.f32 %v962, %v1082
        %v1084 = vpop.f32.mrf.mxu0
        %v1085 = vpop.f32.mrf.mxu0
        %v1086 = vadd.f32 %v965, %v1085
        %v1087 = vpop.f32.mrf.mxu0
        %1088 = vmatprep.mubr.bf16.mxu0 0
        %1089 = vmatmul.mubr.bf16.gmra.mxu0 %v979
        %v1090 = vpop.f32.mrf.mxu0
        %v1091 = vadd.f32 %v970, %v1090
        %v1092 = vpop.f32.mrf.mxu0
        %v1093 = vpop.f32.mrf.mxu0
        %v1094 = vadd.f32 %v973, %v1093
        %v1095 = vpop.f32.mrf.mxu0
        %1096 = vdwg.mxu0
        %vm1097 = vcmask 1042432
        %vm1098 = vcmask 1046532
        %vm1099 = vmor %vm1097, %vm1098
        %v1100 = vrot.slane %v699, 5
        %v1101 = vrot.slane %v1100, 4
        %v1102 = vrot.slane %v700, 5
        %v1103 = vsel %vm1099, %v1101, %v1102
        %v1104 = vrot.slane %v701, 5
        %v1105 = vrot.slane %v1104, 4
        %v1106 = vrot.slane %v702, 5
        %v1107 = vsel %vm1099, %v1105, %v1106
        %v1108 = vrot.slane %v703, 5
        %v1109 = vrot.slane %v1108, 4
        %v1110 = vrot.slane %v704, 5
        %v1111 = vsel %vm1099, %v1109, %v1110
        %v1112 = vrot.slane %v705, 5
        %v1113 = vrot.slane %v1112, 4
        %v1114 = vrot.slane %v706, 5
        %v1115 = vsel %vm1099, %v1113, %v1114
        %v1116 = vrot.slane %v707, 5
        %v1117 = vrot.slane %v1116, 4
        %v1118 = vrot.slane %v708, 5
        %v1119 = vsel %vm1099, %v1117, %v1118
        %v1120 = vrot.slane %v709, 5
        %v1121 = vrot.slane %v1120, 4
        %v1122 = vrot.slane %v710, 5
        %v1123 = vsel %vm1099, %v1121, %v1122
        %v1124 = vrot.slane %v711, 5
        %v1125 = vrot.slane %v1124, 4
        %v1126 = vrot.slane %v712, 5
        %v1127 = vsel %vm1099, %v1125, %v1126
        %v1128 = vrot.slane %v713, 5
        %v1129 = vrot.slane %v1128, 4
        %v1130 = vrot.slane %v714, 5
        %v1131 = vsel %vm1099, %v1129, %v1130
        %s1132 = scalar_lea.vmem %s4, 128
        %v1133 = vld [vmem:[%s1132] sm:$0xf]
        %v1134 = vld [vmem:[%s1132 + $0x4] sm:$0xf]
        %v1135 = vld [vmem:[%s1132 + $0x8] sm:$0xf]
        %v1136 = vld [vmem:[%s1132 + $0xc] sm:$0xf]
        %v1137 = vld [vmem:[%s1132 + $0x10] sm:$0xf]
        %v1138 = vld [vmem:[%s1132 + $0x14] sm:$0xf]
        %v1139 = vld [vmem:[%s1132 + $0x18] sm:$0xf]
        %v1140 = vld [vmem:[%s1132 + $0x1c] sm:$0xf]
        %v1141 = vld [vmem:[%s1132 + $0x20] sm:$0xf]
        %v1142 = vld [vmem:[%s1132 + $0x24] sm:$0xf]
        %v1143 = vld [vmem:[%s1132 + $0x28] sm:$0xf]
        %v1144 = vld [vmem:[%s1132 + $0x2c] sm:$0xf]
        %v1145 = vld [vmem:[%s1132 + $0x30] sm:$0xf]
        %v1146 = vld [vmem:[%s1132 + $0x34] sm:$0xf]
        %v1147 = vld [vmem:[%s1132 + $0x38] sm:$0xf]
        %v1148 = vld [vmem:[%s1132 + $0x3c] sm:$0xf]
        %v1149 = vunpack.c.l.b16 %v1103
        %v1150 = vunpack.c.l.b16 %v1107
        %v1151 = vunpack.c.l.b16 %v1111
        %v1152 = vunpack.c.l.b16 %v1115
        %v1153 = vunpack.c.l.b16 %v1119
        %v1154 = vunpack.c.l.b16 %v1123
        %v1155 = vunpack.c.l.b16 %v1127
        %v1156 = vunpack.c.l.b16 %v1131
        %v1157 = vpack.c.b16 %v1150, %v1149
        %v1158 = vpack.c.b16 %v1152, %v1151
        %v1159 = vpack.c.b16 %v1154, %v1153
        %v1160 = vpack.c.b16 %v1156, %v1155
        %v1181 = vunpack.c.l.b16 %v1133
        %v1182 = vunpack.c.l.b16 %v1134
        %v1183 = vunpack.c.l.b16 %v1135
        %v1184 = vunpack.c.l.b16 %v1136
        %v1185 = vunpack.c.l.b16 %v1137
        %v1186 = vunpack.c.l.b16 %v1138
        %v1187 = vunpack.c.l.b16 %v1139
        %v1188 = vunpack.c.l.b16 %v1140
        %v1189 = vunpack.c.l.b16 %v1141
        %v1190 = vunpack.c.l.b16 %v1142
        %v1191 = vunpack.c.l.b16 %v1143
        %v1192 = vunpack.c.l.b16 %v1144
        %v1193 = vunpack.c.l.b16 %v1145
        %v1194 = vunpack.c.l.b16 %v1146
        %v1195 = vunpack.c.l.b16 %v1147
        %v1196 = vunpack.c.l.b16 %v1148
        %v1197 = vpack.c.b16 %v1182, %v1181
        %v1198 = vpack.c.b16 %v1184, %v1183
        %v1199 = vpack.c.b16 %v1186, %v1185
        %v1200 = vpack.c.b16 %v1188, %v1187
        %v1201 = vpack.c.b16 %v1190, %v1189
        %v1202 = vpack.c.b16 %v1192, %v1191
        %v1203 = vpack.c.b16 %v1194, %v1193
        %v1204 = vpack.c.b16 %v1196, %v1195
        %1213 = vmatprep.subr.bf16.mxu0 0
        %1214 = vmatpush1.bf16.msra.mxu0 %v1204
        %1215 = vmatprep.subr.bf16.mxu0 0
        %1216 = vmatpush1.bf16.msra.mxu0 %v1203
        %1217 = vmatprep.subr.bf16.mxu0 0
        %1218 = vmatpush1.bf16.msra.mxu0 %v1202
        %1219 = vmatprep.subr.bf16.mxu0 0
        %1220 = vmatpush1.bf16.msra.mxu0 %v1201
        %1221 = vmatprep.subr.bf16.mxu0 0
        %1222 = vmatpush1.bf16.msra.mxu0 %v1200
        %1223 = vmatprep.subr.bf16.mxu0 0
        %1224 = vmatpush1.bf16.msra.mxu0 %v1199
        %1225 = vmatprep.subr.bf16.mxu0 0
        %1226 = vmatpush1.bf16.msra.mxu0 %v1198
        %1227 = vmatprep.subr.bf16.mxu0 0
        %1228 = vmatpush1.bf16.msra.mxu0 %v1197
        %1229 = vmatprep.subr.bf16.mxu0 0
        %1230 = vmatpush2.bf16.msra.mxu0 0
        %1231 = vmatprep.subr.bf16.mxu0 0
        %1232 = vmatpush2.bf16.msra.mxu0 0
        %1233 = vmatprep.subr.bf16.mxu0 0
        %1234 = vmatpush2.bf16.msra.mxu0 0
        %1235 = vmatprep.subr.bf16.mxu0 0
        %1236 = vmatpush2.bf16.msra.mxu0 0
        %1237 = vmatprep.subr.bf16.mxu0 0
        %1238 = vmatpush2.bf16.msra.mxu0 0
        %1239 = vmatprep.subr.bf16.mxu0 0
        %1240 = vmatpush2.bf16.msra.mxu0 0
        %1241 = vmatprep.subr.bf16.mxu0 0
        %1242 = vmatpush2.bf16.msra.mxu0 0
        %1243 = vmatprep.subr.bf16.mxu0 0
        %1244 = vmatpush2.bf16.msra.mxu0 0
        %1245 = vmatprep.mubr.bf16.mxu0 0
        %1246 = vmatmul.mubr.bf16.gmra.mxu0 %v1157
        %v1247 = vpop.f32.mrf.mxu0
        %v1248 = vadd.f32 0.0, %v1247
        %v1249 = vpop.f32.mrf.mxu0
        %v1250 = vpop.f32.mrf.mxu0
        %v1251 = vadd.f32 0.0, %v1250
        %v1252 = vpop.f32.mrf.mxu0
        %1253 = vmatprep.mubr.bf16.mxu0 0
        %1254 = vmatmul.mubr.bf16.gmra.mxu0 %v1158
        %v1255 = vpop.f32.mrf.mxu0
        %v1256 = vadd.f32 0.0, %v1255
        %v1257 = vpop.f32.mrf.mxu0
        %v1258 = vpop.f32.mrf.mxu0
        %v1259 = vadd.f32 0.0, %v1258
        %v1260 = vpop.f32.mrf.mxu0
        %1261 = vmatprep.mubr.bf16.mxu0 0
        %1262 = vmatmul.mubr.bf16.gmra.mxu0 %v1159
        %v1263 = vpop.f32.mrf.mxu0
        %v1264 = vadd.f32 0.0, %v1263
        %v1265 = vpop.f32.mrf.mxu0
        %v1266 = vpop.f32.mrf.mxu0
        %v1267 = vadd.f32 0.0, %v1266
        %v1268 = vpop.f32.mrf.mxu0
        %1269 = vmatprep.mubr.bf16.mxu0 0
        %1270 = vmatmul.mubr.bf16.gmra.mxu0 %v1160
        %v1271 = vpop.f32.mrf.mxu0
        %v1272 = vadd.f32 0.0, %v1271
        %v1273 = vpop.f32.mrf.mxu0
        %v1274 = vpop.f32.mrf.mxu0
        %v1275 = vadd.f32 0.0, %v1274
        %v1276 = vpop.f32.mrf.mxu0
        %1277 = vdwg.mxu0
        %v1278 = vadd.f32 %v1067, %v1248
        %v1279 = vadd.f32 %v1070, %v1251
        %v1280 = vadd.f32 %v1075, %v1256
        %v1281 = vadd.f32 %v1078, %v1259
        %v1282 = vadd.f32 %v1083, %v1264
        %v1283 = vadd.f32 %v1086, %v1267
        %v1284 = vadd.f32 %v1091, %v1272
        %v1285 = vadd.f32 %v1094, %v1275
        %s1286 = scalar_lea.vmem %s4, 192
        %v1287 = vld [vmem:[%s1286] sm:$0xf]
        %v1288 = vld [vmem:[%s1286 + $0x4] sm:$0xf]
        %v1289 = vld [vmem:[%s1286 + $0x8] sm:$0xf]
        %v1290 = vld [vmem:[%s1286 + $0xc] sm:$0xf]
        %v1291 = vld [vmem:[%s1286 + $0x10] sm:$0xf]
        %v1292 = vld [vmem:[%s1286 + $0x14] sm:$0xf]
        %v1293 = vld [vmem:[%s1286 + $0x18] sm:$0xf]
        %v1294 = vld [vmem:[%s1286 + $0x1c] sm:$0xf]
        %v1295 = vld [vmem:[%s1286 + $0x20] sm:$0xf]
        %v1296 = vld [vmem:[%s1286 + $0x24] sm:$0xf]
        %v1297 = vld [vmem:[%s1286 + $0x28] sm:$0xf]
        %v1298 = vld [vmem:[%s1286 + $0x2c] sm:$0xf]
        %v1299 = vld [vmem:[%s1286 + $0x30] sm:$0xf]
        %v1300 = vld [vmem:[%s1286 + $0x34] sm:$0xf]
        %v1301 = vld [vmem:[%s1286 + $0x38] sm:$0xf]
        %v1302 = vld [vmem:[%s1286 + $0x3c] sm:$0xf]
        %v1304 = vunpack.c.l.b16 %v657
        %v1305 = vpack.c.b16 %v687, %v685
        %v1306 = vpack.c.b16 %v691, %v689
        %v1307 = vpack.c.b16 %v695, %v693
        %v1308 = vpack.c.b16 %v1304, %v697
        %v1329 = vunpack.c.l.b16 %v1287
        %v1330 = vunpack.c.l.b16 %v1288
        %v1331 = vunpack.c.l.b16 %v1289
        %v1332 = vunpack.c.l.b16 %v1290
        %v1333 = vunpack.c.l.b16 %v1291
        %v1334 = vunpack.c.l.b16 %v1292
        %v1335 = vunpack.c.l.b16 %v1293
        %v1336 = vunpack.c.l.b16 %v1294
        %v1337 = vunpack.c.l.b16 %v1295
        %v1338 = vunpack.c.l.b16 %v1296
        %v1339 = vunpack.c.l.b16 %v1297
        %v1340 = vunpack.c.l.b16 %v1298
        %v1341 = vunpack.c.l.b16 %v1299
        %v1342 = vunpack.c.l.b16 %v1300
        %v1343 = vunpack.c.l.b16 %v1301
        %v1344 = vunpack.c.l.b16 %v1302
        %v1345 = vpack.c.b16 %v1330, %v1329
        %v1346 = vpack.c.b16 %v1332, %v1331
        %v1347 = vpack.c.b16 %v1334, %v1333
        %v1348 = vpack.c.b16 %v1336, %v1335
        %v1349 = vpack.c.b16 %v1338, %v1337
        %v1350 = vpack.c.b16 %v1340, %v1339
        %v1351 = vpack.c.b16 %v1342, %v1341
        %v1352 = vpack.c.b16 %v1344, %v1343
        %1361 = vmatprep.subr.bf16.mxu0 0
        %1362 = vmatpush1.bf16.msra.mxu0 %v1352
        %1363 = vmatprep.subr.bf16.mxu0 0
        %1364 = vmatpush1.bf16.msra.mxu0 %v1351
        %1365 = vmatprep.subr.bf16.mxu0 0
        %1366 = vmatpush1.bf16.msra.mxu0 %v1350
        %1367 = vmatprep.subr.bf16.mxu0 0
        %1368 = vmatpush1.bf16.msra.mxu0 %v1349
        %1369 = vmatprep.subr.bf16.mxu0 0
        %1370 = vmatpush1.bf16.msra.mxu0 %v1348
        %1371 = vmatprep.subr.bf16.mxu0 0
        %1372 = vmatpush1.bf16.msra.mxu0 %v1347
        %1373 = vmatprep.subr.bf16.mxu0 0
        %1374 = vmatpush1.bf16.msra.mxu0 %v1346
        %1375 = vmatprep.subr.bf16.mxu0 0
        %1376 = vmatpush1.bf16.msra.mxu0 %v1345
        %1377 = vmatprep.subr.bf16.mxu0 0
        %1378 = vmatpush2.bf16.msra.mxu0 0
        %1379 = vmatprep.subr.bf16.mxu0 0
        %1380 = vmatpush2.bf16.msra.mxu0 0
        %1381 = vmatprep.subr.bf16.mxu0 0
        %1382 = vmatpush2.bf16.msra.mxu0 0
        %1383 = vmatprep.subr.bf16.mxu0 0
        %1384 = vmatpush2.bf16.msra.mxu0 0
        %1385 = vmatprep.subr.bf16.mxu0 0
        %1386 = vmatpush2.bf16.msra.mxu0 0
        %1387 = vmatprep.subr.bf16.mxu0 0
        %1388 = vmatpush2.bf16.msra.mxu0 0
        %1389 = vmatprep.subr.bf16.mxu0 0
        %1390 = vmatpush2.bf16.msra.mxu0 0
        %1391 = vmatprep.subr.bf16.mxu0 0
        %1392 = vmatpush2.bf16.msra.mxu0 0
        %1393 = vmatprep.mubr.bf16.mxu0 0
        %1394 = vmatmul.mubr.bf16.gmra.mxu0 %v1305
        %v1395 = vpop.f32.mrf.mxu0
        %v1396 = vadd.f32 0.0, %v1395
        %v1397 = vpop.f32.mrf.mxu0
        %v1398 = vpop.f32.mrf.mxu0
        %v1399 = vadd.f32 0.0, %v1398
        %v1400 = vpop.f32.mrf.mxu0
        %1401 = vmatprep.mubr.bf16.mxu0 0
        %1402 = vmatmul.mubr.bf16.gmra.mxu0 %v1306
        %v1403 = vpop.f32.mrf.mxu0
        %v1404 = vadd.f32 0.0, %v1403
        %v1405 = vpop.f32.mrf.mxu0
        %v1406 = vpop.f32.mrf.mxu0
        %v1407 = vadd.f32 0.0, %v1406
        %v1408 = vpop.f32.mrf.mxu0
        %1409 = vmatprep.mubr.bf16.mxu0 0
        %1410 = vmatmul.mubr.bf16.gmra.mxu0 %v1307
        %v1411 = vpop.f32.mrf.mxu0
        %v1412 = vadd.f32 0.0, %v1411
        %v1413 = vpop.f32.mrf.mxu0
        %v1414 = vpop.f32.mrf.mxu0
        %v1415 = vadd.f32 0.0, %v1414
        %v1416 = vpop.f32.mrf.mxu0
        %1417 = vmatprep.mubr.bf16.mxu0 0
        %1418 = vmatmul.mubr.bf16.gmra.mxu0 %v1308
        %v1419 = vpop.f32.mrf.mxu0
        %v1420 = vadd.f32 0.0, %v1419
        %v1421 = vpop.f32.mrf.mxu0
        %v1422 = vpop.f32.mrf.mxu0
        %v1423 = vadd.f32 0.0, %v1422
        %v1424 = vpop.f32.mrf.mxu0
        %1425 = vdwg.mxu0
        %v1426 = vadd.f32 %v1278, %v1396
        %v1427 = vadd.f32 %v1279, %v1399
        %v1428 = vadd.f32 %v1280, %v1404
        %v1429 = vadd.f32 %v1281, %v1407
        %v1430 = vadd.f32 %v1282, %v1412
        %v1431 = vadd.f32 %v1283, %v1415
        %v1432 = vadd.f32 %v1284, %v1420
        %v1433 = vadd.f32 %v1285, %v1423
        %v1434 = vunpack.c.h.b16 %v657
        %v1435 = vpack.c.b16 %v1304, %v1304
        %v1436 = vpack.c.b16 %v1434, %v1434
        %v1438 = vshrl.u32 %v1435, 16
        %v1440 = vrot.slane %v1438, 4
        %v1441 = vshll.u32 %v1435, 16
        %v1443 = vrot.slane %v1441, 5
        %v1444 = vor.u32 %v1440, %v1443
        %v1445 = vrot.slane %v1444, 4
        %v1447 = vshll.u32 %v1436, 16
        %v1449 = vrot.slane %v1447, 5
        %v1450 = vsel %vm717, %v1445, %v1449
        %s1451 = scalar_lea.vmem %s4, 256
        %v1452 = vld [vmem:[%s1451] sm:$0xf]
        %v1453 = vld [vmem:[%s1451 + $0x4] sm:$0xf]
        %v1454 = vld [vmem:[%s1451 + $0x8] sm:$0xf]
        %v1455 = vld [vmem:[%s1451 + $0xc] sm:$0xf]
        %v1456 = vld [vmem:[%s1451 + $0x10] sm:$0xf]
        %v1457 = vld [vmem:[%s1451 + $0x14] sm:$0xf]
        %v1458 = vld [vmem:[%s1451 + $0x18] sm:$0xf]
        %v1459 = vld [vmem:[%s1451 + $0x1c] sm:$0xf]
        %v1460 = vld [vmem:[%s1451 + $0x20] sm:$0xf]
        %v1461 = vld [vmem:[%s1451 + $0x24] sm:$0xf]
        %v1462 = vld [vmem:[%s1451 + $0x28] sm:$0xf]
        %v1463 = vld [vmem:[%s1451 + $0x2c] sm:$0xf]
        %v1464 = vld [vmem:[%s1451 + $0x30] sm:$0xf]
        %v1465 = vld [vmem:[%s1451 + $0x34] sm:$0xf]
        %v1466 = vld [vmem:[%s1451 + $0x38] sm:$0xf]
        %v1467 = vld [vmem:[%s1451 + $0x3c] sm:$0xf]
        %v1468 = vunpack.c.l.b16 %v1450
        %v1469 = vpack.c.b16 %v849, %v848
        %v1470 = vpack.c.b16 %v851, %v850
        %v1471 = vpack.c.b16 %v853, %v852
        %v1472 = vpack.c.b16 %v1468, %v854
        %v1493 = vunpack.c.l.b16 %v1452
        %v1494 = vunpack.c.l.b16 %v1453
        %v1495 = vunpack.c.l.b16 %v1454
        %v1496 = vunpack.c.l.b16 %v1455
        %v1497 = vunpack.c.l.b16 %v1456
        %v1498 = vunpack.c.l.b16 %v1457
        %v1499 = vunpack.c.l.b16 %v1458
        %v1500 = vunpack.c.l.b16 %v1459
        %v1501 = vunpack.c.l.b16 %v1460
        %v1502 = vunpack.c.l.b16 %v1461
        %v1503 = vunpack.c.l.b16 %v1462
        %v1504 = vunpack.c.l.b16 %v1463
        %v1505 = vunpack.c.l.b16 %v1464
        %v1506 = vunpack.c.l.b16 %v1465
        %v1507 = vunpack.c.l.b16 %v1466
        %v1508 = vunpack.c.l.b16 %v1467
        %v1509 = vpack.c.b16 %v1494, %v1493
        %v1510 = vpack.c.b16 %v1496, %v1495
        %v1511 = vpack.c.b16 %v1498, %v1497
        %v1512 = vpack.c.b16 %v1500, %v1499
        %v1513 = vpack.c.b16 %v1502, %v1501
        %v1514 = vpack.c.b16 %v1504, %v1503
        %v1515 = vpack.c.b16 %v1506, %v1505
        %v1516 = vpack.c.b16 %v1508, %v1507
        %1525 = vmatprep.subr.bf16.mxu0 0
        %1526 = vmatpush1.bf16.msra.mxu0 %v1516
        %1527 = vmatprep.subr.bf16.mxu0 0
        %1528 = vmatpush1.bf16.msra.mxu0 %v1515
        %1529 = vmatprep.subr.bf16.mxu0 0
        %1530 = vmatpush1.bf16.msra.mxu0 %v1514
        %1531 = vmatprep.subr.bf16.mxu0 0
        %1532 = vmatpush1.bf16.msra.mxu0 %v1513
        %1533 = vmatprep.subr.bf16.mxu0 0
        %1534 = vmatpush1.bf16.msra.mxu0 %v1512
        %1535 = vmatprep.subr.bf16.mxu0 0
        %1536 = vmatpush1.bf16.msra.mxu0 %v1511
        %1537 = vmatprep.subr.bf16.mxu0 0
        %1538 = vmatpush1.bf16.msra.mxu0 %v1510
        %1539 = vmatprep.subr.bf16.mxu0 0
        %1540 = vmatpush1.bf16.msra.mxu0 %v1509
        %1541 = vmatprep.subr.bf16.mxu0 0
        %1542 = vmatpush2.bf16.msra.mxu0 0
        %1543 = vmatprep.subr.bf16.mxu0 0
        %1544 = vmatpush2.bf16.msra.mxu0 0
        %1545 = vmatprep.subr.bf16.mxu0 0
        %1546 = vmatpush2.bf16.msra.mxu0 0
        %1547 = vmatprep.subr.bf16.mxu0 0
        %1548 = vmatpush2.bf16.msra.mxu0 0
        %1549 = vmatprep.subr.bf16.mxu0 0
        %1550 = vmatpush2.bf16.msra.mxu0 0
        %1551 = vmatprep.subr.bf16.mxu0 0
        %1552 = vmatpush2.bf16.msra.mxu0 0
        %1553 = vmatprep.subr.bf16.mxu0 0
        %1554 = vmatpush2.bf16.msra.mxu0 0
        %1555 = vmatprep.subr.bf16.mxu0 0
        %1556 = vmatpush2.bf16.msra.mxu0 0
        %1557 = vmatprep.mubr.bf16.mxu0 0
        %1558 = vmatmul.mubr.bf16.gmra.mxu0 %v1469
        %v1559 = vpop.f32.mrf.mxu0
        %v1560 = vadd.f32 0.0, %v1559
        %v1561 = vpop.f32.mrf.mxu0
        %v1562 = vpop.f32.mrf.mxu0
        %v1563 = vadd.f32 0.0, %v1562
        %v1564 = vpop.f32.mrf.mxu0
        %1565 = vmatprep.mubr.bf16.mxu0 0
        %1566 = vmatmul.mubr.bf16.gmra.mxu0 %v1470
        %v1567 = vpop.f32.mrf.mxu0
        %v1568 = vadd.f32 0.0, %v1567
        %v1569 = vpop.f32.mrf.mxu0
        %v1570 = vpop.f32.mrf.mxu0
        %v1571 = vadd.f32 0.0, %v1570
        %v1572 = vpop.f32.mrf.mxu0
        %1573 = vmatprep.mubr.bf16.mxu0 0
        %1574 = vmatmul.mubr.bf16.gmra.mxu0 %v1471
        %v1575 = vpop.f32.mrf.mxu0
        %v1576 = vadd.f32 0.0, %v1575
        %v1577 = vpop.f32.mrf.mxu0
        %v1578 = vpop.f32.mrf.mxu0
        %v1579 = vadd.f32 0.0, %v1578
        %v1580 = vpop.f32.mrf.mxu0
        %1581 = vmatprep.mubr.bf16.mxu0 0
        %1582 = vmatmul.mubr.bf16.gmra.mxu0 %v1472
        %v1583 = vpop.f32.mrf.mxu0
        %v1584 = vadd.f32 0.0, %v1583
        %v1585 = vpop.f32.mrf.mxu0
        %v1586 = vpop.f32.mrf.mxu0
        %v1587 = vadd.f32 0.0, %v1586
        %v1588 = vpop.f32.mrf.mxu0
        %1589 = vdwg.mxu0
        %v1590 = vadd.f32 %v1426, %v1560
        %v1591 = vadd.f32 %v1427, %v1563
        %v1592 = vadd.f32 %v1428, %v1568
        %v1593 = vadd.f32 %v1429, %v1571
        %v1594 = vadd.f32 %v1430, %v1576
        %v1595 = vadd.f32 %v1431, %v1579
        %v1596 = vadd.f32 %v1432, %v1584
        %v1597 = vadd.f32 %v1433, %v1587
        %v1598 = vrot.slane %v1435, 5
        %v1599 = vrot.slane %v1598, 4
        %v1600 = vrot.slane %v1436, 5
        %v1601 = vsel %vm1099, %v1599, %v1600
        %s1602 = scalar_lea.vmem %s4, 320
        %v1603 = vld [vmem:[%s1602] sm:$0xf]
        %v1604 = vld [vmem:[%s1602 + $0x4] sm:$0xf]
        %v1605 = vld [vmem:[%s1602 + $0x8] sm:$0xf]
        %v1606 = vld [vmem:[%s1602 + $0xc] sm:$0xf]
        %v1607 = vld [vmem:[%s1602 + $0x10] sm:$0xf]
        %v1608 = vld [vmem:[%s1602 + $0x14] sm:$0xf]
        %v1609 = vld [vmem:[%s1602 + $0x18] sm:$0xf]
        %v1610 = vld [vmem:[%s1602 + $0x1c] sm:$0xf]
        %v1611 = vld [vmem:[%s1602 + $0x20] sm:$0xf]
        %v1612 = vld [vmem:[%s1602 + $0x24] sm:$0xf]
        %v1613 = vld [vmem:[%s1602 + $0x28] sm:$0xf]
        %v1614 = vld [vmem:[%s1602 + $0x2c] sm:$0xf]
        %v1615 = vld [vmem:[%s1602 + $0x30] sm:$0xf]
        %v1616 = vld [vmem:[%s1602 + $0x34] sm:$0xf]
        %v1617 = vld [vmem:[%s1602 + $0x38] sm:$0xf]
        %v1618 = vld [vmem:[%s1602 + $0x3c] sm:$0xf]
        %v1619 = vunpack.c.l.b16 %v1601
        %v1620 = vpack.c.b16 %v1151, %v1150
        %v1621 = vpack.c.b16 %v1153, %v1152
        %v1622 = vpack.c.b16 %v1155, %v1154
        %v1623 = vpack.c.b16 %v1619, %v1156
        %v1644 = vunpack.c.l.b16 %v1603
        %v1645 = vunpack.c.l.b16 %v1604
        %v1646 = vunpack.c.l.b16 %v1605
        %v1647 = vunpack.c.l.b16 %v1606
        %v1648 = vunpack.c.l.b16 %v1607
        %v1649 = vunpack.c.l.b16 %v1608
        %v1650 = vunpack.c.l.b16 %v1609
        %v1651 = vunpack.c.l.b16 %v1610
        %v1652 = vunpack.c.l.b16 %v1611
        %v1653 = vunpack.c.l.b16 %v1612
        %v1654 = vunpack.c.l.b16 %v1613
        %v1655 = vunpack.c.l.b16 %v1614
        %v1656 = vunpack.c.l.b16 %v1615
        %v1657 = vunpack.c.l.b16 %v1616
        %v1658 = vunpack.c.l.b16 %v1617
        %v1659 = vunpack.c.l.b16 %v1618
        %v1660 = vpack.c.b16 %v1645, %v1644
        %v1661 = vpack.c.b16 %v1647, %v1646
        %v1662 = vpack.c.b16 %v1649, %v1648
        %v1663 = vpack.c.b16 %v1651, %v1650
        %v1664 = vpack.c.b16 %v1653, %v1652
        %v1665 = vpack.c.b16 %v1655, %v1654
        %v1666 = vpack.c.b16 %v1657, %v1656
        %v1667 = vpack.c.b16 %v1659, %v1658
        %1676 = vmatprep.subr.bf16.mxu0 0
        %1677 = vmatpush1.bf16.msra.mxu0 %v1667
        %1678 = vmatprep.subr.bf16.mxu0 0
        %1679 = vmatpush1.bf16.msra.mxu0 %v1666
        %1680 = vmatprep.subr.bf16.mxu0 0
        %1681 = vmatpush1.bf16.msra.mxu0 %v1665
        %1682 = vmatprep.subr.bf16.mxu0 0
        %1683 = vmatpush1.bf16.msra.mxu0 %v1664
        %1684 = vmatprep.subr.bf16.mxu0 0
        %1685 = vmatpush1.bf16.msra.mxu0 %v1663
        %1686 = vmatprep.subr.bf16.mxu0 0
        %1687 = vmatpush1.bf16.msra.mxu0 %v1662
        %1688 = vmatprep.subr.bf16.mxu0 0
        %1689 = vmatpush1.bf16.msra.mxu0 %v1661
        %1690 = vmatprep.subr.bf16.mxu0 0
        %1691 = vmatpush1.bf16.msra.mxu0 %v1660
        %1692 = vmatprep.subr.bf16.mxu0 0
        %1693 = vmatpush2.bf16.msra.mxu0 0
        %1694 = vmatprep.subr.bf16.mxu0 0
        %1695 = vmatpush2.bf16.msra.mxu0 0
        %1696 = vmatprep.subr.bf16.mxu0 0
        %1697 = vmatpush2.bf16.msra.mxu0 0
        %1698 = vmatprep.subr.bf16.mxu0 0
        %1699 = vmatpush2.bf16.msra.mxu0 0
        %1700 = vmatprep.subr.bf16.mxu0 0
        %1701 = vmatpush2.bf16.msra.mxu0 0
        %1702 = vmatprep.subr.bf16.mxu0 0
        %1703 = vmatpush2.bf16.msra.mxu0 0
        %1704 = vmatprep.subr.bf16.mxu0 0
        %1705 = vmatpush2.bf16.msra.mxu0 0
        %1706 = vmatprep.subr.bf16.mxu0 0
        %1707 = vmatpush2.bf16.msra.mxu0 0
        %1708 = vmatprep.mubr.bf16.mxu0 0
        %1709 = vmatmul.mubr.bf16.gmra.mxu0 %v1620
        %v1710 = vpop.f32.mrf.mxu0
        %v1711 = vadd.f32 0.0, %v1710
        %v1712 = vpop.f32.mrf.mxu0
        %v1713 = vpop.f32.mrf.mxu0
        %v1714 = vadd.f32 0.0, %v1713
        %v1715 = vpop.f32.mrf.mxu0
        %1716 = vmatprep.mubr.bf16.mxu0 0
        %1717 = vmatmul.mubr.bf16.gmra.mxu0 %v1621
        %v1718 = vpop.f32.mrf.mxu0
        %v1719 = vadd.f32 0.0, %v1718
        %v1720 = vpop.f32.mrf.mxu0
        %v1721 = vpop.f32.mrf.mxu0
        %v1722 = vadd.f32 0.0, %v1721
        %v1723 = vpop.f32.mrf.mxu0
        %1724 = vmatprep.mubr.bf16.mxu0 0
        %1725 = vmatmul.mubr.bf16.gmra.mxu0 %v1622
        %v1726 = vpop.f32.mrf.mxu0
        %v1727 = vadd.f32 0.0, %v1726
        %v1728 = vpop.f32.mrf.mxu0
        %v1729 = vpop.f32.mrf.mxu0
        %v1730 = vadd.f32 0.0, %v1729
        %v1731 = vpop.f32.mrf.mxu0
        %1732 = vmatprep.mubr.bf16.mxu0 0
        %1733 = vmatmul.mubr.bf16.gmra.mxu0 %v1623
        %v1734 = vpop.f32.mrf.mxu0
        %v1735 = vadd.f32 0.0, %v1734
        %v1736 = vpop.f32.mrf.mxu0
        %v1737 = vpop.f32.mrf.mxu0
        %v1738 = vadd.f32 0.0, %v1737
        %v1739 = vpop.f32.mrf.mxu0
        %1740 = vdwg.mxu0
        %v1741 = vadd.f32 %v1590, %v1711
        %v1742 = vadd.f32 %v1591, %v1714
        %v1743 = vadd.f32 %v1592, %v1719
        %v1744 = vadd.f32 %v1593, %v1722
        %v1745 = vadd.f32 %v1594, %v1727
        %v1746 = vadd.f32 %v1595, %v1730
        %v1747 = vadd.f32 %v1596, %v1735
        %v1748 = vadd.f32 %v1597, %v1738
        %s1749 = scalar_lea.vmem %s4, 384
        %v1750 = vld [vmem:[%s1749] sm:$0xf]
        %v1751 = vld [vmem:[%s1749 + $0x4] sm:$0xf]
        %v1752 = vld [vmem:[%s1749 + $0x8] sm:$0xf]
        %v1753 = vld [vmem:[%s1749 + $0xc] sm:$0xf]
        %v1754 = vld [vmem:[%s1749 + $0x10] sm:$0xf]
        %v1755 = vld [vmem:[%s1749 + $0x14] sm:$0xf]
        %v1756 = vld [vmem:[%s1749 + $0x18] sm:$0xf]
        %v1757 = vld [vmem:[%s1749 + $0x1c] sm:$0xf]
        %v1758 = vld [vmem:[%s1749 + $0x20] sm:$0xf]
        %v1759 = vld [vmem:[%s1749 + $0x24] sm:$0xf]
        %v1760 = vld [vmem:[%s1749 + $0x28] sm:$0xf]
        %v1761 = vld [vmem:[%s1749 + $0x2c] sm:$0xf]
        %v1762 = vld [vmem:[%s1749 + $0x30] sm:$0xf]
        %v1763 = vld [vmem:[%s1749 + $0x34] sm:$0xf]
        %v1764 = vld [vmem:[%s1749 + $0x38] sm:$0xf]
        %v1765 = vld [vmem:[%s1749 + $0x3c] sm:$0xf]
        %v1767 = vunpack.c.l.b16 %v658
        %v1768 = vpack.c.b16 %v1767, %v1304
        %v1786 = vunpack.c.l.b16 %v1750
        %v1787 = vunpack.c.l.b16 %v1751
        %v1788 = vunpack.c.l.b16 %v1752
        %v1789 = vunpack.c.l.b16 %v1753
        %v1790 = vunpack.c.l.b16 %v1754
        %v1791 = vunpack.c.l.b16 %v1755
        %v1792 = vunpack.c.l.b16 %v1756
        %v1793 = vunpack.c.l.b16 %v1757
        %v1794 = vunpack.c.l.b16 %v1758
        %v1795 = vunpack.c.l.b16 %v1759
        %v1796 = vunpack.c.l.b16 %v1760
        %v1797 = vunpack.c.l.b16 %v1761
        %v1798 = vunpack.c.l.b16 %v1762
        %v1799 = vunpack.c.l.b16 %v1763
        %v1800 = vunpack.c.l.b16 %v1764
        %v1801 = vunpack.c.l.b16 %v1765
        %v1802 = vpack.c.b16 %v1787, %v1786
        %v1803 = vpack.c.b16 %v1789, %v1788
        %v1804 = vpack.c.b16 %v1791, %v1790
        %v1805 = vpack.c.b16 %v1793, %v1792
        %v1806 = vpack.c.b16 %v1795, %v1794
        %v1807 = vpack.c.b16 %v1797, %v1796
        %v1808 = vpack.c.b16 %v1799, %v1798
        %v1809 = vpack.c.b16 %v1801, %v1800
        %1818 = vmatprep.subr.bf16.mxu0 0
        %1819 = vmatpush1.bf16.msra.mxu0 %v1809
        %1820 = vmatprep.subr.bf16.mxu0 0
        %1821 = vmatpush1.bf16.msra.mxu0 %v1808
        %1822 = vmatprep.subr.bf16.mxu0 0
        %1823 = vmatpush1.bf16.msra.mxu0 %v1807
        %1824 = vmatprep.subr.bf16.mxu0 0
        %1825 = vmatpush1.bf16.msra.mxu0 %v1806
        %1826 = vmatprep.subr.bf16.mxu0 0
        %1827 = vmatpush1.bf16.msra.mxu0 %v1805
        %1828 = vmatprep.subr.bf16.mxu0 0
        %1829 = vmatpush1.bf16.msra.mxu0 %v1804
        %1830 = vmatprep.subr.bf16.mxu0 0
        %1831 = vmatpush1.bf16.msra.mxu0 %v1803
        %1832 = vmatprep.subr.bf16.mxu0 0
        %1833 = vmatpush1.bf16.msra.mxu0 %v1802
        %1834 = vmatprep.subr.bf16.mxu0 0
        %1835 = vmatpush2.bf16.msra.mxu0 0
        %1836 = vmatprep.subr.bf16.mxu0 0
        %1837 = vmatpush2.bf16.msra.mxu0 0
        %1838 = vmatprep.subr.bf16.mxu0 0
        %1839 = vmatpush2.bf16.msra.mxu0 0
        %1840 = vmatprep.subr.bf16.mxu0 0
        %1841 = vmatpush2.bf16.msra.mxu0 0
        %1842 = vmatprep.subr.bf16.mxu0 0
        %1843 = vmatpush2.bf16.msra.mxu0 0
        %1844 = vmatprep.subr.bf16.mxu0 0
        %1845 = vmatpush2.bf16.msra.mxu0 0
        %1846 = vmatprep.subr.bf16.mxu0 0
        %1847 = vmatpush2.bf16.msra.mxu0 0
        %1848 = vmatprep.subr.bf16.mxu0 0
        %1849 = vmatpush2.bf16.msra.mxu0 0
        %1850 = vmatprep.mubr.bf16.mxu0 0
        %1851 = vmatmul.mubr.bf16.gmra.mxu0 %v977
        %v1852 = vpop.f32.mrf.mxu0
        %v1853 = vadd.f32 0.0, %v1852
        %v1854 = vpop.f32.mrf.mxu0
        %v1855 = vpop.f32.mrf.mxu0
        %v1856 = vadd.f32 0.0, %v1855
        %v1857 = vpop.f32.mrf.mxu0
        %1858 = vmatprep.mubr.bf16.mxu0 0
        %1859 = vmatmul.mubr.bf16.gmra.mxu0 %v978
        %v1860 = vpop.f32.mrf.mxu0
        %v1861 = vadd.f32 0.0, %v1860
        %v1862 = vpop.f32.mrf.mxu0
        %v1863 = vpop.f32.mrf.mxu0
        %v1864 = vadd.f32 0.0, %v1863
        %v1865 = vpop.f32.mrf.mxu0
        %1866 = vmatprep.mubr.bf16.mxu0 0
        %1867 = vmatmul.mubr.bf16.gmra.mxu0 %v979
        %v1868 = vpop.f32.mrf.mxu0
        %v1869 = vadd.f32 0.0, %v1868
        %v1870 = vpop.f32.mrf.mxu0
        %v1871 = vpop.f32.mrf.mxu0
        %v1872 = vadd.f32 0.0, %v1871
        %v1873 = vpop.f32.mrf.mxu0
        %1874 = vmatprep.mubr.bf16.mxu0 0
        %1875 = vmatmul.mubr.bf16.gmra.mxu0 %v1768
        %v1876 = vpop.f32.mrf.mxu0
        %v1877 = vadd.f32 0.0, %v1876
        %v1878 = vpop.f32.mrf.mxu0
        %v1879 = vpop.f32.mrf.mxu0
        %v1880 = vadd.f32 0.0, %v1879
        %v1881 = vpop.f32.mrf.mxu0
        %1882 = vdwg.mxu0
        %v1883 = vadd.f32 %v1741, %v1853
        %v1884 = vadd.f32 %v1742, %v1856
        %v1885 = vadd.f32 %v1743, %v1861
        %v1886 = vadd.f32 %v1744, %v1864
        %v1887 = vadd.f32 %v1745, %v1869
        %v1888 = vadd.f32 %v1746, %v1872
        %v1889 = vadd.f32 %v1747, %v1877
        %v1890 = vadd.f32 %v1748, %v1880
        %v1891 = vunpack.c.h.b16 %v658
        %v1892 = vpack.c.b16 %v1767, %v1767
        %v1893 = vpack.c.b16 %v1891, %v1891
        %v1895 = vshrl.u32 %v1892, 16
        %v1897 = vrot.slane %v1895, 4
        %v1898 = vshll.u32 %v1892, 16
        %v1900 = vrot.slane %v1898, 5
        %v1901 = vor.u32 %v1897, %v1900
        %v1902 = vrot.slane %v1901, 4
        %v1904 = vshll.u32 %v1893, 16
        %v1906 = vrot.slane %v1904, 5
        %v1907 = vsel %vm717, %v1902, %v1906
        %s1908 = scalar_lea.vmem %s4, 448
        %v1909 = vld [vmem:[%s1908] sm:$0xf]
        %v1910 = vld [vmem:[%s1908 + $0x4] sm:$0xf]
        %v1911 = vld [vmem:[%s1908 + $0x8] sm:$0xf]
        %v1912 = vld [vmem:[%s1908 + $0xc] sm:$0xf]
        %v1913 = vld [vmem:[%s1908 + $0x10] sm:$0xf]
        %v1914 = vld [vmem:[%s1908 + $0x14] sm:$0xf]
        %v1915 = vld [vmem:[%s1908 + $0x18] sm:$0xf]
        %v1916 = vld [vmem:[%s1908 + $0x1c] sm:$0xf]
        %v1917 = vld [vmem:[%s1908 + $0x20] sm:$0xf]
        %v1918 = vld [vmem:[%s1908 + $0x24] sm:$0xf]
        %v1919 = vld [vmem:[%s1908 + $0x28] sm:$0xf]
        %v1920 = vld [vmem:[%s1908 + $0x2c] sm:$0xf]
        %v1921 = vld [vmem:[%s1908 + $0x30] sm:$0xf]
        %v1922 = vld [vmem:[%s1908 + $0x34] sm:$0xf]
        %v1923 = vld [vmem:[%s1908 + $0x38] sm:$0xf]
        %v1924 = vld [vmem:[%s1908 + $0x3c] sm:$0xf]
        %v1925 = vunpack.c.l.b16 %v1907
        %v1926 = vpack.c.b16 %v1925, %v1468
        %v1944 = vunpack.c.l.b16 %v1909
        %v1945 = vunpack.c.l.b16 %v1910
        %v1946 = vunpack.c.l.b16 %v1911
        %v1947 = vunpack.c.l.b16 %v1912
        %v1948 = vunpack.c.l.b16 %v1913
        %v1949 = vunpack.c.l.b16 %v1914
        %v1950 = vunpack.c.l.b16 %v1915
        %v1951 = vunpack.c.l.b16 %v1916
        %v1952 = vunpack.c.l.b16 %v1917
        %v1953 = vunpack.c.l.b16 %v1918
        %v1954 = vunpack.c.l.b16 %v1919
        %v1955 = vunpack.c.l.b16 %v1920
        %v1956 = vunpack.c.l.b16 %v1921
        %v1957 = vunpack.c.l.b16 %v1922
        %v1958 = vunpack.c.l.b16 %v1923
        %v1959 = vunpack.c.l.b16 %v1924
        %v1960 = vpack.c.b16 %v1945, %v1944
        %v1961 = vpack.c.b16 %v1947, %v1946
        %v1962 = vpack.c.b16 %v1949, %v1948
        %v1963 = vpack.c.b16 %v1951, %v1950
        %v1964 = vpack.c.b16 %v1953, %v1952
        %v1965 = vpack.c.b16 %v1955, %v1954
        %v1966 = vpack.c.b16 %v1957, %v1956
        %v1967 = vpack.c.b16 %v1959, %v1958
        %1976 = vmatprep.subr.bf16.mxu0 0
        %1977 = vmatpush1.bf16.msra.mxu0 %v1967
        %1978 = vmatprep.subr.bf16.mxu0 0
        %1979 = vmatpush1.bf16.msra.mxu0 %v1966
        %1980 = vmatprep.subr.bf16.mxu0 0
        %1981 = vmatpush1.bf16.msra.mxu0 %v1965
        %1982 = vmatprep.subr.bf16.mxu0 0
        %1983 = vmatpush1.bf16.msra.mxu0 %v1964
        %1984 = vmatprep.subr.bf16.mxu0 0
        %1985 = vmatpush1.bf16.msra.mxu0 %v1963
        %1986 = vmatprep.subr.bf16.mxu0 0
        %1987 = vmatpush1.bf16.msra.mxu0 %v1962
        %1988 = vmatprep.subr.bf16.mxu0 0
        %1989 = vmatpush1.bf16.msra.mxu0 %v1961
        %1990 = vmatprep.subr.bf16.mxu0 0
        %1991 = vmatpush1.bf16.msra.mxu0 %v1960
        %1992 = vmatprep.subr.bf16.mxu0 0
        %1993 = vmatpush2.bf16.msra.mxu0 0
        %1994 = vmatprep.subr.bf16.mxu0 0
        %1995 = vmatpush2.bf16.msra.mxu0 0
        %1996 = vmatprep.subr.bf16.mxu0 0
        %1997 = vmatpush2.bf16.msra.mxu0 0
        %1998 = vmatprep.subr.bf16.mxu0 0
        %1999 = vmatpush2.bf16.msra.mxu0 0
        %2000 = vmatprep.subr.bf16.mxu0 0
        %2001 = vmatpush2.bf16.msra.mxu0 0
        %2002 = vmatprep.subr.bf16.mxu0 0
        %2003 = vmatpush2.bf16.msra.mxu0 0
        %2004 = vmatprep.subr.bf16.mxu0 0
        %2005 = vmatpush2.bf16.msra.mxu0 0
        %2006 = vmatprep.subr.bf16.mxu0 0
        %2007 = vmatpush2.bf16.msra.mxu0 0
        %2008 = vmatprep.mubr.bf16.mxu0 0
        %2009 = vmatmul.mubr.bf16.gmra.mxu0 %v856
        %v2010 = vpop.f32.mrf.mxu0
        %v2011 = vadd.f32 0.0, %v2010
        %v2012 = vpop.f32.mrf.mxu0
        %v2013 = vpop.f32.mrf.mxu0
        %v2014 = vadd.f32 0.0, %v2013
        %v2015 = vpop.f32.mrf.mxu0
        %2016 = vmatprep.mubr.bf16.mxu0 0
        %2017 = vmatmul.mubr.bf16.gmra.mxu0 %v857
        %v2018 = vpop.f32.mrf.mxu0
        %v2019 = vadd.f32 0.0, %v2018
        %v2020 = vpop.f32.mrf.mxu0
        %v2021 = vpop.f32.mrf.mxu0
        %v2022 = vadd.f32 0.0, %v2021
        %v2023 = vpop.f32.mrf.mxu0
        %2024 = vmatprep.mubr.bf16.mxu0 0
        %2025 = vmatmul.mubr.bf16.gmra.mxu0 %v858
        %v2026 = vpop.f32.mrf.mxu0
        %v2027 = vadd.f32 0.0, %v2026
        %v2028 = vpop.f32.mrf.mxu0
        %v2029 = vpop.f32.mrf.mxu0
        %v2030 = vadd.f32 0.0, %v2029
        %v2031 = vpop.f32.mrf.mxu0
        %2032 = vmatprep.mubr.bf16.mxu0 0
        %2033 = vmatmul.mubr.bf16.gmra.mxu0 %v1926
        %v2034 = vpop.f32.mrf.mxu0
        %v2035 = vadd.f32 0.0, %v2034
        %v2036 = vpop.f32.mrf.mxu0
        %v2037 = vpop.f32.mrf.mxu0
        %v2038 = vadd.f32 0.0, %v2037
        %v2039 = vpop.f32.mrf.mxu0
        %2040 = vdwg.mxu0
        %v2041 = vadd.f32 %v1883, %v2011
        %v2042 = vadd.f32 %v1884, %v2014
        %v2043 = vadd.f32 %v1885, %v2019
        %v2044 = vadd.f32 %v1886, %v2022
        %v2045 = vadd.f32 %v1887, %v2027
        %v2046 = vadd.f32 %v1888, %v2030
        %v2047 = vadd.f32 %v1889, %v2035
        %v2048 = vadd.f32 %v1890, %v2038
        %v2049 = vrot.slane %v1892, 5
        %v2050 = vrot.slane %v2049, 4
        %v2051 = vrot.slane %v1893, 5
        %v2052 = vsel %vm1099, %v2050, %v2051
        %s2053 = scalar_lea.vmem %s4, 512
        %v2054 = vld [vmem:[%s2053] sm:$0xf]
        %v2055 = vld [vmem:[%s2053 + $0x4] sm:$0xf]
        %v2056 = vld [vmem:[%s2053 + $0x8] sm:$0xf]
        %v2057 = vld [vmem:[%s2053 + $0xc] sm:$0xf]
        %v2058 = vld [vmem:[%s2053 + $0x10] sm:$0xf]
        %v2059 = vld [vmem:[%s2053 + $0x14] sm:$0xf]
        %v2060 = vld [vmem:[%s2053 + $0x18] sm:$0xf]
        %v2061 = vld [vmem:[%s2053 + $0x1c] sm:$0xf]
        %v2062 = vld [vmem:[%s2053 + $0x20] sm:$0xf]
        %v2063 = vld [vmem:[%s2053 + $0x24] sm:$0xf]
        %v2064 = vld [vmem:[%s2053 + $0x28] sm:$0xf]
        %v2065 = vld [vmem:[%s2053 + $0x2c] sm:$0xf]
        %v2066 = vld [vmem:[%s2053 + $0x30] sm:$0xf]
        %v2067 = vld [vmem:[%s2053 + $0x34] sm:$0xf]
        %v2068 = vld [vmem:[%s2053 + $0x38] sm:$0xf]
        %v2069 = vld [vmem:[%s2053 + $0x3c] sm:$0xf]
        %v2070 = vunpack.c.l.b16 %v2052
        %v2071 = vpack.c.b16 %v2070, %v1619
        %v2089 = vunpack.c.l.b16 %v2054
        %v2090 = vunpack.c.l.b16 %v2055
        %v2091 = vunpack.c.l.b16 %v2056
        %v2092 = vunpack.c.l.b16 %v2057
        %v2093 = vunpack.c.l.b16 %v2058
        %v2094 = vunpack.c.l.b16 %v2059
        %v2095 = vunpack.c.l.b16 %v2060
        %v2096 = vunpack.c.l.b16 %v2061
        %v2097 = vunpack.c.l.b16 %v2062
        %v2098 = vunpack.c.l.b16 %v2063
        %v2099 = vunpack.c.l.b16 %v2064
        %v2100 = vunpack.c.l.b16 %v2065
        %v2101 = vunpack.c.l.b16 %v2066
        %v2102 = vunpack.c.l.b16 %v2067
        %v2103 = vunpack.c.l.b16 %v2068
        %v2104 = vunpack.c.l.b16 %v2069
        %v2105 = vpack.c.b16 %v2090, %v2089
        %v2106 = vpack.c.b16 %v2092, %v2091
        %v2107 = vpack.c.b16 %v2094, %v2093
        %v2108 = vpack.c.b16 %v2096, %v2095
        %v2109 = vpack.c.b16 %v2098, %v2097
        %v2110 = vpack.c.b16 %v2100, %v2099
        %v2111 = vpack.c.b16 %v2102, %v2101
        %v2112 = vpack.c.b16 %v2104, %v2103
        %2121 = vmatprep.subr.bf16.mxu0 0
        %2122 = vmatpush1.bf16.msra.mxu0 %v2112
        %2123 = vmatprep.subr.bf16.mxu0 0
        %2124 = vmatpush1.bf16.msra.mxu0 %v2111
        %2125 = vmatprep.subr.bf16.mxu0 0
        %2126 = vmatpush1.bf16.msra.mxu0 %v2110
        %2127 = vmatprep.subr.bf16.mxu0 0
        %2128 = vmatpush1.bf16.msra.mxu0 %v2109
        %2129 = vmatprep.subr.bf16.mxu0 0
        %2130 = vmatpush1.bf16.msra.mxu0 %v2108
        %2131 = vmatprep.subr.bf16.mxu0 0
        %2132 = vmatpush1.bf16.msra.mxu0 %v2107
        %2133 = vmatprep.subr.bf16.mxu0 0
        %2134 = vmatpush1.bf16.msra.mxu0 %v2106
        %2135 = vmatprep.subr.bf16.mxu0 0
        %2136 = vmatpush1.bf16.msra.mxu0 %v2105
        %2137 = vmatprep.subr.bf16.mxu0 0
        %2138 = vmatpush2.bf16.msra.mxu0 0
        %2139 = vmatprep.subr.bf16.mxu0 0
        %2140 = vmatpush2.bf16.msra.mxu0 0
        %2141 = vmatprep.subr.bf16.mxu0 0
        %2142 = vmatpush2.bf16.msra.mxu0 0
        %2143 = vmatprep.subr.bf16.mxu0 0
        %2144 = vmatpush2.bf16.msra.mxu0 0
        %2145 = vmatprep.subr.bf16.mxu0 0
        %2146 = vmatpush2.bf16.msra.mxu0 0
        %2147 = vmatprep.subr.bf16.mxu0 0
        %2148 = vmatpush2.bf16.msra.mxu0 0
        %2149 = vmatprep.subr.bf16.mxu0 0
        %2150 = vmatpush2.bf16.msra.mxu0 0
        %2151 = vmatprep.subr.bf16.mxu0 0
        %2152 = vmatpush2.bf16.msra.mxu0 0
        %2153 = vmatprep.mubr.bf16.mxu0 0
        %2154 = vmatmul.mubr.bf16.gmra.mxu0 %v1158
        %v2155 = vpop.f32.mrf.mxu0
        %v2156 = vadd.f32 0.0, %v2155
        %v2157 = vpop.f32.mrf.mxu0
        %v2158 = vpop.f32.mrf.mxu0
        %v2159 = vadd.f32 0.0, %v2158
        %v2160 = vpop.f32.mrf.mxu0
        %2161 = vmatprep.mubr.bf16.mxu0 0
        %2162 = vmatmul.mubr.bf16.gmra.mxu0 %v1159
        %v2163 = vpop.f32.mrf.mxu0
        %v2164 = vadd.f32 0.0, %v2163
        %v2165 = vpop.f32.mrf.mxu0
        %v2166 = vpop.f32.mrf.mxu0
        %v2167 = vadd.f32 0.0, %v2166
        %v2168 = vpop.f32.mrf.mxu0
        %2169 = vmatprep.mubr.bf16.mxu0 0
        %2170 = vmatmul.mubr.bf16.gmra.mxu0 %v1160
        %v2171 = vpop.f32.mrf.mxu0
        %v2172 = vadd.f32 0.0, %v2171
        %v2173 = vpop.f32.mrf.mxu0
        %v2174 = vpop.f32.mrf.mxu0
        %v2175 = vadd.f32 0.0, %v2174
        %v2176 = vpop.f32.mrf.mxu0
        %2177 = vmatprep.mubr.bf16.mxu0 0
        %2178 = vmatmul.mubr.bf16.gmra.mxu0 %v2071
        %v2179 = vpop.f32.mrf.mxu0
        %v2180 = vadd.f32 0.0, %v2179
        %v2181 = vpop.f32.mrf.mxu0
        %v2182 = vpop.f32.mrf.mxu0
        %v2183 = vadd.f32 0.0, %v2182
        %v2184 = vpop.f32.mrf.mxu0
        %2185 = vdwg.mxu0
        %v2186 = vadd.f32 %v2041, %v2156
        %v2187 = vadd.f32 %v2042, %v2159
        %v2188 = vadd.f32 %v2043, %v2164
        %v2189 = vadd.f32 %v2044, %v2167
        %v2190 = vadd.f32 %v2045, %v2172
        %v2191 = vadd.f32 %v2046, %v2175
        %v2192 = vadd.f32 %v2047, %v2180
        %v2193 = vadd.f32 %v2048, %v2183
        %2194 = vst [vmem:[%s232] sm:$0xff] %v2186
        %2195 = vst [vmem:[%s232 + $0x8] sm:$0xff] %v2187
        %2196 = vst [vmem:[%s232 + $0x10] sm:$0xff] %v2188
        %2197 = vst [vmem:[%s232 + $0x18] sm:$0xff] %v2189
        %2198 = vst [vmem:[%s232 + $0x20] sm:$0xff] %v2190
        %2199 = vst [vmem:[%s232 + $0x28] sm:$0xff] %v2191
        %2200 = vst [vmem:[%s232 + $0x30] sm:$0xff] %v2192
        %2201 = vst [vmem:[%s232 + $0x38] sm:$0xff] %v2193
        %s2202 = sand.u32 %s142, 1
        %s2203 = scalar_lea.sflag [#allocation3], %s2202
        %s2204 = sand.u32 %s142, 1
        %s2205 = smul.addr %s2204, 64
        %s2206 = scalar_lea.vmem [#allocation2], %s2205
        // Predicated region
        $region41: #{upsample16_forward.9} parent=39 // pred_check
          %p2207 = pneg %p152
        $region42: #{upsample16_forward.9} parent=39 // pred_check_branch
          %2209 = sbr.rel (%p2207) target = $region44
        $region43: #{upsample16_forward.9} parent=39 // pred_region
          %s2211 = ssub.s32 1024, 1024
          %2212 = vsyncadd %s2203, %s2211
          %s2213 = smul.addr %s19, 8
          %s2214 = smul.addr %s2213, 128
          %s2215 = scalar_lea.hbm %s5, %s2214
          %s2216 = sshll.u32 %s2206, 4
          %s2217 = int_to_ptr.vmem [resolvable:$true] %s2216
          %2222 = dma.vmem_to_hbm [thread:$0]  %s2217, 1024, %s2215, %s2203, 128, 128, 8
        $region44: #{upsample16_forward.9} parent=39 // pred_fallthru
          _
      $region40: #{upsample16_forward.9} parent=5 // pred_fallthru
        _
      %p2223 = scmp.le.s32.totalorder 2, %s14
      // Predicated region
      $region45: #{upsample16_forward.9} parent=5 // pred_check
        %p2224 = pneg %p2223
      $region46: #{upsample16_forward.9} parent=5 // pred_check_branch
        %2226 = sbr.rel (%p2224) target = $region48
      $region47: #{upsample16_forward.9} parent=5 // pred_region
        %s2227 = ssub.s32 %s14, 2
        // Predicated region
        $region49: #{upsample16_forward.9} parent=47 // pred_check
          %p2228 = pneg %p158
        $region50: #{upsample16_forward.9} parent=47 // pred_check_branch
          %2230 = sbr.rel (%p2228) target = $region52
        $region51: #{upsample16_forward.9} parent=47 // pred_region
          %s2231 = sand.u32 %s143, 1
          %s2232 = scalar_lea.sflag [#allocation3], %s2231
          %s2233 = sand.u32 %s143, 1
          %s2234 = smul.addr %s2233, 64
          %s2235 = scalar_lea.vmem [#allocation2], %s2234
          %2236 = dma.done %s2232, 1024
        $region52: #{upsample16_forward.9} parent=47 // pred_fallthru
          _
      $region48: #{upsample16_forward.9} parent=5 // pred_fallthru
        _
    $region6: #{upsample16_forward.9} parent=1 // loop_footer
      %s18 = sadd.s32 1, %s14
    $region7: #{upsample16_forward.9} parent=1 // loop_footer_branch
      %13 = sbr.rel target = $region3
    $region8: #{upsample16_forward.9} parent=1 // loop_exit
      _
    %2237 = vsyncpa [#allocation3], 1
    %s2238 = scalar_lea.sflag [#allocation3], 1
    %2239 = vsyncpa %s2238, 1

</llo_original>
